<compile_context>
chip_gen: v7x
topology: tpu7x:2x2x1
jax: 0.10.0
libtpu: 0.0.40
codegen_flags: <defaults>
</compile_context>

<pallas_src>
import jax
import jax.numpy as jnp
from jax.experimental import pallas as pl
from jax.experimental.pallas import tpu as pltpu

EMBED_DIM = 32   # embedding_dim == aspect_dim == LSTM hidden size H
CLASS_NUM = 3
VOCAB = 50
BATCH = 2
SEQ = 8          # max sentence length T (== lengths[0])


def _sigmoid(z):
    # Numerically stable sigmoid that lives on the EUP (tanh) instead of a
    # full-precision VPU divide on the recurrent critical path.
    return 0.5 * (jnp.tanh(0.5 * z) + 1.0)


def atae_lstm_kernel(
    len_ref,                          # scalar-prefetch SMEM: (B,) int32 lengths
    x_ref,                            # (T, E) embedded sentence (this batch element)
    asp_ref,                          # (1, E) embedded aspect
    wih_f_ref, whh_f_ref, b_f_ref,    # forward LSTM: (E,4H), (H,4H), (1,4H); gate order (i,f,o,g)
    wih_b_ref, whh_b_ref, b_b_ref,    # backward LSTM
    w_hid_ref,                        # (2H, 2H)  weight_for_hidden
    w_asp_ref,                        # (E, E)    weight_for_aspect
    wm_h_ref,                         # (2H, 1)   weight_for_M[:2H]
    wm_a_ref,                         # (E, 1)    weight_for_M[2H:]
    wr_ref, br_ref,                   # linear_for_R: (2H,2H), (1,2H)
    wh_ref, bh_ref,                   # linear_for_H: (2H,2H), (1,2H)
    ws_ref, bs_ref,                   # linear_for_S: (2H,C), (1,C)
    y_ref,                            # out: (1, C) log-probs
    gin_f_ref, gin_b_ref,             # VMEM scratch: (T, 4H) precomputed input gates
    hs_f_ref, hs_b_ref,               # VMEM scratch: (T, H) fwd / bwd hidden sequences
):
    T, E = x_ref.shape
    H = E
    b = pl.program_id(0)
    L = len_ref[b]                    # scalar valid length of this sentence

    # ---- (perf #1) hoist input->hidden projections out of the recurrence ----
    x = x_ref[...]                                                        # (T, E)
    gin_f_ref[...] = (jnp.dot(x, wih_f_ref[...], preferred_element_type=jnp.float32)
                      + b_f_ref[...])                                     # (T, 4H)
    gin_b_ref[...] = (jnp.dot(x, wih_b_ref[...], preferred_element_type=jnp.float32)
                      + b_b_ref[...])                                     # (T, 4H)

    whh_f = whh_f_ref[...]
    whh_b = whh_b_ref[...]

    def cell(gates_in, h, c, whh):
        # gates_in already holds x_t @ W_ih + b; only the recurrent matmul is
        # left on the serial chain.  Gate order (i, f, o, g): the three
        # sigmoid gates are one contiguous (1, 3H) slice (perf #4).
        gates = gates_in + jnp.dot(h, whh, preferred_element_type=jnp.float32)  # (1, 4H)
        sig = _sigmoid(gates[:, :3 * H])                                  # (1, 3H) = i | f | o
        g = jnp.tanh(gates[:, 3 * H:])                                    # (1, H)
        c_new = sig[:, H:2 * H] * c + sig[:, :H] * g
        h_new = sig[:, 2 * H:] * jnp.tanh(c_new)
        return h_new, c_new

    zero = jnp.zeros((1, H), jnp.float32)
    h_f = c_f = h_b = c_b = zero

    # ---- (perf #2, #3) fused fwd/bwd recurrence, fully unrolled (T static) ----
    # The two chains are independent, so the scheduler hides one cell's
    # MXU/EUP latency under the other's.
    for s in range(T):
        t_b = T - 1 - s
        # forward chain at t = s (packed-sequence semantics via masking)
        hf_new, cf_new = cell(gin_f_ref[s:s + 1, :], h_f, c_f, whh_f)
        vf = s < L
        hs_f_ref[s:s + 1, :] = jnp.where(vf, hf_new, 0.0)
        h_f = jnp.where(vf, hf_new, h_f)
        c_f = jnp.where(vf, cf_new, c_f)
        # backward chain at t = T-1-s (starts contributing at t = L-1)
        hb_new, cb_new = cell(gin_b_ref[t_b:t_b + 1, :], h_b, c_b, whh_b)
        vb = t_b < L
        hs_b_ref[t_b:t_b + 1, :] = jnp.where(vb, hb_new, 0.0)
        h_b = jnp.where(vb, hb_new, h_b)
        c_b = jnp.where(vb, cb_new, c_b)

    hs_f = hs_f_ref[...]                                                  # (T, H)
    hs_b = hs_b_ref[...]                                                  # (T, H)

    # ---- attention (perf #6: no lane-axis concat -> split the matmuls) ----
    # weighted_hs = [hs_f | hs_b] @ W_hidden
    weighted_hs = (jnp.dot(hs_f, w_hid_ref[:H, :], preferred_element_type=jnp.float32)
                   + jnp.dot(hs_b, w_hid_ref[H:2 * H, :], preferred_element_type=jnp.float32))  # (T, 2H)
    score_h = jnp.dot(weighted_hs, wm_h_ref[...], preferred_element_type=jnp.float32)           # (T, 1)
    weighted_asp = jnp.dot(asp_ref[...], w_asp_ref[...],
                           preferred_element_type=jnp.float32)                                   # (1, E)
    score_a = jnp.dot(weighted_asp, wm_a_ref[...], preferred_element_type=jnp.float32)           # (1, 1)

    # aspect score only contributes for t < L (the reference masks the aspect
    # copies with [ones(L); zeros(T-L)]); softmax runs over all T positions,
    # exactly like F.softmax on the padded sequence.
    mask = (jax.lax.broadcasted_iota(jnp.int32, (T, 1), 0) < L).astype(jnp.float32)              # (T, 1)
    scores = score_h + score_a * mask                                                            # (T, 1)

    m = jnp.max(scores, axis=0, keepdims=True)
    e = jnp.exp(scores - m)
    alpha = e * pl.reciprocal(jnp.sum(e, axis=0, keepdims=True), approx=True)                    # (T, 1)

    # r = alpha^T @ [hs_f | hs_b]; padded hs rows are zero so they add nothing.
    r_f = jnp.sum(alpha * hs_f, axis=0, keepdims=True)                                           # (1, H)
    r_b = jnp.sum(alpha * hs_b, axis=0, keepdims=True)                                           # (1, H)

    # h_n = [h_f | h_b]; keep halves separate and split the linears (perf #6).
    pre = (jnp.dot(r_f, wr_ref[:H, :], preferred_element_type=jnp.float32)
           + jnp.dot(r_b, wr_ref[H:2 * H, :], preferred_element_type=jnp.float32) + br_ref[...]
           + jnp.dot(h_f, wh_ref[:H, :], preferred_element_type=jnp.float32)
           + jnp.dot(h_b, wh_ref[H:2 * H, :], preferred_element_type=jnp.float32) + bh_ref[...])
    h_out = jnp.maximum(pre, 0.0)                                                                # (1, 2H)
    logits = jnp.dot(h_out, ws_ref[...], preferred_element_type=jnp.float32) + bs_ref[...]       # (1, C)

    lm = jnp.max(logits, axis=1, keepdims=True)
    lse = jnp.log(jnp.sum(jnp.exp(logits - lm), axis=1, keepdims=True)) + lm
    y_ref[...] = logits - lse                                             # log_softmax


def init_params(key, vocab=VOCAB, e=EMBED_DIM, c=CLASS_NUM):
    # Deterministic synthetic init (scaled normals for numerical stability);
    # weights stored in kernel-friendly (in, out) orientation, LSTM gate order
    # (i, f, o, g) so the sigmoid gates are contiguous in the kernel.
    h = e
    ks = jax.random.split(key, 17)
    n = lambda k, shape, s=0.1: s * jax.random.normal(k, shape, jnp.float32)
    return {
        "embedding": n(ks[0], (vocab, e), 0.5),
        "wih_f": n(ks[1], (e, 4 * h)), "whh_f": n(ks[2], (h, 4 * h)), "b_f": n(ks[3], (1, 4 * h)),
        "wih_b": n(ks[4], (e, 4 * h)), "whh_b": n(ks[5], (h, 4 * h)), "b_b": n(ks[6], (1, 4 * h)),
        "w_hidden": n(ks[7], (2 * h, 2 * h)),
        "w_aspect": n(ks[8], (e, e)),
        "wm_h": n(ks[9], (2 * h, 1)),
        "wm_a": n(ks[10], (e, 1)),
        "wr": n(ks[11], (2 * h, 2 * h)), "br": n(ks[12], (1, 2 * h)),
        "wh": n(ks[13], (2 * h, 2 * h)), "bh": n(ks[14], (1, 2 * h)),
        "ws": n(ks[15], (2 * h, c)), "bs": n(ks[16], (1, c)),
    }


def forward(params, sentences, lengths, aspect_token):
    B, T = sentences.shape
    E = params["embedding"].shape[1]
    H = E
    C = params["bs"].shape[1]

    x = params["embedding"][sentences]                       # (B, T, E) embedding gather in JAX glue
    asp = params["embedding"][aspect_token].reshape(1, E)    # (1, E) single-aspect-token embedding
    lengths = lengths.astype(jnp.int32)

    full2d = lambda shape: pl.BlockSpec(shape, lambda b, lens: (0, 0))
    in_specs = [
        pl.BlockSpec((None, T, E), lambda b, lens: (b, 0, 0)),        # x: one sentence per program
        full2d((1, E)),                                               # aspect
        full2d((E, 4 * H)), full2d((H, 4 * H)), full2d((1, 4 * H)),   # fwd LSTM
        full2d((E, 4 * H)), full2d((H, 4 * H)), full2d((1, 4 * H)),   # bwd LSTM
        full2d((2 * H, 2 * H)),                                       # weight_for_hidden
        full2d((E, E)),                                               # weight_for_aspect
        full2d((2 * H, 1)),                                           # weight_for_M[:2H]
        full2d((E, 1)),                                               # weight_for_M[2H:]
        full2d((2 * H, 2 * H)), full2d((1, 2 * H)),                   # linear_for_R
        full2d((2 * H, 2 * H)), full2d((1, 2 * H)),                   # linear_for_H
        full2d((2 * H, C)), full2d((1, C)),                           # linear_for_S
    ]
    grid_spec = pltpu.PrefetchScalarGridSpec(
        num_scalar_prefetch=1,                                        # lengths -> SMEM
        grid=(B,),
        in_specs=in_specs,
        out_specs=pl.BlockSpec((None, 1, C), lambda b, lens: (b, 0, 0)),
        scratch_shapes=[pltpu.VMEM((T, 4 * H), jnp.float32),          # gin_f
                        pltpu.VMEM((T, 4 * H), jnp.float32),          # gin_b
                        pltpu.VMEM((T, H), jnp.float32),              # hs_f
                        pltpu.VMEM((T, H), jnp.float32)],             # hs_b
    )
    y = pl.pallas_call(
        atae_lstm_kernel,
        grid_spec=grid_spec,
        out_shape=jax.ShapeDtypeStruct((B, 1, C), jnp.float32),
        # sentences are independent -> batch axis is parallel (perf #8):
        # v7x megacore splits the grid across its two TensorCores.
        compiler_params=pltpu.CompilerParams(dimension_semantics=("parallel",)),
    )(lengths, x, asp,
      params["wih_f"], params["whh_f"], params["b_f"],
      params["wih_b"], params["whh_b"], params["b_b"],
      params["w_hidden"], params["w_aspect"], params["wm_h"], params["wm_a"],
      params["wr"], params["br"], params["wh"], params["bh"],
      params["ws"], params["bs"])
    return y.reshape(B, C)


if __name__ == "__main__":
    key = jax.random.PRNGKey(0)
    pkey, skey, akey = jax.random.split(key, 3)
    params = init_params(pkey)
    sentences = jax.random.randint(skey, (BATCH, SEQ), 0, VOCAB, dtype=jnp.int32)
    # pack_padded_sequence requires lengths sorted descending; lengths[0] == SEQ
    lengths = jnp.array([SEQ, 5], dtype=jnp.int32)
    aspect_token = jax.random.randint(akey, (), 0, VOCAB, dtype=jnp.int32)

    y = jax.jit(forward)(params, sentences, lengths, aspect_token)
    jax.block_until_ready(y)
    assert y.shape == (BATCH, CLASS_NUM)
    assert bool(jnp.all(jnp.isfinite(y)))
    # rows are log-softmax -> exp-sum ~ 1
    assert bool(jnp.all(jnp.abs(jnp.sum(jnp.exp(y), axis=1) - 1.0) < 1e-4))
    print("KERNEL_OK")
</pallas_src>

<mosaic_0001>
module attributes {stable_mosaic.version = 11 : i64} {
  func.func @atae_lstm_kernel(%arg0: i32, %arg1: memref<2xi32, #tpu.memory_space<smem>>, %arg2: memref<1x8x32xf32, #tpu.memory_space<vmem>>, %arg3: memref<1x32xf32, #tpu.memory_space<vmem>>, %arg4: memref<32x128xf32, #tpu.memory_space<vmem>>, %arg5: memref<32x128xf32, #tpu.memory_space<vmem>>, %arg6: memref<1x128xf32, #tpu.memory_space<vmem>>, %arg7: memref<32x128xf32, #tpu.memory_space<vmem>>, %arg8: memref<32x128xf32, #tpu.memory_space<vmem>>, %arg9: memref<1x128xf32, #tpu.memory_space<vmem>>, %arg10: memref<64x64xf32, #tpu.memory_space<vmem>>, %arg11: memref<32x32xf32, #tpu.memory_space<vmem>>, %arg12: memref<64x1xf32, #tpu.memory_space<vmem>>, %arg13: memref<32x1xf32, #tpu.memory_space<vmem>>, %arg14: memref<64x64xf32, #tpu.memory_space<vmem>>, %arg15: memref<1x64xf32, #tpu.memory_space<vmem>>, %arg16: memref<64x64xf32, #tpu.memory_space<vmem>>, %arg17: memref<1x64xf32, #tpu.memory_space<vmem>>, %arg18: memref<64x3xf32, #tpu.memory_space<vmem>>, %arg19: memref<1x3xf32, #tpu.memory_space<vmem>>, %arg20: memref<1x1x3xf32, #tpu.memory_space<vmem>>, %arg21: memref<8x128xf32, #tpu.memory_space<vmem>>, %arg22: memref<8x128xf32, #tpu.memory_space<vmem>>, %arg23: memref<8x32xf32, #tpu.memory_space<vmem>>, %arg24: memref<8x32xf32, #tpu.memory_space<vmem>>) attributes {dimension_semantics = [#tpu.dimension_semantics<parallel>], iteration_bounds = array<i64: 2>, scalar_prefetch = 1 : i64, scratch_operands = 4 : i64, tpu.core_type = #tpu.core_type<tc>, window_params = [{transform_indices = @transform_0, window_bounds = array<i64: 1, 8, 32>}, {pipeline_mode = #tpu.pipeline_mode<synchronous>, transform_indices = @transform_1, window_bounds = array<i64: 1, 32>}, {pipeline_mode = #tpu.pipeline_mode<synchronous>, transform_indices = @transform_2, window_bounds = array<i64: 32, 128>}, {pipeline_mode = #tpu.pipeline_mode<synchronous>, transform_indices = @transform_3, window_bounds = array<i64: 32, 128>}, {pipeline_mode = #tpu.pipeline_mode<synchronous>, transform_indices = @transform_4, window_bounds = array<i64: 1, 128>}, {pipeline_mode = #tpu.pipeline_mode<synchronous>, transform_indices = @transform_5, window_bounds = array<i64: 32, 128>}, {pipeline_mode = #tpu.pipeline_mode<synchronous>, transform_indices = @transform_6, window_bounds = array<i64: 32, 128>}, {pipeline_mode = #tpu.pipeline_mode<synchronous>, transform_indices = @transform_7, window_bounds = array<i64: 1, 128>}, {pipeline_mode = #tpu.pipeline_mode<synchronous>, transform_indices = @transform_8, window_bounds = array<i64: 64, 64>}, {pipeline_mode = #tpu.pipeline_mode<synchronous>, transform_indices = @transform_9, window_bounds = array<i64: 32, 32>}, {pipeline_mode = #tpu.pipeline_mode<synchronous>, transform_indices = @transform_10, window_bounds = array<i64: 64, 1>}, {pipeline_mode = #tpu.pipeline_mode<synchronous>, transform_indices = @transform_11, window_bounds = array<i64: 32, 1>}, {pipeline_mode = #tpu.pipeline_mode<synchronous>, transform_indices = @transform_12, window_bounds = array<i64: 64, 64>}, {pipeline_mode = #tpu.pipeline_mode<synchronous>, transform_indices = @transform_13, window_bounds = array<i64: 1, 64>}, {pipeline_mode = #tpu.pipeline_mode<synchronous>, transform_indices = @transform_14, window_bounds = array<i64: 64, 64>}, {pipeline_mode = #tpu.pipeline_mode<synchronous>, transform_indices = @transform_15, window_bounds = array<i64: 1, 64>}, {pipeline_mode = #tpu.pipeline_mode<synchronous>, transform_indices = @transform_16, window_bounds = array<i64: 64, 3>}, {pipeline_mode = #tpu.pipeline_mode<synchronous>, transform_indices = @transform_17, window_bounds = array<i64: 1, 3>}, {transform_indices = @transform_18, window_bounds = array<i64: 1, 1, 3>}]} {
    %0 = arith.index_cast %arg0 : i32 to index
    %1 = memref.load %arg1[%0] : memref<2xi32, #tpu.memory_space<smem>>
    %c0 = arith.constant 0 : index
    %c0_0 = arith.constant 0 : index
    %c0_1 = arith.constant 0 : index
    %2 = vector.load %arg2[%c0, %c0_0, %c0_1] : memref<1x8x32xf32, #tpu.memory_space<vmem>>, vector<1x8x32xf32>
    %3 = vector.shape_cast %2 : vector<1x8x32xf32> to vector<8x32xf32>
    %c0_2 = arith.constant 0 : index
    %c0_3 = arith.constant 0 : index
    %4 = vector.load %arg4[%c0_2, %c0_3] : memref<32x128xf32, #tpu.memory_space<vmem>>, vector<32x128xf32>
    %cst = arith.constant dense<0.000000e+00> : vector<8x128xf32>
    %5 = tpu.matmul %3, %4, %cst {dimension_numbers = #tpu.dot_dimension_numbers<[1], [0], [0], [1], [0, 0, 1, 1], [], []>} : vector<8x32xf32>, vector<32x128xf32>, vector<8x128xf32> -> vector<8x128xf32>
    %c0_4 = arith.constant 0 : index
    %c0_5 = arith.constant 0 : index
    %6 = vector.load %arg6[%c0_4, %c0_5] : memref<1x128xf32, #tpu.memory_space<vmem>>, vector<1x128xf32>
    %7 = vector.broadcast %6 : vector<1x128xf32> to vector<8x128xf32>
    %8 = arith.addf %5, %7 : vector<8x128xf32>
    %c0_6 = arith.constant 0 : index
    %c0_7 = arith.constant 0 : index
    %9 = vector.load %arg21[%c0_6, %c0_7] : memref<8x128xf32, #tpu.memory_space<vmem>>, vector<8x128xf32>
    tpu.vector_store %arg21[%c0_6, %c0_7], %8 {strides = array<i32>} : memref<8x128xf32, #tpu.memory_space<vmem>>, vector<8x128xf32>,
    %c0_8 = arith.constant 0 : index
    %c0_9 = arith.constant 0 : index
    %10 = vector.load %arg7[%c0_8, %c0_9] : memref<32x128xf32, #tpu.memory_space<vmem>>, vector<32x128xf32>
    %cst_10 = arith.constant dense<0.000000e+00> : vector<8x128xf32>
    %11 = tpu.matmul %3, %10, %cst_10 {dimension_numbers = #tpu.dot_dimension_numbers<[1], [0], [0], [1], [0, 0, 1, 1], [], []>} : vector<8x32xf32>, vector<32x128xf32>, vector<8x128xf32> -> vector<8x128xf32>
    %c0_11 = arith.constant 0 : index
    %c0_12 = arith.constant 0 : index
    %12 = vector.load %arg9[%c0_11, %c0_12] : memref<1x128xf32, #tpu.memory_space<vmem>>, vector<1x128xf32>
    %13 = vector.broadcast %12 : vector<1x128xf32> to vector<8x128xf32>
    %14 = arith.addf %11, %13 : vector<8x128xf32>
    %c0_13 = arith.constant 0 : index
    %c0_14 = arith.constant 0 : index
    %15 = vector.load %arg22[%c0_13, %c0_14] : memref<8x128xf32, #tpu.memory_space<vmem>>, vector<8x128xf32>
    tpu.vector_store %arg22[%c0_13, %c0_14], %14 {strides = array<i32>} : memref<8x128xf32, #tpu.memory_space<vmem>>, vector<8x128xf32>,
    %c0_15 = arith.constant 0 : index
    %c0_16 = arith.constant 0 : index
    %16 = vector.load %arg5[%c0_15, %c0_16] : memref<32x128xf32, #tpu.memory_space<vmem>>, vector<32x128xf32>
    %c0_17 = arith.constant 0 : index
    %c0_18 = arith.constant 0 : index
    %17 = vector.load %arg8[%c0_17, %c0_18] : memref<32x128xf32, #tpu.memory_space<vmem>>, vector<32x128xf32>
    %cst_19 = arith.constant 0.000000e+00 : f32
    %18 = vector.broadcast %cst_19 : f32 to vector<1x32xf32>
    %c0_20 = arith.constant 0 : index
    %c0_21 = arith.constant 0 : index
    %19 = vector.load %arg21[%c0_20, %c0_21] : memref<8x128xf32, #tpu.memory_space<vmem>>, vector<1x128xf32>
    %cst_22 = arith.constant dense<0.000000e+00> : vector<1x128xf32>
    %20 = tpu.matmul %18, %16, %cst_22 {dimension_numbers = #tpu.dot_dimension_numbers<[1], [0], [0], [1], [0, 0, 1, 1], [], []>} : vector<1x32xf32>, vector<32x128xf32>, vector<1x128xf32> -> vector<1x128xf32>
    %21 = arith.addf %19, %20 : vector<1x128xf32>
    %22 = vector.extract_strided_slice %21 {offsets = [0, 0], sizes = [1, 96], strides = [1, 1]} : vector<1x128xf32> to vector<1x96xf32>
    %cst_23 = arith.constant 5.000000e-01 : f32
    %23 = vector.broadcast %cst_23 : f32 to vector<1x96xf32>
    %24 = arith.mulf %23, %22 : vector<1x96xf32>
    %25 = math.tanh %24 : vector<1x96xf32>
    %cst_24 = arith.constant 1.000000e+00 : f32
    %26 = vector.broadcast %cst_24 : f32 to vector<1x96xf32>
    %27 = arith.addf %25, %26 : vector<1x96xf32>
    %cst_25 = arith.constant 5.000000e-01 : f32
    %28 = vector.broadcast %cst_25 : f32 to vector<1x96xf32>
    %29 = arith.mulf %28, %27 : vector<1x96xf32>
    %30 = vector.extract_strided_slice %21 {offsets = [0, 96], sizes = [1, 32], strides = [1, 1]} : vector<1x128xf32> to vector<1x32xf32>
    %31 = math.tanh %30 : vector<1x32xf32>
    %32 = vector.extract_strided_slice %29 {offsets = [0, 32], sizes = [1, 32], strides = [1, 1]} : vector<1x96xf32> to vector<1x32xf32>
    %33 = arith.mulf %32, %18 : vector<1x32xf32>
    %34 = vector.extract_strided_slice %29 {offsets = [0, 0], sizes = [1, 32], strides = [1, 1]} : vector<1x96xf32> to vector<1x32xf32>
    %35 = arith.mulf %34, %31 : vector<1x32xf32>
    %36 = arith.addf %33, %35 : vector<1x32xf32>
    %37 = vector.extract_strided_slice %29 {offsets = [0, 64], sizes = [1, 32], strides = [1, 1]} : vector<1x96xf32> to vector<1x32xf32>
    %38 = math.tanh %36 : vector<1x32xf32>
    %39 = arith.mulf %37, %38 : vector<1x32xf32>
    %c0_i32 = arith.constant 0 : i32
    %40 = arith.cmpi sgt, %1, %c0_i32 : i32
    %cst_26 = arith.constant 0.000000e+00 : f32
    %41 = vector.broadcast %cst_26 : f32 to vector<1x32xf32>
    %42 = arith.select %40, %39, %41 : vector<1x32xf32>
    %c0_27 = arith.constant 0 : index
    %c0_28 = arith.constant 0 : index
    %43 = vector.load %arg23[%c0_27, %c0_28] : memref<8x32xf32, #tpu.memory_space<vmem>>, vector<1x32xf32>
    tpu.vector_store %arg23[%c0_27, %c0_28], %42 {strides = array<i32>} : memref<8x32xf32, #tpu.memory_space<vmem>>, vector<1x32xf32>,
    %44 = arith.select %40, %39, %18 : vector<1x32xf32>
    %45 = arith.select %40, %36, %18 : vector<1x32xf32>
    %c7 = arith.constant 7 : index
    %c0_29 = arith.constant 0 : index
    %46 = vector.load %arg22[%c7, %c0_29] : memref<8x128xf32, #tpu.memory_space<vmem>>, vector<1x128xf32>
    %cst_30 = arith.constant dense<0.000000e+00> : vector<1x128xf32>
    %47 = tpu.matmul %18, %17, %cst_30 {dimension_numbers = #tpu.dot_dimension_numbers<[1], [0], [0], [1], [0, 0, 1, 1], [], []>} : vector<1x32xf32>, vector<32x128xf32>, vector<1x128xf32> -> vector<1x128xf32>
    %48 = arith.addf %46, %47 : vector<1x128xf32>
    %49 = vector.extract_strided_slice %48 {offsets = [0, 0], sizes = [1, 96], strides = [1, 1]} : vector<1x128xf32> to vector<1x96xf32>
    %cst_31 = arith.constant 5.000000e-01 : f32
    %50 = vector.broadcast %cst_31 : f32 to vector<1x96xf32>
    %51 = arith.mulf %50, %49 : vector<1x96xf32>
    %52 = math.tanh %51 : vector<1x96xf32>
    %cst_32 = arith.constant 1.000000e+00 : f32
    %53 = vector.broadcast %cst_32 : f32 to vector<1x96xf32>
    %54 = arith.addf %52, %53 : vector<1x96xf32>
    %cst_33 = arith.constant 5.000000e-01 : f32
    %55 = vector.broadcast %cst_33 : f32 to vector<1x96xf32>
    %56 = arith.mulf %55, %54 : vector<1x96xf32>
    %57 = vector.extract_strided_slice %48 {offsets = [0, 96], sizes = [1, 32], strides = [1, 1]} : vector<1x128xf32> to vector<1x32xf32>
    %58 = math.tanh %57 : vector<1x32xf32>
    %59 = vector.extract_strided_slice %56 {offsets = [0, 32], sizes = [1, 32], strides = [1, 1]} : vector<1x96xf32> to vector<1x32xf32>
    %60 = arith.mulf %59, %18 : vector<1x32xf32>
    %61 = vector.extract_strided_slice %56 {offsets = [0, 0], sizes = [1, 32], strides = [1, 1]} : vector<1x96xf32> to vector<1x32xf32>
    %62 = arith.mulf %61, %58 : vector<1x32xf32>
    %63 = arith.addf %60, %62 : vector<1x32xf32>
    %64 = vector.extract_strided_slice %56 {offsets = [0, 64], sizes = [1, 32], strides = [1, 1]} : vector<1x96xf32> to vector<1x32xf32>
    %65 = math.tanh %63 : vector<1x32xf32>
    %66 = arith.mulf %64, %65 : vector<1x32xf32>
    %c7_i32 = arith.constant 7 : i32
    %67 = arith.cmpi sgt, %1, %c7_i32 : i32
    %cst_34 = arith.constant 0.000000e+00 : f32
    %68 = vector.broadcast %cst_34 : f32 to vector<1x32xf32>
    %69 = arith.select %67, %66, %68 : vector<1x32xf32>
    %c7_35 = arith.constant 7 : index
    %c0_36 = arith.constant 0 : index
    %70 = vector.load %arg24[%c7_35, %c0_36] : memref<8x32xf32, #tpu.memory_space<vmem>>, vector<1x32xf32>
    tpu.vector_store %arg24[%c7_35, %c0_36], %69 {strides = array<i32>} : memref<8x32xf32, #tpu.memory_space<vmem>>, vector<1x32xf32>,
    %71 = arith.select %67, %66, %18 : vector<1x32xf32>
    %72 = arith.select %67, %63, %18 : vector<1x32xf32>
    %c1 = arith.constant 1 : index
    %c0_37 = arith.constant 0 : index
    %73 = vector.load %arg21[%c1, %c0_37] : memref<8x128xf32, #tpu.memory_space<vmem>>, vector<1x128xf32>
    %cst_38 = arith.constant dense<0.000000e+00> : vector<1x128xf32>
    %74 = tpu.matmul %44, %16, %cst_38 {dimension_numbers = #tpu.dot_dimension_numbers<[1], [0], [0], [1], [0, 0, 1, 1], [], []>} : vector<1x32xf32>, vector<32x128xf32>, vector<1x128xf32> -> vector<1x128xf32>
    %75 = arith.addf %73, %74 : vector<1x128xf32>
    %76 = vector.extract_strided_slice %75 {offsets = [0, 0], sizes = [1, 96], strides = [1, 1]} : vector<1x128xf32> to vector<1x96xf32>
    %cst_39 = arith.constant 5.000000e-01 : f32
    %77 = vector.broadcast %cst_39 : f32 to vector<1x96xf32>
    %78 = arith.mulf %77, %76 : vector<1x96xf32>
    %79 = math.tanh %78 : vector<1x96xf32>
    %cst_40 = arith.constant 1.000000e+00 : f32
    %80 = vector.broadcast %cst_40 : f32 to vector<1x96xf32>
    %81 = arith.addf %79, %80 : vector<1x96xf32>
    %cst_41 = arith.constant 5.000000e-01 : f32
    %82 = vector.broadcast %cst_41 : f32 to vector<1x96xf32>
    %83 = arith.mulf %82, %81 : vector<1x96xf32>
    %84 = vector.extract_strided_slice %75 {offsets = [0, 96], sizes = [1, 32], strides = [1, 1]} : vector<1x128xf32> to vector<1x32xf32>
    %85 = math.tanh %84 : vector<1x32xf32>
    %86 = vector.extract_strided_slice %83 {offsets = [0, 32], sizes = [1, 32], strides = [1, 1]} : vector<1x96xf32> to vector<1x32xf32>
    %87 = arith.mulf %86, %45 : vector<1x32xf32>
    %88 = vector.extract_strided_slice %83 {offsets = [0, 0], sizes = [1, 32], strides = [1, 1]} : vector<1x96xf32> to vector<1x32xf32>
    %89 = arith.mulf %88, %85 : vector<1x32xf32>
    %90 = arith.addf %87, %89 : vector<1x32xf32>
    %91 = vector.extract_strided_slice %83 {offsets = [0, 64], sizes = [1, 32], strides = [1, 1]} : vector<1x96xf32> to vector<1x32xf32>
    %92 = math.tanh %90 : vector<1x32xf32>
    %93 = arith.mulf %91, %92 : vector<1x32xf32>
    %c1_i32 = arith.constant 1 : i32
    %94 = arith.cmpi sgt, %1, %c1_i32 : i32
    %cst_42 = arith.constant 0.000000e+00 : f32
    %95 = vector.broadcast %cst_42 : f32 to vector<1x32xf32>
    %96 = arith.select %94, %93, %95 : vector<1x32xf32>
    %c1_43 = arith.constant 1 : index
    %c0_44 = arith.constant 0 : index
    %97 = vector.load %arg23[%c1_43, %c0_44] : memref<8x32xf32, #tpu.memory_space<vmem>>, vector<1x32xf32>
    tpu.vector_store %arg23[%c1_43, %c0_44], %96 {strides = array<i32>} : memref<8x32xf32, #tpu.memory_space<vmem>>, vector<1x32xf32>,
    %98 = arith.select %94, %93, %44 : vector<1x32xf32>
    %99 = arith.select %94, %90, %45 : vector<1x32xf32>
    %c6 = arith.constant 6 : index
    %c0_45 = arith.constant 0 : index
    %100 = vector.load %arg22[%c6, %c0_45] : memref<8x128xf32, #tpu.memory_space<vmem>>, vector<1x128xf32>
    %cst_46 = arith.constant dense<0.000000e+00> : vector<1x128xf32>
    %101 = tpu.matmul %71, %17, %cst_46 {dimension_numbers = #tpu.dot_dimension_numbers<[1], [0], [0], [1], [0, 0, 1, 1], [], []>} : vector<1x32xf32>, vector<32x128xf32>, vector<1x128xf32> -> vector<1x128xf32>
    %102 = arith.addf %100, %101 : vector<1x128xf32>
    %103 = vector.extract_strided_slice %102 {offsets = [0, 0], sizes = [1, 96], strides = [1, 1]} : vector<1x128xf32> to vector<1x96xf32>
    %cst_47 = arith.constant 5.000000e-01 : f32
    %104 = vector.broadcast %cst_47 : f32 to vector<1x96xf32>
    %105 = arith.mulf %104, %103 : vector<1x96xf32>
    %106 = math.tanh %105 : vector<1x96xf32>
    %cst_48 = arith.constant 1.000000e+00 : f32
    %107 = vector.broadcast %cst_48 : f32 to vector<1x96xf32>
    %108 = arith.addf %106, %107 : vector<1x96xf32>
    %cst_49 = arith.constant 5.000000e-01 : f32
    %109 = vector.broadcast %cst_49 : f32 to vector<1x96xf32>
    %110 = arith.mulf %109, %108 : vector<1x96xf32>
    %111 = vector.extract_strided_slice %102 {offsets = [0, 96], sizes = [1, 32], strides = [1, 1]} : vector<1x128xf32> to vector<1x32xf32>
    %112 = math.tanh %111 : vector<1x32xf32>
    %113 = vector.extract_strided_slice %110 {offsets = [0, 32], sizes = [1, 32], strides = [1, 1]} : vector<1x96xf32> to vector<1x32xf32>
    %114 = arith.mulf %113, %72 : vector<1x32xf32>
    %115 = vector.extract_strided_slice %110 {offsets = [0, 0], sizes = [1, 32], strides = [1, 1]} : vector<1x96xf32> to vector<1x32xf32>
    %116 = arith.mulf %115, %112 : vector<1x32xf32>
    %117 = arith.addf %114, %116 : vector<1x32xf32>
    %118 = vector.extract_strided_slice %110 {offsets = [0, 64], sizes = [1, 32], strides = [1, 1]} : vector<1x96xf32> to vector<1x32xf32>
    %119 = math.tanh %117 : vector<1x32xf32>
    %120 = arith.mulf %118, %119 : vector<1x32xf32>
    %c6_i32 = arith.constant 6 : i32
    %121 = arith.cmpi sgt, %1, %c6_i32 : i32
    %cst_50 = arith.constant 0.000000e+00 : f32
    %122 = vector.broadcast %cst_50 : f32 to vector<1x32xf32>
    %123 = arith.select %121, %120, %122 : vector<1x32xf32>
    %c6_51 = arith.constant 6 : index
    %c0_52 = arith.constant 0 : index
    %124 = vector.load %arg24[%c6_51, %c0_52] : memref<8x32xf32, #tpu.memory_space<vmem>>, vector<1x32xf32>
    tpu.vector_store %arg24[%c6_51, %c0_52], %123 {strides = array<i32>} : memref<8x32xf32, #tpu.memory_space<vmem>>, vector<1x32xf32>,
    %125 = arith.select %121, %120, %71 : vector<1x32xf32>
    %126 = arith.select %121, %117, %72 : vector<1x32xf32>
    %c2 = arith.constant 2 : index
    %c0_53 = arith.constant 0 : index
    %127 = vector.load %arg21[%c2, %c0_53] : memref<8x128xf32, #tpu.memory_space<vmem>>, vector<1x128xf32>
    %cst_54 = arith.constant dense<0.000000e+00> : vector<1x128xf32>
    %128 = tpu.matmul %98, %16, %cst_54 {dimension_numbers = #tpu.dot_dimension_numbers<[1], [0], [0], [1], [0, 0, 1, 1], [], []>} : vector<1x32xf32>, vector<32x128xf32>, vector<1x128xf32> -> vector<1x128xf32>
    %129 = arith.addf %127, %128 : vector<1x128xf32>
    %130 = vector.extract_strided_slice %129 {offsets = [0, 0], sizes = [1, 96], strides = [1, 1]} : vector<1x128xf32> to vector<1x96xf32>
    %cst_55 = arith.constant 5.000000e-01 : f32
    %131 = vector.broadcast %cst_55 : f32 to vector<1x96xf32>
    %132 = arith.mulf %131, %130 : vector<1x96xf32>
    %133 = math.tanh %132 : vector<1x96xf32>
    %cst_56 = arith.constant 1.000000e+00 : f32
    %134 = vector.broadcast %cst_56 : f32 to vector<1x96xf32>
    %135 = arith.addf %133, %134 : vector<1x96xf32>
    %cst_57 = arith.constant 5.000000e-01 : f32
    %136 = vector.broadcast %cst_57 : f32 to vector<1x96xf32>
    %137 = arith.mulf %136, %135 : vector<1x96xf32>
    %138 = vector.extract_strided_slice %129 {offsets = [0, 96], sizes = [1, 32], strides = [1, 1]} : vector<1x128xf32> to vector<1x32xf32>
    %139 = math.tanh %138 : vector<1x32xf32>
    %140 = vector.extract_strided_slice %137 {offsets = [0, 32], sizes = [1, 32], strides = [1, 1]} : vector<1x96xf32> to vector<1x32xf32>
    %141 = arith.mulf %140, %99 : vector<1x32xf32>
    %142 = vector.extract_strided_slice %137 {offsets = [0, 0], sizes = [1, 32], strides = [1, 1]} : vector<1x96xf32> to vector<1x32xf32>
    %143 = arith.mulf %142, %139 : vector<1x32xf32>
    %144 = arith.addf %141, %143 : vector<1x32xf32>
    %145 = vector.extract_strided_slice %137 {offsets = [0, 64], sizes = [1, 32], strides = [1, 1]} : vector<1x96xf32> to vector<1x32xf32>
    %146 = math.tanh %144 : vector<1x32xf32>
    %147 = arith.mulf %145, %146 : vector<1x32xf32>
    %c2_i32 = arith.constant 2 : i32
    %148 = arith.cmpi sgt, %1, %c2_i32 : i32
    %cst_58 = arith.constant 0.000000e+00 : f32
    %149 = vector.broadcast %cst_58 : f32 to vector<1x32xf32>
    %150 = arith.select %148, %147, %149 : vector<1x32xf32>
    %c2_59 = arith.constant 2 : index
    %c0_60 = arith.constant 0 : index
    %151 = vector.load %arg23[%c2_59, %c0_60] : memref<8x32xf32, #tpu.memory_space<vmem>>, vector<1x32xf32>
    tpu.vector_store %arg23[%c2_59, %c0_60], %150 {strides = array<i32>} : memref<8x32xf32, #tpu.memory_space<vmem>>, vector<1x32xf32>,
    %152 = arith.select %148, %147, %98 : vector<1x32xf32>
    %153 = arith.select %148, %144, %99 : vector<1x32xf32>
    %c5 = arith.constant 5 : index
    %c0_61 = arith.constant 0 : index
    %154 = vector.load %arg22[%c5, %c0_61] : memref<8x128xf32, #tpu.memory_space<vmem>>, vector<1x128xf32>
    %cst_62 = arith.constant dense<0.000000e+00> : vector<1x128xf32>
    %155 = tpu.matmul %125, %17, %cst_62 {dimension_numbers = #tpu.dot_dimension_numbers<[1], [0], [0], [1], [0, 0, 1, 1], [], []>} : vector<1x32xf32>, vector<32x128xf32>, vector<1x128xf32> -> vector<1x128xf32>
    %156 = arith.addf %154, %155 : vector<1x128xf32>
    %157 = vector.extract_strided_slice %156 {offsets = [0, 0], sizes = [1, 96], strides = [1, 1]} : vector<1x128xf32> to vector<1x96xf32>
    %cst_63 = arith.constant 5.000000e-01 : f32
    %158 = vector.broadcast %cst_63 : f32 to vector<1x96xf32>
    %159 = arith.mulf %158, %157 : vector<1x96xf32>
    %160 = math.tanh %159 : vector<1x96xf32>
    %cst_64 = arith.constant 1.000000e+00 : f32
    %161 = vector.broadcast %cst_64 : f32 to vector<1x96xf32>
    %162 = arith.addf %160, %161 : vector<1x96xf32>
    %cst_65 = arith.constant 5.000000e-01 : f32
    %163 = vector.broadcast %cst_65 : f32 to vector<1x96xf32>
    %164 = arith.mulf %163, %162 : vector<1x96xf32>
    %165 = vector.extract_strided_slice %156 {offsets = [0, 96], sizes = [1, 32], strides = [1, 1]} : vector<1x128xf32> to vector<1x32xf32>
    %166 = math.tanh %165 : vector<1x32xf32>
    %167 = vector.extract_strided_slice %164 {offsets = [0, 32], sizes = [1, 32], strides = [1, 1]} : vector<1x96xf32> to vector<1x32xf32>
    %168 = arith.mulf %167, %126 : vector<1x32xf32>
    %169 = vector.extract_strided_slice %164 {offsets = [0, 0], sizes = [1, 32], strides = [1, 1]} : vector<1x96xf32> to vector<1x32xf32>
    %170 = arith.mulf %169, %166 : vector<1x32xf32>
    %171 = arith.addf %168, %170 : vector<1x32xf32>
    %172 = vector.extract_strided_slice %164 {offsets = [0, 64], sizes = [1, 32], strides = [1, 1]} : vector<1x96xf32> to vector<1x32xf32>
    %173 = math.tanh %171 : vector<1x32xf32>
    %174 = arith.mulf %172, %173 : vector<1x32xf32>
    %c5_i32 = arith.constant 5 : i32
    %175 = arith.cmpi sgt, %1, %c5_i32 : i32
    %cst_66 = arith.constant 0.000000e+00 : f32
    %176 = vector.broadcast %cst_66 : f32 to vector<1x32xf32>
    %177 = arith.select %175, %174, %176 : vector<1x32xf32>
    %c5_67 = arith.constant 5 : index
    %c0_68 = arith.constant 0 : index
    %178 = vector.load %arg24[%c5_67, %c0_68] : memref<8x32xf32, #tpu.memory_space<vmem>>, vector<1x32xf32>
    tpu.vector_store %arg24[%c5_67, %c0_68], %177 {strides = array<i32>} : memref<8x32xf32, #tpu.memory_space<vmem>>, vector<1x32xf32>,
    %179 = arith.select %175, %174, %125 : vector<1x32xf32>
    %180 = arith.select %175, %171, %126 : vector<1x32xf32>
    %c3 = arith.constant 3 : index
    %c0_69 = arith.constant 0 : index
    %181 = vector.load %arg21[%c3, %c0_69] : memref<8x128xf32, #tpu.memory_space<vmem>>, vector<1x128xf32>
    %cst_70 = arith.constant dense<0.000000e+00> : vector<1x128xf32>
    %182 = tpu.matmul %152, %16, %cst_70 {dimension_numbers = #tpu.dot_dimension_numbers<[1], [0], [0], [1], [0, 0, 1, 1], [], []>} : vector<1x32xf32>, vector<32x128xf32>, vector<1x128xf32> -> vector<1x128xf32>
    %183 = arith.addf %181, %182 : vector<1x128xf32>
    %184 = vector.extract_strided_slice %183 {offsets = [0, 0], sizes = [1, 96], strides = [1, 1]} : vector<1x128xf32> to vector<1x96xf32>
    %cst_71 = arith.constant 5.000000e-01 : f32
    %185 = vector.broadcast %cst_71 : f32 to vector<1x96xf32>
    %186 = arith.mulf %185, %184 : vector<1x96xf32>
    %187 = math.tanh %186 : vector<1x96xf32>
    %cst_72 = arith.constant 1.000000e+00 : f32
    %188 = vector.broadcast %cst_72 : f32 to vector<1x96xf32>
    %189 = arith.addf %187, %188 : vector<1x96xf32>
    %cst_73 = arith.constant 5.000000e-01 : f32
    %190 = vector.broadcast %cst_73 : f32 to vector<1x96xf32>
    %191 = arith.mulf %190, %189 : vector<1x96xf32>
    %192 = vector.extract_strided_slice %183 {offsets = [0, 96], sizes = [1, 32], strides = [1, 1]} : vector<1x128xf32> to vector<1x32xf32>
    %193 = math.tanh %192 : vector<1x32xf32>
    %194 = vector.extract_strided_slice %191 {offsets = [0, 32], sizes = [1, 32], strides = [1, 1]} : vector<1x96xf32> to vector<1x32xf32>
    %195 = arith.mulf %194, %153 : vector<1x32xf32>
    %196 = vector.extract_strided_slice %191 {offsets = [0, 0], sizes = [1, 32], strides = [1, 1]} : vector<1x96xf32> to vector<1x32xf32>
    %197 = arith.mulf %196, %193 : vector<1x32xf32>
    %198 = arith.addf %195, %197 : vector<1x32xf32>
    %199 = vector.extract_strided_slice %191 {offsets = [0, 64], sizes = [1, 32], strides = [1, 1]} : vector<1x96xf32> to vector<1x32xf32>
    %200 = math.tanh %198 : vector<1x32xf32>
    %201 = arith.mulf %199, %200 : vector<1x32xf32>
    %c3_i32 = arith.constant 3 : i32
    %202 = arith.cmpi sgt, %1, %c3_i32 : i32
    %cst_74 = arith.constant 0.000000e+00 : f32
    %203 = vector.broadcast %cst_74 : f32 to vector<1x32xf32>
    %204 = arith.select %202, %201, %203 : vector<1x32xf32>
    %c3_75 = arith.constant 3 : index
    %c0_76 = arith.constant 0 : index
    %205 = vector.load %arg23[%c3_75, %c0_76] : memref<8x32xf32, #tpu.memory_space<vmem>>, vector<1x32xf32>
    tpu.vector_store %arg23[%c3_75, %c0_76], %204 {strides = array<i32>} : memref<8x32xf32, #tpu.memory_space<vmem>>, vector<1x32xf32>,
    %206 = arith.select %202, %201, %152 : vector<1x32xf32>
    %207 = arith.select %202, %198, %153 : vector<1x32xf32>
    %c4 = arith.constant 4 : index
    %c0_77 = arith.constant 0 : index
    %208 = vector.load %arg22[%c4, %c0_77] : memref<8x128xf32, #tpu.memory_space<vmem>>, vector<1x128xf32>
    %cst_78 = arith.constant dense<0.000000e+00> : vector<1x128xf32>
    %209 = tpu.matmul %179, %17, %cst_78 {dimension_numbers = #tpu.dot_dimension_numbers<[1], [0], [0], [1], [0, 0, 1, 1], [], []>} : vector<1x32xf32>, vector<32x128xf32>, vector<1x128xf32> -> vector<1x128xf32>
    %210 = arith.addf %208, %209 : vector<1x128xf32>
    %211 = vector.extract_strided_slice %210 {offsets = [0, 0], sizes = [1, 96], strides = [1, 1]} : vector<1x128xf32> to vector<1x96xf32>
    %cst_79 = arith.constant 5.000000e-01 : f32
    %212 = vector.broadcast %cst_79 : f32 to vector<1x96xf32>
    %213 = arith.mulf %212, %211 : vector<1x96xf32>
    %214 = math.tanh %213 : vector<1x96xf32>
    %cst_80 = arith.constant 1.000000e+00 : f32
    %215 = vector.broadcast %cst_80 : f32 to vector<1x96xf32>
    %216 = arith.addf %214, %215 : vector<1x96xf32>
    %cst_81 = arith.constant 5.000000e-01 : f32
    %217 = vector.broadcast %cst_81 : f32 to vector<1x96xf32>
    %218 = arith.mulf %217, %216 : vector<1x96xf32>
    %219 = vector.extract_strided_slice %210 {offsets = [0, 96], sizes = [1, 32], strides = [1, 1]} : vector<1x128xf32> to vector<1x32xf32>
    %220 = math.tanh %219 : vector<1x32xf32>
    %221 = vector.extract_strided_slice %218 {offsets = [0, 32], sizes = [1, 32], strides = [1, 1]} : vector<1x96xf32> to vector<1x32xf32>
    %222 = arith.mulf %221, %180 : vector<1x32xf32>
    %223 = vector.extract_strided_slice %218 {offsets = [0, 0], sizes = [1, 32], strides = [1, 1]} : vector<1x96xf32> to vector<1x32xf32>
    %224 = arith.mulf %223, %220 : vector<1x32xf32>
    %225 = arith.addf %222, %224 : vector<1x32xf32>
    %226 = vector.extract_strided_slice %218 {offsets = [0, 64], sizes = [1, 32], strides = [1, 1]} : vector<1x96xf32> to vector<1x32xf32>
    %227 = math.tanh %225 : vector<1x32xf32>
    %228 = arith.mulf %226, %227 : vector<1x32xf32>
    %c4_i32 = arith.constant 4 : i32
    %229 = arith.cmpi sgt, %1, %c4_i32 : i32
    %cst_82 = arith.constant 0.000000e+00 : f32
    %230 = vector.broadcast %cst_82 : f32 to vector<1x32xf32>
    %231 = arith.select %229, %228, %230 : vector<1x32xf32>
    %c4_83 = arith.constant 4 : index
    %c0_84 = arith.constant 0 : index
    %232 = vector.load %arg24[%c4_83, %c0_84] : memref<8x32xf32, #tpu.memory_space<vmem>>, vector<1x32xf32>
    tpu.vector_store %arg24[%c4_83, %c0_84], %231 {strides = array<i32>} : memref<8x32xf32, #tpu.memory_space<vmem>>, vector<1x32xf32>,
    %233 = arith.select %229, %228, %179 : vector<1x32xf32>
    %234 = arith.select %229, %225, %180 : vector<1x32xf32>
    %c4_85 = arith.constant 4 : index
    %c0_86 = arith.constant 0 : index
    %235 = vector.load %arg21[%c4_85, %c0_86] : memref<8x128xf32, #tpu.memory_space<vmem>>, vector<1x128xf32>
    %cst_87 = arith.constant dense<0.000000e+00> : vector<1x128xf32>
    %236 = tpu.matmul %206, %16, %cst_87 {dimension_numbers = #tpu.dot_dimension_numbers<[1], [0], [0], [1], [0, 0, 1, 1], [], []>} : vector<1x32xf32>, vector<32x128xf32>, vector<1x128xf32> -> vector<1x128xf32>
    %237 = arith.addf %235, %236 : vector<1x128xf32>
    %238 = vector.extract_strided_slice %237 {offsets = [0, 0], sizes = [1, 96], strides = [1, 1]} : vector<1x128xf32> to vector<1x96xf32>
    %cst_88 = arith.constant 5.000000e-01 : f32
    %239 = vector.broadcast %cst_88 : f32 to vector<1x96xf32>
    %240 = arith.mulf %239, %238 : vector<1x96xf32>
    %241 = math.tanh %240 : vector<1x96xf32>
    %cst_89 = arith.constant 1.000000e+00 : f32
    %242 = vector.broadcast %cst_89 : f32 to vector<1x96xf32>
    %243 = arith.addf %241, %242 : vector<1x96xf32>
    %cst_90 = arith.constant 5.000000e-01 : f32
    %244 = vector.broadcast %cst_90 : f32 to vector<1x96xf32>
    %245 = arith.mulf %244, %243 : vector<1x96xf32>
    %246 = vector.extract_strided_slice %237 {offsets = [0, 96], sizes = [1, 32], strides = [1, 1]} : vector<1x128xf32> to vector<1x32xf32>
    %247 = math.tanh %246 : vector<1x32xf32>
    %248 = vector.extract_strided_slice %245 {offsets = [0, 32], sizes = [1, 32], strides = [1, 1]} : vector<1x96xf32> to vector<1x32xf32>
    %249 = arith.mulf %248, %207 : vector<1x32xf32>
    %250 = vector.extract_strided_slice %245 {offsets = [0, 0], sizes = [1, 32], strides = [1, 1]} : vector<1x96xf32> to vector<1x32xf32>
    %251 = arith.mulf %250, %247 : vector<1x32xf32>
    %252 = arith.addf %249, %251 : vector<1x32xf32>
    %253 = vector.extract_strided_slice %245 {offsets = [0, 64], sizes = [1, 32], strides = [1, 1]} : vector<1x96xf32> to vector<1x32xf32>
    %254 = math.tanh %252 : vector<1x32xf32>
    %255 = arith.mulf %253, %254 : vector<1x32xf32>
    %c4_i32_91 = arith.constant 4 : i32
    %256 = arith.cmpi sgt, %1, %c4_i32_91 : i32
    %cst_92 = arith.constant 0.000000e+00 : f32
    %257 = vector.broadcast %cst_92 : f32 to vector<1x32xf32>
    %258 = arith.select %256, %255, %257 : vector<1x32xf32>
    %c4_93 = arith.constant 4 : index
    %c0_94 = arith.constant 0 : index
    %259 = vector.load %arg23[%c4_93, %c0_94] : memref<8x32xf32, #tpu.memory_space<vmem>>, vector<1x32xf32>
    tpu.vector_store %arg23[%c4_93, %c0_94], %258 {strides = array<i32>} : memref<8x32xf32, #tpu.memory_space<vmem>>, vector<1x32xf32>,
    %260 = arith.select %256, %255, %206 : vector<1x32xf32>
    %261 = arith.select %256, %252, %207 : vector<1x32xf32>
    %c3_95 = arith.constant 3 : index
    %c0_96 = arith.constant 0 : index
    %262 = vector.load %arg22[%c3_95, %c0_96] : memref<8x128xf32, #tpu.memory_space<vmem>>, vector<1x128xf32>
    %cst_97 = arith.constant dense<0.000000e+00> : vector<1x128xf32>
    %263 = tpu.matmul %233, %17, %cst_97 {dimension_numbers = #tpu.dot_dimension_numbers<[1], [0], [0], [1], [0, 0, 1, 1], [], []>} : vector<1x32xf32>, vector<32x128xf32>, vector<1x128xf32> -> vector<1x128xf32>
    %264 = arith.addf %262, %263 : vector<1x128xf32>
    %265 = vector.extract_strided_slice %264 {offsets = [0, 0], sizes = [1, 96], strides = [1, 1]} : vector<1x128xf32> to vector<1x96xf32>
    %cst_98 = arith.constant 5.000000e-01 : f32
    %266 = vector.broadcast %cst_98 : f32 to vector<1x96xf32>
    %267 = arith.mulf %266, %265 : vector<1x96xf32>
    %268 = math.tanh %267 : vector<1x96xf32>
    %cst_99 = arith.constant 1.000000e+00 : f32
    %269 = vector.broadcast %cst_99 : f32 to vector<1x96xf32>
    %270 = arith.addf %268, %269 : vector<1x96xf32>
    %cst_100 = arith.constant 5.000000e-01 : f32
    %271 = vector.broadcast %cst_100 : f32 to vector<1x96xf32>
    %272 = arith.mulf %271, %270 : vector<1x96xf32>
    %273 = vector.extract_strided_slice %264 {offsets = [0, 96], sizes = [1, 32], strides = [1, 1]} : vector<1x128xf32> to vector<1x32xf32>
    %274 = math.tanh %273 : vector<1x32xf32>
    %275 = vector.extract_strided_slice %272 {offsets = [0, 32], sizes = [1, 32], strides = [1, 1]} : vector<1x96xf32> to vector<1x32xf32>
    %276 = arith.mulf %275, %234 : vector<1x32xf32>
    %277 = vector.extract_strided_slice %272 {offsets = [0, 0], sizes = [1, 32], strides = [1, 1]} : vector<1x96xf32> to vector<1x32xf32>
    %278 = arith.mulf %277, %274 : vector<1x32xf32>
    %279 = arith.addf %276, %278 : vector<1x32xf32>
    %280 = vector.extract_strided_slice %272 {offsets = [0, 64], sizes = [1, 32], strides = [1, 1]} : vector<1x96xf32> to vector<1x32xf32>
    %281 = math.tanh %279 : vector<1x32xf32>
    %282 = arith.mulf %280, %281 : vector<1x32xf32>
    %c3_i32_101 = arith.constant 3 : i32
    %283 = arith.cmpi sgt, %1, %c3_i32_101 : i32
    %cst_102 = arith.constant 0.000000e+00 : f32
    %284 = vector.broadcast %cst_102 : f32 to vector<1x32xf32>
    %285 = arith.select %283, %282, %284 : vector<1x32xf32>
    %c3_103 = arith.constant 3 : index
    %c0_104 = arith.constant 0 : index
    %286 = vector.load %arg24[%c3_103, %c0_104] : memref<8x32xf32, #tpu.memory_space<vmem>>, vector<1x32xf32>
    tpu.vector_store %arg24[%c3_103, %c0_104], %285 {strides = array<i32>} : memref<8x32xf32, #tpu.memory_space<vmem>>, vector<1x32xf32>,
    %287 = arith.select %283, %282, %233 : vector<1x32xf32>
    %288 = arith.select %283, %279, %234 : vector<1x32xf32>
    %c5_105 = arith.constant 5 : index
    %c0_106 = arith.constant 0 : index
    %289 = vector.load %arg21[%c5_105, %c0_106] : memref<8x128xf32, #tpu.memory_space<vmem>>, vector<1x128xf32>
    %cst_107 = arith.constant dense<0.000000e+00> : vector<1x128xf32>
    %290 = tpu.matmul %260, %16, %cst_107 {dimension_numbers = #tpu.dot_dimension_numbers<[1], [0], [0], [1], [0, 0, 1, 1], [], []>} : vector<1x32xf32>, vector<32x128xf32>, vector<1x128xf32> -> vector<1x128xf32>
    %291 = arith.addf %289, %290 : vector<1x128xf32>
    %292 = vector.extract_strided_slice %291 {offsets = [0, 0], sizes = [1, 96], strides = [1, 1]} : vector<1x128xf32> to vector<1x96xf32>
    %cst_108 = arith.constant 5.000000e-01 : f32
    %293 = vector.broadcast %cst_108 : f32 to vector<1x96xf32>
    %294 = arith.mulf %293, %292 : vector<1x96xf32>
    %295 = math.tanh %294 : vector<1x96xf32>
    %cst_109 = arith.constant 1.000000e+00 : f32
    %296 = vector.broadcast %cst_109 : f32 to vector<1x96xf32>
    %297 = arith.addf %295, %296 : vector<1x96xf32>
    %cst_110 = arith.constant 5.000000e-01 : f32
    %298 = vector.broadcast %cst_110 : f32 to vector<1x96xf32>
    %299 = arith.mulf %298, %297 : vector<1x96xf32>
    %300 = vector.extract_strided_slice %291 {offsets = [0, 96], sizes = [1, 32], strides = [1, 1]} : vector<1x128xf32> to vector<1x32xf32>
    %301 = math.tanh %300 : vector<1x32xf32>
    %302 = vector.extract_strided_slice %299 {offsets = [0, 32], sizes = [1, 32], strides = [1, 1]} : vector<1x96xf32> to vector<1x32xf32>
    %303 = arith.mulf %302, %261 : vector<1x32xf32>
    %304 = vector.extract_strided_slice %299 {offsets = [0, 0], sizes = [1, 32], strides = [1, 1]} : vector<1x96xf32> to vector<1x32xf32>
    %305 = arith.mulf %304, %301 : vector<1x32xf32>
    %306 = arith.addf %303, %305 : vector<1x32xf32>
    %307 = vector.extract_strided_slice %299 {offsets = [0, 64], sizes = [1, 32], strides = [1, 1]} : vector<1x96xf32> to vector<1x32xf32>
    %308 = math.tanh %306 : vector<1x32xf32>
    %309 = arith.mulf %307, %308 : vector<1x32xf32>
    %c5_i32_111 = arith.constant 5 : i32
    %310 = arith.cmpi sgt, %1, %c5_i32_111 : i32
    %cst_112 = arith.constant 0.000000e+00 : f32
    %311 = vector.broadcast %cst_112 : f32 to vector<1x32xf32>
    %312 = arith.select %310, %309, %311 : vector<1x32xf32>
    %c5_113 = arith.constant 5 : index
    %c0_114 = arith.constant 0 : index
    %313 = vector.load %arg23[%c5_113, %c0_114] : memref<8x32xf32, #tpu.memory_space<vmem>>, vector<1x32xf32>
    tpu.vector_store %arg23[%c5_113, %c0_114], %312 {strides = array<i32>} : memref<8x32xf32, #tpu.memory_space<vmem>>, vector<1x32xf32>,
    %314 = arith.select %310, %309, %260 : vector<1x32xf32>
    %315 = arith.select %310, %306, %261 : vector<1x32xf32>
    %c2_115 = arith.constant 2 : index
    %c0_116 = arith.constant 0 : index
    %316 = vector.load %arg22[%c2_115, %c0_116] : memref<8x128xf32, #tpu.memory_space<vmem>>, vector<1x128xf32>
    %cst_117 = arith.constant dense<0.000000e+00> : vector<1x128xf32>
    %317 = tpu.matmul %287, %17, %cst_117 {dimension_numbers = #tpu.dot_dimension_numbers<[1], [0], [0], [1], [0, 0, 1, 1], [], []>} : vector<1x32xf32>, vector<32x128xf32>, vector<1x128xf32> -> vector<1x128xf32>
    %318 = arith.addf %316, %317 : vector<1x128xf32>
    %319 = vector.extract_strided_slice %318 {offsets = [0, 0], sizes = [1, 96], strides = [1, 1]} : vector<1x128xf32> to vector<1x96xf32>
    %cst_118 = arith.constant 5.000000e-01 : f32
    %320 = vector.broadcast %cst_118 : f32 to vector<1x96xf32>
    %321 = arith.mulf %320, %319 : vector<1x96xf32>
    %322 = math.tanh %321 : vector<1x96xf32>
    %cst_119 = arith.constant 1.000000e+00 : f32
    %323 = vector.broadcast %cst_119 : f32 to vector<1x96xf32>
    %324 = arith.addf %322, %323 : vector<1x96xf32>
    %cst_120 = arith.constant 5.000000e-01 : f32
    %325 = vector.broadcast %cst_120 : f32 to vector<1x96xf32>
    %326 = arith.mulf %325, %324 : vector<1x96xf32>
    %327 = vector.extract_strided_slice %318 {offsets = [0, 96], sizes = [1, 32], strides = [1, 1]} : vector<1x128xf32> to vector<1x32xf32>
    %328 = math.tanh %327 : vector<1x32xf32>
    %329 = vector.extract_strided_slice %326 {offsets = [0, 32], sizes = [1, 32], strides = [1, 1]} : vector<1x96xf32> to vector<1x32xf32>
    %330 = arith.mulf %329, %288 : vector<1x32xf32>
    %331 = vector.extract_strided_slice %326 {offsets = [0, 0], sizes = [1, 32], strides = [1, 1]} : vector<1x96xf32> to vector<1x32xf32>
    %332 = arith.mulf %331, %328 : vector<1x32xf32>
    %333 = arith.addf %330, %332 : vector<1x32xf32>
    %334 = vector.extract_strided_slice %326 {offsets = [0, 64], sizes = [1, 32], strides = [1, 1]} : vector<1x96xf32> to vector<1x32xf32>
    %335 = math.tanh %333 : vector<1x32xf32>
    %336 = arith.mulf %334, %335 : vector<1x32xf32>
    %c2_i32_121 = arith.constant 2 : i32
    %337 = arith.cmpi sgt, %1, %c2_i32_121 : i32
    %cst_122 = arith.constant 0.000000e+00 : f32
    %338 = vector.broadcast %cst_122 : f32 to vector<1x32xf32>
    %339 = arith.select %337, %336, %338 : vector<1x32xf32>
    %c2_123 = arith.constant 2 : index
    %c0_124 = arith.constant 0 : index
    %340 = vector.load %arg24[%c2_123, %c0_124] : memref<8x32xf32, #tpu.memory_space<vmem>>, vector<1x32xf32>
    tpu.vector_store %arg24[%c2_123, %c0_124], %339 {strides = array<i32>} : memref<8x32xf32, #tpu.memory_space<vmem>>, vector<1x32xf32>,
    %341 = arith.select %337, %336, %287 : vector<1x32xf32>
    %342 = arith.select %337, %333, %288 : vector<1x32xf32>
    %c6_125 = arith.constant 6 : index
    %c0_126 = arith.constant 0 : index
    %343 = vector.load %arg21[%c6_125, %c0_126] : memref<8x128xf32, #tpu.memory_space<vmem>>, vector<1x128xf32>
    %cst_127 = arith.constant dense<0.000000e+00> : vector<1x128xf32>
    %344 = tpu.matmul %314, %16, %cst_127 {dimension_numbers = #tpu.dot_dimension_numbers<[1], [0], [0], [1], [0, 0, 1, 1], [], []>} : vector<1x32xf32>, vector<32x128xf32>, vector<1x128xf32> -> vector<1x128xf32>
    %345 = arith.addf %343, %344 : vector<1x128xf32>
    %346 = vector.extract_strided_slice %345 {offsets = [0, 0], sizes = [1, 96], strides = [1, 1]} : vector<1x128xf32> to vector<1x96xf32>
    %cst_128 = arith.constant 5.000000e-01 : f32
    %347 = vector.broadcast %cst_128 : f32 to vector<1x96xf32>
    %348 = arith.mulf %347, %346 : vector<1x96xf32>
    %349 = math.tanh %348 : vector<1x96xf32>
    %cst_129 = arith.constant 1.000000e+00 : f32
    %350 = vector.broadcast %cst_129 : f32 to vector<1x96xf32>
    %351 = arith.addf %349, %350 : vector<1x96xf32>
    %cst_130 = arith.constant 5.000000e-01 : f32
    %352 = vector.broadcast %cst_130 : f32 to vector<1x96xf32>
    %353 = arith.mulf %352, %351 : vector<1x96xf32>
    %354 = vector.extract_strided_slice %345 {offsets = [0, 96], sizes = [1, 32], strides = [1, 1]} : vector<1x128xf32> to vector<1x32xf32>
    %355 = math.tanh %354 : vector<1x32xf32>
    %356 = vector.extract_strided_slice %353 {offsets = [0, 32], sizes = [1, 32], strides = [1, 1]} : vector<1x96xf32> to vector<1x32xf32>
    %357 = arith.mulf %356, %315 : vector<1x32xf32>
    %358 = vector.extract_strided_slice %353 {offsets = [0, 0], sizes = [1, 32], strides = [1, 1]} : vector<1x96xf32> to vector<1x32xf32>
    %359 = arith.mulf %358, %355 : vector<1x32xf32>
    %360 = arith.addf %357, %359 : vector<1x32xf32>
    %361 = vector.extract_strided_slice %353 {offsets = [0, 64], sizes = [1, 32], strides = [1, 1]} : vector<1x96xf32> to vector<1x32xf32>
    %362 = math.tanh %360 : vector<1x32xf32>
    %363 = arith.mulf %361, %362 : vector<1x32xf32>
    %c6_i32_131 = arith.constant 6 : i32
    %364 = arith.cmpi sgt, %1, %c6_i32_131 : i32
    %cst_132 = arith.constant 0.000000e+00 : f32
    %365 = vector.broadcast %cst_132 : f32 to vector<1x32xf32>
    %366 = arith.select %364, %363, %365 : vector<1x32xf32>
    %c6_133 = arith.constant 6 : index
    %c0_134 = arith.constant 0 : index
    %367 = vector.load %arg23[%c6_133, %c0_134] : memref<8x32xf32, #tpu.memory_space<vmem>>, vector<1x32xf32>
    tpu.vector_store %arg23[%c6_133, %c0_134], %366 {strides = array<i32>} : memref<8x32xf32, #tpu.memory_space<vmem>>, vector<1x32xf32>,
    %368 = arith.select %364, %363, %314 : vector<1x32xf32>
    %369 = arith.select %364, %360, %315 : vector<1x32xf32>
    %c1_135 = arith.constant 1 : index
    %c0_136 = arith.constant 0 : index
    %370 = vector.load %arg22[%c1_135, %c0_136] : memref<8x128xf32, #tpu.memory_space<vmem>>, vector<1x128xf32>
    %cst_137 = arith.constant dense<0.000000e+00> : vector<1x128xf32>
    %371 = tpu.matmul %341, %17, %cst_137 {dimension_numbers = #tpu.dot_dimension_numbers<[1], [0], [0], [1], [0, 0, 1, 1], [], []>} : vector<1x32xf32>, vector<32x128xf32>, vector<1x128xf32> -> vector<1x128xf32>
    %372 = arith.addf %370, %371 : vector<1x128xf32>
    %373 = vector.extract_strided_slice %372 {offsets = [0, 0], sizes = [1, 96], strides = [1, 1]} : vector<1x128xf32> to vector<1x96xf32>
    %cst_138 = arith.constant 5.000000e-01 : f32
    %374 = vector.broadcast %cst_138 : f32 to vector<1x96xf32>
    %375 = arith.mulf %374, %373 : vector<1x96xf32>
    %376 = math.tanh %375 : vector<1x96xf32>
    %cst_139 = arith.constant 1.000000e+00 : f32
    %377 = vector.broadcast %cst_139 : f32 to vector<1x96xf32>
    %378 = arith.addf %376, %377 : vector<1x96xf32>
    %cst_140 = arith.constant 5.000000e-01 : f32
    %379 = vector.broadcast %cst_140 : f32 to vector<1x96xf32>
    %380 = arith.mulf %379, %378 : vector<1x96xf32>
    %381 = vector.extract_strided_slice %372 {offsets = [0, 96], sizes = [1, 32], strides = [1, 1]} : vector<1x128xf32> to vector<1x32xf32>
    %382 = math.tanh %381 : vector<1x32xf32>
    %383 = vector.extract_strided_slice %380 {offsets = [0, 32], sizes = [1, 32], strides = [1, 1]} : vector<1x96xf32> to vector<1x32xf32>
    %384 = arith.mulf %383, %342 : vector<1x32xf32>
    %385 = vector.extract_strided_slice %380 {offsets = [0, 0], sizes = [1, 32], strides = [1, 1]} : vector<1x96xf32> to vector<1x32xf32>
    %386 = arith.mulf %385, %382 : vector<1x32xf32>
    %387 = arith.addf %384, %386 : vector<1x32xf32>
    %388 = vector.extract_strided_slice %380 {offsets = [0, 64], sizes = [1, 32], strides = [1, 1]} : vector<1x96xf32> to vector<1x32xf32>
    %389 = math.tanh %387 : vector<1x32xf32>
    %390 = arith.mulf %388, %389 : vector<1x32xf32>
    %c1_i32_141 = arith.constant 1 : i32
    %391 = arith.cmpi sgt, %1, %c1_i32_141 : i32
    %cst_142 = arith.constant 0.000000e+00 : f32
    %392 = vector.broadcast %cst_142 : f32 to vector<1x32xf32>
    %393 = arith.select %391, %390, %392 : vector<1x32xf32>
    %c1_143 = arith.constant 1 : index
    %c0_144 = arith.constant 0 : index
    %394 = vector.load %arg24[%c1_143, %c0_144] : memref<8x32xf32, #tpu.memory_space<vmem>>, vector<1x32xf32>
    tpu.vector_store %arg24[%c1_143, %c0_144], %393 {strides = array<i32>} : memref<8x32xf32, #tpu.memory_space<vmem>>, vector<1x32xf32>,
    %395 = arith.select %391, %390, %341 : vector<1x32xf32>
    %396 = arith.select %391, %387, %342 : vector<1x32xf32>
    %c7_145 = arith.constant 7 : index
    %c0_146 = arith.constant 0 : index
    %397 = vector.load %arg21[%c7_145, %c0_146] : memref<8x128xf32, #tpu.memory_space<vmem>>, vector<1x128xf32>
    %cst_147 = arith.constant dense<0.000000e+00> : vector<1x128xf32>
    %398 = tpu.matmul %368, %16, %cst_147 {dimension_numbers = #tpu.dot_dimension_numbers<[1], [0], [0], [1], [0, 0, 1, 1], [], []>} : vector<1x32xf32>, vector<32x128xf32>, vector<1x128xf32> -> vector<1x128xf32>
    %399 = arith.addf %397, %398 : vector<1x128xf32>
    %400 = vector.extract_strided_slice %399 {offsets = [0, 0], sizes = [1, 96], strides = [1, 1]} : vector<1x128xf32> to vector<1x96xf32>
    %cst_148 = arith.constant 5.000000e-01 : f32
    %401 = vector.broadcast %cst_148 : f32 to vector<1x96xf32>
    %402 = arith.mulf %401, %400 : vector<1x96xf32>
    %403 = math.tanh %402 : vector<1x96xf32>
    %cst_149 = arith.constant 1.000000e+00 : f32
    %404 = vector.broadcast %cst_149 : f32 to vector<1x96xf32>
    %405 = arith.addf %403, %404 : vector<1x96xf32>
    %cst_150 = arith.constant 5.000000e-01 : f32
    %406 = vector.broadcast %cst_150 : f32 to vector<1x96xf32>
    %407 = arith.mulf %406, %405 : vector<1x96xf32>
    %408 = vector.extract_strided_slice %399 {offsets = [0, 96], sizes = [1, 32], strides = [1, 1]} : vector<1x128xf32> to vector<1x32xf32>
    %409 = math.tanh %408 : vector<1x32xf32>
    %410 = vector.extract_strided_slice %407 {offsets = [0, 32], sizes = [1, 32], strides = [1, 1]} : vector<1x96xf32> to vector<1x32xf32>
    %411 = arith.mulf %410, %369 : vector<1x32xf32>
    %412 = vector.extract_strided_slice %407 {offsets = [0, 0], sizes = [1, 32], strides = [1, 1]} : vector<1x96xf32> to vector<1x32xf32>
    %413 = arith.mulf %412, %409 : vector<1x32xf32>
    %414 = arith.addf %411, %413 : vector<1x32xf32>
    %415 = vector.extract_strided_slice %407 {offsets = [0, 64], sizes = [1, 32], strides = [1, 1]} : vector<1x96xf32> to vector<1x32xf32>
    %416 = math.tanh %414 : vector<1x32xf32>
    %417 = arith.mulf %415, %416 : vector<1x32xf32>
    %c7_i32_151 = arith.constant 7 : i32
    %418 = arith.cmpi sgt, %1, %c7_i32_151 : i32
    %cst_152 = arith.constant 0.000000e+00 : f32
    %419 = vector.broadcast %cst_152 : f32 to vector<1x32xf32>
    %420 = arith.select %418, %417, %419 : vector<1x32xf32>
    %c7_153 = arith.constant 7 : index
    %c0_154 = arith.constant 0 : index
    %421 = vector.load %arg23[%c7_153, %c0_154] : memref<8x32xf32, #tpu.memory_space<vmem>>, vector<1x32xf32>
    tpu.vector_store %arg23[%c7_153, %c0_154], %420 {strides = array<i32>} : memref<8x32xf32, #tpu.memory_space<vmem>>, vector<1x32xf32>,
    %422 = arith.select %418, %417, %368 : vector<1x32xf32>
    %c0_155 = arith.constant 0 : index
    %c0_156 = arith.constant 0 : index
    %423 = vector.load %arg22[%c0_155, %c0_156] : memref<8x128xf32, #tpu.memory_space<vmem>>, vector<1x128xf32>
    %cst_157 = arith.constant dense<0.000000e+00> : vector<1x128xf32>
    %424 = tpu.matmul %395, %17, %cst_157 {dimension_numbers = #tpu.dot_dimension_numbers<[1], [0], [0], [1], [0, 0, 1, 1], [], []>} : vector<1x32xf32>, vector<32x128xf32>, vector<1x128xf32> -> vector<1x128xf32>
    %425 = arith.addf %423, %424 : vector<1x128xf32>
    %426 = vector.extract_strided_slice %425 {offsets = [0, 0], sizes = [1, 96], strides = [1, 1]} : vector<1x128xf32> to vector<1x96xf32>
    %cst_158 = arith.constant 5.000000e-01 : f32
    %427 = vector.broadcast %cst_158 : f32 to vector<1x96xf32>
    %428 = arith.mulf %427, %426 : vector<1x96xf32>
    %429 = math.tanh %428 : vector<1x96xf32>
    %cst_159 = arith.constant 1.000000e+00 : f32
    %430 = vector.broadcast %cst_159 : f32 to vector<1x96xf32>
    %431 = arith.addf %429, %430 : vector<1x96xf32>
    %cst_160 = arith.constant 5.000000e-01 : f32
    %432 = vector.broadcast %cst_160 : f32 to vector<1x96xf32>
    %433 = arith.mulf %432, %431 : vector<1x96xf32>
    %434 = vector.extract_strided_slice %425 {offsets = [0, 96], sizes = [1, 32], strides = [1, 1]} : vector<1x128xf32> to vector<1x32xf32>
    %435 = math.tanh %434 : vector<1x32xf32>
    %436 = vector.extract_strided_slice %433 {offsets = [0, 32], sizes = [1, 32], strides = [1, 1]} : vector<1x96xf32> to vector<1x32xf32>
    %437 = arith.mulf %436, %396 : vector<1x32xf32>
    %438 = vector.extract_strided_slice %433 {offsets = [0, 0], sizes = [1, 32], strides = [1, 1]} : vector<1x96xf32> to vector<1x32xf32>
    %439 = arith.mulf %438, %435 : vector<1x32xf32>
    %440 = arith.addf %437, %439 : vector<1x32xf32>
    %441 = vector.extract_strided_slice %433 {offsets = [0, 64], sizes = [1, 32], strides = [1, 1]} : vector<1x96xf32> to vector<1x32xf32>
    %442 = math.tanh %440 : vector<1x32xf32>
    %443 = arith.mulf %441, %442 : vector<1x32xf32>
    %c0_i32_161 = arith.constant 0 : i32
    %444 = arith.cmpi sgt, %1, %c0_i32_161 : i32
    %cst_162 = arith.constant 0.000000e+00 : f32
    %445 = vector.broadcast %cst_162 : f32 to vector<1x32xf32>
    %446 = arith.select %444, %443, %445 : vector<1x32xf32>
    %c0_163 = arith.constant 0 : index
    %c0_164 = arith.constant 0 : index
    %447 = vector.load %arg24[%c0_163, %c0_164] : memref<8x32xf32, #tpu.memory_space<vmem>>, vector<1x32xf32>
    tpu.vector_store %arg24[%c0_163, %c0_164], %446 {strides = array<i32>} : memref<8x32xf32, #tpu.memory_space<vmem>>, vector<1x32xf32>,
    %448 = arith.select %444, %443, %395 : vector<1x32xf32>
    %c0_165 = arith.constant 0 : index
    %c0_166 = arith.constant 0 : index
    %449 = vector.load %arg23[%c0_165, %c0_166] : memref<8x32xf32, #tpu.memory_space<vmem>>, vector<8x32xf32>
    %c0_167 = arith.constant 0 : index
    %c0_168 = arith.constant 0 : index
    %450 = vector.load %arg24[%c0_167, %c0_168] : memref<8x32xf32, #tpu.memory_space<vmem>>, vector<8x32xf32>
    %c0_169 = arith.constant 0 : index
    %c0_170 = arith.constant 0 : index
    %451 = vector.load %arg10[%c0_169, %c0_170] : memref<64x64xf32, #tpu.memory_space<vmem>>, vector<32x64xf32>
    %cst_171 = arith.constant dense<0.000000e+00> : vector<8x64xf32>
    %452 = tpu.matmul %449, %451, %cst_171 {dimension_numbers = #tpu.dot_dimension_numbers<[1], [0], [0], [1], [0, 0, 1, 1], [], []>} : vector<8x32xf32>, vector<32x64xf32>, vector<8x64xf32> -> vector<8x64xf32>
    %c32 = arith.constant 32 : index
    %c0_172 = arith.constant 0 : index
    %453 = vector.load %arg10[%c32, %c0_172] : memref<64x64xf32, #tpu.memory_space<vmem>>, vector<32x64xf32>
    %cst_173 = arith.constant dense<0.000000e+00> : vector<8x64xf32>
    %454 = tpu.matmul %450, %453, %cst_173 {dimension_numbers = #tpu.dot_dimension_numbers<[1], [0], [0], [1], [0, 0, 1, 1], [], []>} : vector<8x32xf32>, vector<32x64xf32>, vector<8x64xf32> -> vector<8x64xf32>
    %455 = arith.addf %452, %454 : vector<8x64xf32>
    %c0_174 = arith.constant 0 : index
    %c0_175 = arith.constant 0 : index
    %456 = vector.load %arg12[%c0_174, %c0_175] : memref<64x1xf32, #tpu.memory_space<vmem>>, vector<64x1xf32>
    %cst_176 = arith.constant dense<0.000000e+00> : vector<8x1xf32>
    %457 = tpu.matmul %455, %456, %cst_176 {dimension_numbers = #tpu.dot_dimension_numbers<[1], [0], [0], [1], [0, 0, 1, 1], [], []>} : vector<8x64xf32>, vector<64x1xf32>, vector<8x1xf32> -> vector<8x1xf32>
    %c0_177 = arith.constant 0 : index
    %c0_178 = arith.constant 0 : index
    %458 = vector.load %arg3[%c0_177, %c0_178] : memref<1x32xf32, #tpu.memory_space<vmem>>, vector<1x32xf32>
    %c0_179 = arith.constant 0 : index
    %c0_180 = arith.constant 0 : index
    %459 = vector.load %arg11[%c0_179, %c0_180] : memref<32x32xf32, #tpu.memory_space<vmem>>, vector<32x32xf32>
    %cst_181 = arith.constant dense<0.000000e+00> : vector<1x32xf32>
    %460 = tpu.matmul %458, %459, %cst_181 {dimension_numbers = #tpu.dot_dimension_numbers<[1], [0], [0], [1], [0, 0, 1, 1], [], []>} : vector<1x32xf32>, vector<32x32xf32>, vector<1x32xf32> -> vector<1x32xf32>
    %c0_182 = arith.constant 0 : index
    %c0_183 = arith.constant 0 : index
    %461 = vector.load %arg13[%c0_182, %c0_183] : memref<32x1xf32, #tpu.memory_space<vmem>>, vector<32x1xf32>
    %cst_184 = arith.constant dense<0.000000e+00> : vector<1x1xf32>
    %462 = tpu.matmul %460, %461, %cst_184 {dimension_numbers = #tpu.dot_dimension_numbers<[1], [0], [0], [1], [0, 0, 1, 1], [], []>} : vector<1x32xf32>, vector<32x1xf32>, vector<1x1xf32> -> vector<1x1xf32>
    %463 = tpu.iota {dimensions = array<i32: 0>} : vector<8x1xi32>
    %464 = vector.broadcast %1 : i32 to vector<8x1xi32>
    %465 = arith.cmpi slt, %463, %464 : vector<8x1xi32>
    %466 = arith.extui %465 : vector<8x1xi1> to vector<8x1xi32>
    %467 = arith.sitofp %466 : vector<8x1xi32> to vector<8x1xf32>
    %468 = vector.broadcast %462 : vector<1x1xf32> to vector<8x1xf32>
    %469 = arith.mulf %468, %467 : vector<8x1xf32>
    %470 = arith.addf %457, %469 : vector<8x1xf32>
    %cst_185 = arith.constant dense<0xFF800000> : vector<1xf32>
    %471 = vector.multi_reduction <maximumf>, %470, %cst_185 [0] : vector<8x1xf32> to vector<1xf32>
    %472 = vector.shape_cast %471 : vector<1xf32> to vector<1x1xf32>
    %473 = vector.broadcast %472 : vector<1x1xf32> to vector<8x1xf32>
    %474 = arith.subf %470, %473 : vector<8x1xf32>
    %475 = math.exp %474 : vector<8x1xf32>
    %cst_186 = arith.constant dense<0.000000e+00> : vector<1xf32>
    %476 = vector.multi_reduction <add>, %475, %cst_186 [0] : vector<8x1xf32> to vector<1xf32>
    %477 = vector.shape_cast %476 : vector<1xf32> to vector<1x1xf32>
    %478 = tpu.reciprocal %477 {approx = true} : vector<1x1xf32> -> vector<1x1xf32>
    %479 = vector.broadcast %478 : vector<1x1xf32> to vector<8x1xf32>
    %480 = arith.mulf %475, %479 : vector<8x1xf32>
    %481 = vector.broadcast %480 : vector<8x1xf32> to vector<8x32xf32>
    %482 = arith.mulf %481, %449 : vector<8x32xf32>
    %cst_187 = arith.constant dense<0.000000e+00> : vector<32xf32>
    %483 = vector.multi_reduction <add>, %482, %cst_187 [0] : vector<8x32xf32> to vector<32xf32>
    %484 = vector.shape_cast %483 : vector<32xf32> to vector<1x32xf32>
    %485 = vector.broadcast %480 : vector<8x1xf32> to vector<8x32xf32>
    %486 = arith.mulf %485, %450 : vector<8x32xf32>
    %cst_188 = arith.constant dense<0.000000e+00> : vector<32xf32>
    %487 = vector.multi_reduction <add>, %486, %cst_188 [0] : vector<8x32xf32> to vector<32xf32>
    %488 = vector.shape_cast %487 : vector<32xf32> to vector<1x32xf32>
    %c0_189 = arith.constant 0 : index
    %c0_190 = arith.constant 0 : index
    %489 = vector.load %arg14[%c0_189, %c0_190] : memref<64x64xf32, #tpu.memory_space<vmem>>, vector<32x64xf32>
    %cst_191 = arith.constant dense<0.000000e+00> : vector<1x64xf32>
    %490 = tpu.matmul %484, %489, %cst_191 {dimension_numbers = #tpu.dot_dimension_numbers<[1], [0], [0], [1], [0, 0, 1, 1], [], []>} : vector<1x32xf32>, vector<32x64xf32>, vector<1x64xf32> -> vector<1x64xf32>
    %c32_192 = arith.constant 32 : index
    %c0_193 = arith.constant 0 : index
    %491 = vector.load %arg14[%c32_192, %c0_193] : memref<64x64xf32, #tpu.memory_space<vmem>>, vector<32x64xf32>
    %cst_194 = arith.constant dense<0.000000e+00> : vector<1x64xf32>
    %492 = tpu.matmul %488, %491, %cst_194 {dimension_numbers = #tpu.dot_dimension_numbers<[1], [0], [0], [1], [0, 0, 1, 1], [], []>} : vector<1x32xf32>, vector<32x64xf32>, vector<1x64xf32> -> vector<1x64xf32>
    %493 = arith.addf %490, %492 : vector<1x64xf32>
    %c0_195 = arith.constant 0 : index
    %c0_196 = arith.constant 0 : index
    %494 = vector.load %arg15[%c0_195, %c0_196] : memref<1x64xf32, #tpu.memory_space<vmem>>, vector<1x64xf32>
    %495 = arith.addf %493, %494 : vector<1x64xf32>
    %c0_197 = arith.constant 0 : index
    %c0_198 = arith.constant 0 : index
    %496 = vector.load %arg16[%c0_197, %c0_198] : memref<64x64xf32, #tpu.memory_space<vmem>>, vector<32x64xf32>
    %cst_199 = arith.constant dense<0.000000e+00> : vector<1x64xf32>
    %497 = tpu.matmul %422, %496, %cst_199 {dimension_numbers = #tpu.dot_dimension_numbers<[1], [0], [0], [1], [0, 0, 1, 1], [], []>} : vector<1x32xf32>, vector<32x64xf32>, vector<1x64xf32> -> vector<1x64xf32>
    %498 = arith.addf %495, %497 : vector<1x64xf32>
    %c32_200 = arith.constant 32 : index
    %c0_201 = arith.constant 0 : index
    %499 = vector.load %arg16[%c32_200, %c0_201] : memref<64x64xf32, #tpu.memory_space<vmem>>, vector<32x64xf32>
    %cst_202 = arith.constant dense<0.000000e+00> : vector<1x64xf32>
    %500 = tpu.matmul %448, %499, %cst_202 {dimension_numbers = #tpu.dot_dimension_numbers<[1], [0], [0], [1], [0, 0, 1, 1], [], []>} : vector<1x32xf32>, vector<32x64xf32>, vector<1x64xf32> -> vector<1x64xf32>
    %501 = arith.addf %498, %500 : vector<1x64xf32>
    %c0_203 = arith.constant 0 : index
    %c0_204 = arith.constant 0 : index
    %502 = vector.load %arg17[%c0_203, %c0_204] : memref<1x64xf32, #tpu.memory_space<vmem>>, vector<1x64xf32>
    %503 = arith.addf %501, %502 : vector<1x64xf32>
    %cst_205 = arith.constant 0.000000e+00 : f32
    %504 = vector.broadcast %cst_205 : f32 to vector<1x64xf32>
    %505 = arith.maximumf %503, %504 : vector<1x64xf32>
    %c0_206 = arith.constant 0 : index
    %c0_207 = arith.constant 0 : index
    %506 = vector.load %arg18[%c0_206, %c0_207] : memref<64x3xf32, #tpu.memory_space<vmem>>, vector<64x3xf32>
    %cst_208 = arith.constant dense<0.000000e+00> : vector<1x3xf32>
    %507 = tpu.matmul %505, %506, %cst_208 {dimension_numbers = #tpu.dot_dimension_numbers<[1], [0], [0], [1], [0, 0, 1, 1], [], []>} : vector<1x64xf32>, vector<64x3xf32>, vector<1x3xf32> -> vector<1x3xf32>
    %c0_209 = arith.constant 0 : index
    %c0_210 = arith.constant 0 : index
    %508 = vector.load %arg19[%c0_209, %c0_210] : memref<1x3xf32, #tpu.memory_space<vmem>>, vector<1x3xf32>
    %509 = arith.addf %507, %508 : vector<1x3xf32>
    %cst_211 = arith.constant dense<0xFF800000> : vector<1xf32>
    %510 = vector.multi_reduction <maximumf>, %509, %cst_211 [1] : vector<1x3xf32> to vector<1xf32>
    %511 = vector.shape_cast %510 : vector<1xf32> to vector<1x1xf32>
    %512 = vector.broadcast %511 : vector<1x1xf32> to vector<1x3xf32>
    %513 = arith.subf %509, %512 : vector<1x3xf32>
    %514 = math.exp %513 : vector<1x3xf32>
    %cst_212 = arith.constant dense<0.000000e+00> : vector<1xf32>
    %515 = vector.multi_reduction <add>, %514, %cst_212 [1] : vector<1x3xf32> to vector<1xf32>
    %516 = vector.shape_cast %515 : vector<1xf32> to vector<1x1xf32>
    %517 = math.log %516 : vector<1x1xf32>
    %518 = arith.addf %517, %511 : vector<1x1xf32>
    %519 = vector.broadcast %518 : vector<1x1xf32> to vector<1x3xf32>
    %520 = arith.subf %509, %519 : vector<1x3xf32>
    %c0_213 = arith.constant 0 : index
    %c0_214 = arith.constant 0 : index
    %c0_215 = arith.constant 0 : index
    %521 = vector.load %arg20[%c0_213, %c0_214, %c0_215] : memref<1x1x3xf32, #tpu.memory_space<vmem>>, vector<1x1x3xf32>
    %522 = vector.shape_cast %521 : vector<1x1x3xf32> to vector<1x3xf32>
    %523 = vector.shape_cast %520 : vector<1x3xf32> to vector<1x1x3xf32>
    tpu.vector_store %arg20[%c0_213, %c0_214, %c0_215], %523 {strides = array<i32>} : memref<1x1x3xf32, #tpu.memory_space<vmem>>, vector<1x1x3xf32>,
    return
  }
  func.func @transform_0(%arg0: i32, %arg1: memref<2xi32, #tpu.memory_space<smem>>) -> (i32, i32, i32) {
    %c0_i32 = arith.constant 0 : i32
    %c0_i32_0 = arith.constant 0 : i32
    %c0_i32_1 = arith.constant 0 : i32
    return %arg0, %c0_i32, %c0_i32_0 : i32, i32, i32
  }
  func.func @transform_1(%arg0: i32, %arg1: memref<2xi32, #tpu.memory_space<smem>>) -> (i32, i32) {
    %c0_i32 = arith.constant 0 : i32
    %c0_i32_0 = arith.constant 0 : i32
    %c0_i32_1 = arith.constant 0 : i32
    return %c0_i32, %c0_i32_0 : i32, i32
  }
  func.func @transform_2(%arg0: i32, %arg1: memref<2xi32, #tpu.memory_space<smem>>) -> (i32, i32) {
    %c0_i32 = arith.constant 0 : i32
    %c0_i32_0 = arith.constant 0 : i32
    %c0_i32_1 = arith.constant 0 : i32
    return %c0_i32, %c0_i32_0 : i32, i32
  }
  func.func @transform_3(%arg0: i32, %arg1: memref<2xi32, #tpu.memory_space<smem>>) -> (i32, i32) {
    %c0_i32 = arith.constant 0 : i32
    %c0_i32_0 = arith.constant 0 : i32
    %c0_i32_1 = arith.constant 0 : i32
    return %c0_i32, %c0_i32_0 : i32, i32
  }
  func.func @transform_4(%arg0: i32, %arg1: memref<2xi32, #tpu.memory_space<smem>>) -> (i32, i32) {
    %c0_i32 = arith.constant 0 : i32
    %c0_i32_0 = arith.constant 0 : i32
    %c0_i32_1 = arith.constant 0 : i32
    return %c0_i32, %c0_i32_0 : i32, i32
  }
  func.func @transform_5(%arg0: i32, %arg1: memref<2xi32, #tpu.memory_space<smem>>) -> (i32, i32) {
    %c0_i32 = arith.constant 0 : i32
    %c0_i32_0 = arith.constant 0 : i32
    %c0_i32_1 = arith.constant 0 : i32
    return %c0_i32, %c0_i32_0 : i32, i32
  }
  func.func @transform_6(%arg0: i32, %arg1: memref<2xi32, #tpu.memory_space<smem>>) -> (i32, i32) {
    %c0_i32 = arith.constant 0 : i32
    %c0_i32_0 = arith.constant 0 : i32
    %c0_i32_1 = arith.constant 0 : i32
    return %c0_i32, %c0_i32_0 : i32, i32
  }
  func.func @transform_7(%arg0: i32, %arg1: memref<2xi32, #tpu.memory_space<smem>>) -> (i32, i32) {
    %c0_i32 = arith.constant 0 : i32
    %c0_i32_0 = arith.constant 0 : i32
    %c0_i32_1 = arith.constant 0 : i32
    return %c0_i32, %c0_i32_0 : i32, i32
  }
  func.func @transform_8(%arg0: i32, %arg1: memref<2xi32, #tpu.memory_space<smem>>) -> (i32, i32) {
    %c0_i32 = arith.constant 0 : i32
    %c0_i32_0 = arith.constant 0 : i32
    %c0_i32_1 = arith.constant 0 : i32
    return %c0_i32, %c0_i32_0 : i32, i32
  }
  func.func @transform_9(%arg0: i32, %arg1: memref<2xi32, #tpu.memory_space<smem>>) -> (i32, i32) {
    %c0_i32 = arith.constant 0 : i32
    %c0_i32_0 = arith.constant 0 : i32
    %c0_i32_1 = arith.constant 0 : i32
    return %c0_i32, %c0_i32_0 : i32, i32
  }
  func.func @transform_10(%arg0: i32, %arg1: memref<2xi32, #tpu.memory_space<smem>>) -> (i32, i32) {
    %c0_i32 = arith.constant 0 : i32
    %c0_i32_0 = arith.constant 0 : i32
    %c0_i32_1 = arith.constant 0 : i32
    return %c0_i32, %c0_i32_0 : i32, i32
  }
  func.func @transform_11(%arg0: i32, %arg1: memref<2xi32, #tpu.memory_space<smem>>) -> (i32, i32) {
    %c0_i32 = arith.constant 0 : i32
    %c0_i32_0 = arith.constant 0 : i32
    %c0_i32_1 = arith.constant 0 : i32
    return %c0_i32, %c0_i32_0 : i32, i32
  }
  func.func @transform_12(%arg0: i32, %arg1: memref<2xi32, #tpu.memory_space<smem>>) -> (i32, i32) {
    %c0_i32 = arith.constant 0 : i32
    %c0_i32_0 = arith.constant 0 : i32
    %c0_i32_1 = arith.constant 0 : i32
    return %c0_i32, %c0_i32_0 : i32, i32
  }
  func.func @transform_13(%arg0: i32, %arg1: memref<2xi32, #tpu.memory_space<smem>>) -> (i32, i32) {
    %c0_i32 = arith.constant 0 : i32
    %c0_i32_0 = arith.constant 0 : i32
    %c0_i32_1 = arith.constant 0 : i32
    return %c0_i32, %c0_i32_0 : i32, i32
  }
  func.func @transform_14(%arg0: i32, %arg1: memref<2xi32, #tpu.memory_space<smem>>) -> (i32, i32) {
    %c0_i32 = arith.constant 0 : i32
    %c0_i32_0 = arith.constant 0 : i32
    %c0_i32_1 = arith.constant 0 : i32
    return %c0_i32, %c0_i32_0 : i32, i32
  }
  func.func @transform_15(%arg0: i32, %arg1: memref<2xi32, #tpu.memory_space<smem>>) -> (i32, i32) {
    %c0_i32 = arith.constant 0 : i32
    %c0_i32_0 = arith.constant 0 : i32
    %c0_i32_1 = arith.constant 0 : i32
    return %c0_i32, %c0_i32_0 : i32, i32
  }
  func.func @transform_16(%arg0: i32, %arg1: memref<2xi32, #tpu.memory_space<smem>>) -> (i32, i32) {
    %c0_i32 = arith.constant 0 : i32
    %c0_i32_0 = arith.constant 0 : i32
    %c0_i32_1 = arith.constant 0 : i32
    return %c0_i32, %c0_i32_0 : i32, i32
  }
  func.func @transform_17(%arg0: i32, %arg1: memref<2xi32, #tpu.memory_space<smem>>) -> (i32, i32) {
    %c0_i32 = arith.constant 0 : i32
    %c0_i32_0 = arith.constant 0 : i32
    %c0_i32_1 = arith.constant 0 : i32
    return %c0_i32, %c0_i32_0 : i32, i32
  }
  func.func @transform_18(%arg0: i32, %arg1: memref<2xi32, #tpu.memory_space<smem>>) -> (i32, i32, i32) {
    %c0_i32 = arith.constant 0 : i32
    %c0_i32_0 = arith.constant 0 : i32
    %c0_i32_1 = arith.constant 0 : i32
    return %arg0, %c0_i32, %c0_i32_0 : i32, i32, i32
  }
}

</mosaic_0001>

<llo_original>
// kernel: forward.1
$region0: #{forward.1}
  #allocation0 [shape = 'u32[]', space=smem, size = 0x4, offset = 0x4, fixed_abs, tag = 'smem constant byte address 0x4 - core index']
  #allocation1 [shape = 'u32[144,128]{1,0:T(1,128)}', space=vmem, size = 0x12000, scoped, tag = 'internal scratch']
  #allocation2 [shape = 'f32[8,128]{1,0:T(8,128)}', space=vmem, size = 0x1000, scoped, tag = 'scratch operand']
  #allocation3 [shape = 'f32[8,128]{1,0:T(8,128)}', space=vmem, size = 0x1000, scoped, tag = 'scratch operand']
  #allocation4 [shape = 'f32[8,32]{1,0:T(8,128)}', space=vmem, size = 0x1000, scoped, tag = 'scratch operand']
  #allocation5 [shape = 'f32[8,32]{1,0:T(8,128)}', space=vmem, size = 0x1000, scoped, tag = 'scratch operand']
  #allocation6 [shape = 's32[1]{0}', space=sflag, size = 0x4, scoped, tag = 'scoped memory for forward.1']
  #allocation7 [shape = 'u8[512]{0}', space=smem, size = 0x200, scoped, tag = 'prefetched SMEM operand 0']
  %s0 = inlined_call_operand.vmem [shape: s32[2], index: 0, kind: input, shape index: {}]
  %s1 = inlined_call_operand.vmem [shape: f32[2,8,32], index: 1, kind: input, shape index: {}]
  %s2 = inlined_call_operand.vmem [shape: f32[1,32], index: 2, kind: input, shape index: {}]
  %s3 = inlined_call_operand.vmem [shape: f32[32,128], index: 3, kind: input, shape index: {}]
  %s4 = inlined_call_operand.vmem [shape: f32[32,128], index: 4, kind: input, shape index: {}]
  %s5 = inlined_call_operand.vmem [shape: f32[1,128], index: 5, kind: input, shape index: {}]
  %s6 = inlined_call_operand.vmem [shape: f32[32,128], index: 6, kind: input, shape index: {}]
  %s7 = inlined_call_operand.vmem [shape: f32[32,128], index: 7, kind: input, shape index: {}]
  %s8 = inlined_call_operand.vmem [shape: f32[1,128], index: 8, kind: input, shape index: {}]
  %s9 = inlined_call_operand.vmem [shape: f32[64,64], index: 9, kind: input, shape index: {}]
  %s10 = inlined_call_operand.vmem [shape: f32[32,32], index: 10, kind: input, shape index: {}]
  %s11 = inlined_call_operand.vmem [shape: f32[64,1], index: 11, kind: input, shape index: {}]
  %s12 = inlined_call_operand.vmem [shape: f32[32,1], index: 12, kind: input, shape index: {}]
  %s13 = inlined_call_operand.vmem [shape: f32[64,64], index: 13, kind: input, shape index: {}]
  %s14 = inlined_call_operand.vmem [shape: f32[1,64], index: 14, kind: input, shape index: {}]
  %s15 = inlined_call_operand.vmem [shape: f32[64,64], index: 15, kind: input, shape index: {}]
  %s16 = inlined_call_operand.vmem [shape: f32[1,64], index: 16, kind: input, shape index: {}]
  %s17 = inlined_call_operand.vmem [shape: f32[64,3], index: 17, kind: input, shape index: {}]
  %s18 = inlined_call_operand.vmem [shape: f32[1,3], index: 18, kind: input, shape index: {}]
  %s19 = inlined_call_operand.hbm [shape: f32[2,1,3], index: 19, kind: output, shape index: {}]
  %s20 = sld [smem:[#allocation0]]
  $region105: #{forward.1} parent=0
    _
  %s22 = ssub.s32 1, %s20
  %s23 = scalar_select 0, %s22, %s20
  %s24 = sshll.u32 %s0, 4
  %s25 = int_to_ptr.vmem [resolvable:$true] %s24
  %27 = dma.vmem_to_smem %s25, 16, [#allocation7], [#allocation6]
  %28 = dma.done [#allocation6], 16
  %29 = sfence
  $region1: #{forward.1} parent=0
    #allocation8 [shape = 'u8[1024]{0}', space=vmem, size = 0x400, scoped, tag = 'output window, operand 0']
    #allocation9 [shape = 's32[2]{0}', space=sflag, size = 0x8, scoped, tag = 'scoped memory for forward.1']
    %30 = vsyncpa [#allocation9], 0
    %s31 = scalar_lea.sflag [#allocation9], 1
    %32 = vsyncpa %s31, 0
    loop: start=0, step=1, limit=4
    $region2: #{forward.1} parent=1 // loop_pre_header
      _
    $region3: #{forward.1} parent=1 // loop_header
      %s34 = sphi 0, %s38
      %p35 = scmp.ge.s32.totalorder %s34, 4
      %s44 = sphi 0, %s46
      %s47 = sphi 0, %s44
      %s48 = sphi 0, %s47
      %s64 = sphi 0, %s48
      %s68 = sphi 0, %s68
      %s70 = sphi 0, %s68
      %s71 = sphi 0, %s70
      %s85 = sphi 0, %s71
      %s89 = sphi 0, %s89
      %s91 = sphi 0, %s89
      %s92 = sphi 0, %s91
      %s106 = sphi 0, %s92
      %s110 = sphi 0, %s110
      %s112 = sphi 0, %s110
      %s113 = sphi 0, %s112
      %s127 = sphi 0, %s113
      %s131 = sphi 0, %s131
      %s133 = sphi 0, %s131
      %s134 = sphi 0, %s133
      %s148 = sphi 0, %s134
      %s152 = sphi 0, %s152
      %s154 = sphi 0, %s152
      %s155 = sphi 0, %s154
      %s169 = sphi 0, %s155
      %s173 = sphi 0, %s173
      %s175 = sphi 0, %s173
      %s176 = sphi 0, %s175
      %s190 = sphi 0, %s176
      %s194 = sphi 0, %s194
      %s196 = sphi 0, %s194
      %s197 = sphi 0, %s196
      %s211 = sphi 0, %s197
      %s215 = sphi 0, %s215
      %s217 = sphi 0, %s215
      %s218 = sphi 0, %s217
      %s232 = sphi 0, %s218
      %s236 = sphi 0, %s236
      %s238 = sphi 0, %s236
      %s239 = sphi 0, %s238
      %s253 = sphi 0, %s239
      %s257 = sphi 0, %s257
      %s259 = sphi 0, %s257
      %s260 = sphi 0, %s259
      %s274 = sphi 0, %s260
      %s278 = sphi 0, %s278
      %s280 = sphi 0, %s278
      %s281 = sphi 0, %s280
      %s295 = sphi 0, %s281
      %s299 = sphi 0, %s299
      %s301 = sphi 0, %s299
      %s302 = sphi 0, %s301
      %s316 = sphi 0, %s302
      %s320 = sphi 0, %s320
      %s322 = sphi 0, %s320
      %s323 = sphi 0, %s322
      %s337 = sphi 0, %s323
      %s341 = sphi 0, %s341
      %s343 = sphi 0, %s341
      %s344 = sphi 0, %s343
      %s358 = sphi 0, %s344
      %s362 = sphi 0, %s362
      %s364 = sphi 0, %s362
      %s365 = sphi 0, %s364
      %s379 = sphi 0, %s365
      %s383 = sphi 0, %s383
      %s385 = sphi 0, %s383
      %s386 = sphi 0, %s385
      %s400 = sphi 0, %s386
      %s404 = sphi 0, %s404
      %s406 = sphi 0, %s404
      %s407 = sphi 0, %s406
      %s421 = sphi 0, %s407
      %s427 = sphi 0, %s429
      %s430 = sphi 0, %s427
      %s431 = sphi 0, %s430
      %s447 = sphi 0, %s431
    $region4: #{forward.1} parent=1 // loop_header_branch
      %37 = sbr.rel (%p35) target = $region8
    $region5: #{forward.1} parent=1 // loop_body
      %s39 = ssub.s32 %s34, 1
      %s40 = ssub.s32 %s34, 2
      %s41 = sadd.s32 %s34, 1
      %s42 = ssub.s32 %s34, %s41
      %p43 = scmp.eq.s32.totalorder %s42, 0
      %s45 = sadd.s32 %s44, 1
      %s46 = scalar_select %p43, %s44, %s45
      %p49 = pneg %p43
      %p50 = scmp.eq.s32.totalorder %s34, 1
      %p51 = por %p49, %p50
      %p52 = scmp.ne.s32.totalorder %s44, %s47
      %p53 = scmp.eq.s32.totalorder %s34, 0
      %p54 = por %p52, %p53
      %p55 = scmp.ne.s32.totalorder %s44, %s47
      %p56 = scmp.eq.s32.totalorder %s39, 1
      %p57 = por %p55, %p56
      %p58 = scmp.ne.s32.totalorder %s47, %s48
      %p59 = scmp.eq.s32.totalorder %s39, 0
      %p60 = por %p58, %p59
      %p61 = scmp.ne.s32.totalorder %s47, %s48
      %p62 = scmp.eq.s32.totalorder %s40, 1
      %p63 = por %p61, %p62
      %p65 = scmp.ne.s32.totalorder %s48, %s64
      %p66 = scmp.eq.s32.totalorder %s40, 0
      %p67 = por %p65, %p66
      %s69 = sadd.s32 %s68, 1
      %p72 = scmp.eq.s32.totalorder %s34, 1
      %p73 = scmp.ne.s32.totalorder %s68, %s70
      %p74 = scmp.eq.s32.totalorder %s34, 0
      %p75 = por %p73, %p74
      %p76 = scmp.ne.s32.totalorder %s68, %s70
      %p77 = scmp.eq.s32.totalorder %s39, 1
      %p78 = por %p76, %p77
      %p79 = scmp.ne.s32.totalorder %s70, %s71
      %p80 = scmp.eq.s32.totalorder %s39, 0
      %p81 = por %p79, %p80
      %p82 = scmp.ne.s32.totalorder %s70, %s71
      %p83 = scmp.eq.s32.totalorder %s40, 1
      %p84 = por %p82, %p83
      %p86 = scmp.ne.s32.totalorder %s71, %s85
      %p87 = scmp.eq.s32.totalorder %s40, 0
      %p88 = por %p86, %p87
      %s90 = sadd.s32 %s89, 1
      %p93 = scmp.eq.s32.totalorder %s34, 1
      %p94 = scmp.ne.s32.totalorder %s89, %s91
      %p95 = scmp.eq.s32.totalorder %s34, 0
      %p96 = por %p94, %p95
      %p97 = scmp.ne.s32.totalorder %s89, %s91
      %p98 = scmp.eq.s32.totalorder %s39, 1
      %p99 = por %p97, %p98
      %p100 = scmp.ne.s32.totalorder %s91, %s92
      %p101 = scmp.eq.s32.totalorder %s39, 0
      %p102 = por %p100, %p101
      %p103 = scmp.ne.s32.totalorder %s91, %s92
      %p104 = scmp.eq.s32.totalorder %s40, 1
      %p105 = por %p103, %p104
      %p107 = scmp.ne.s32.totalorder %s92, %s106
      %p108 = scmp.eq.s32.totalorder %s40, 0
      %p109 = por %p107, %p108
      %s111 = sadd.s32 %s110, 1
      %p114 = scmp.eq.s32.totalorder %s34, 1
      %p115 = scmp.ne.s32.totalorder %s110, %s112
      %p116 = scmp.eq.s32.totalorder %s34, 0
      %p117 = por %p115, %p116
      %p118 = scmp.ne.s32.totalorder %s110, %s112
      %p119 = scmp.eq.s32.totalorder %s39, 1
      %p120 = por %p118, %p119
      %p121 = scmp.ne.s32.totalorder %s112, %s113
      %p122 = scmp.eq.s32.totalorder %s39, 0
      %p123 = por %p121, %p122
      %p124 = scmp.ne.s32.totalorder %s112, %s113
      %p125 = scmp.eq.s32.totalorder %s40, 1
      %p126 = por %p124, %p125
      %p128 = scmp.ne.s32.totalorder %s113, %s127
      %p129 = scmp.eq.s32.totalorder %s40, 0
      %p130 = por %p128, %p129
      %s132 = sadd.s32 %s131, 1
      %p135 = scmp.eq.s32.totalorder %s34, 1
      %p136 = scmp.ne.s32.totalorder %s131, %s133
      %p137 = scmp.eq.s32.totalorder %s34, 0
      %p138 = por %p136, %p137
      %p139 = scmp.ne.s32.totalorder %s131, %s133
      %p140 = scmp.eq.s32.totalorder %s39, 1
      %p141 = por %p139, %p140
      %p142 = scmp.ne.s32.totalorder %s133, %s134
      %p143 = scmp.eq.s32.totalorder %s39, 0
      %p144 = por %p142, %p143
      %p145 = scmp.ne.s32.totalorder %s133, %s134
      %p146 = scmp.eq.s32.totalorder %s40, 1
      %p147 = por %p145, %p146
      %p149 = scmp.ne.s32.totalorder %s134, %s148
      %p150 = scmp.eq.s32.totalorder %s40, 0
      %p151 = por %p149, %p150
      %s153 = sadd.s32 %s152, 1
      %p156 = scmp.eq.s32.totalorder %s34, 1
      %p157 = scmp.ne.s32.totalorder %s152, %s154
      %p158 = scmp.eq.s32.totalorder %s34, 0
      %p159 = por %p157, %p158
      %p160 = scmp.ne.s32.totalorder %s152, %s154
      %p161 = scmp.eq.s32.totalorder %s39, 1
      %p162 = por %p160, %p161
      %p163 = scmp.ne.s32.totalorder %s154, %s155
      %p164 = scmp.eq.s32.totalorder %s39, 0
      %p165 = por %p163, %p164
      %p166 = scmp.ne.s32.totalorder %s154, %s155
      %p167 = scmp.eq.s32.totalorder %s40, 1
      %p168 = por %p166, %p167
      %p170 = scmp.ne.s32.totalorder %s155, %s169
      %p171 = scmp.eq.s32.totalorder %s40, 0
      %p172 = por %p170, %p171
      %s174 = sadd.s32 %s173, 1
      %p177 = scmp.eq.s32.totalorder %s34, 1
      %p178 = scmp.ne.s32.totalorder %s173, %s175
      %p179 = scmp.eq.s32.totalorder %s34, 0
      %p180 = por %p178, %p179
      %p181 = scmp.ne.s32.totalorder %s173, %s175
      %p182 = scmp.eq.s32.totalorder %s39, 1
      %p183 = por %p181, %p182
      %p184 = scmp.ne.s32.totalorder %s175, %s176
      %p185 = scmp.eq.s32.totalorder %s39, 0
      %p186 = por %p184, %p185
      %p187 = scmp.ne.s32.totalorder %s175, %s176
      %p188 = scmp.eq.s32.totalorder %s40, 1
      %p189 = por %p187, %p188
      %p191 = scmp.ne.s32.totalorder %s176, %s190
      %p192 = scmp.eq.s32.totalorder %s40, 0
      %p193 = por %p191, %p192
      %s195 = sadd.s32 %s194, 1
      %p198 = scmp.eq.s32.totalorder %s34, 1
      %p199 = scmp.ne.s32.totalorder %s194, %s196
      %p200 = scmp.eq.s32.totalorder %s34, 0
      %p201 = por %p199, %p200
      %p202 = scmp.ne.s32.totalorder %s194, %s196
      %p203 = scmp.eq.s32.totalorder %s39, 1
      %p204 = por %p202, %p203
      %p205 = scmp.ne.s32.totalorder %s196, %s197
      %p206 = scmp.eq.s32.totalorder %s39, 0
      %p207 = por %p205, %p206
      %p208 = scmp.ne.s32.totalorder %s196, %s197
      %p209 = scmp.eq.s32.totalorder %s40, 1
      %p210 = por %p208, %p209
      %p212 = scmp.ne.s32.totalorder %s197, %s211
      %p213 = scmp.eq.s32.totalorder %s40, 0
      %p214 = por %p212, %p213
      %s216 = sadd.s32 %s215, 1
      %p219 = scmp.eq.s32.totalorder %s34, 1
      %p220 = scmp.ne.s32.totalorder %s215, %s217
      %p221 = scmp.eq.s32.totalorder %s34, 0
      %p222 = por %p220, %p221
      %p223 = scmp.ne.s32.totalorder %s215, %s217
      %p224 = scmp.eq.s32.totalorder %s39, 1
      %p225 = por %p223, %p224
      %p226 = scmp.ne.s32.totalorder %s217, %s218
      %p227 = scmp.eq.s32.totalorder %s39, 0
      %p228 = por %p226, %p227
      %p229 = scmp.ne.s32.totalorder %s217, %s218
      %p230 = scmp.eq.s32.totalorder %s40, 1
      %p231 = por %p229, %p230
      %p233 = scmp.ne.s32.totalorder %s218, %s232
      %p234 = scmp.eq.s32.totalorder %s40, 0
      %p235 = por %p233, %p234
      %s237 = sadd.s32 %s236, 1
      %p240 = scmp.eq.s32.totalorder %s34, 1
      %p241 = scmp.ne.s32.totalorder %s236, %s238
      %p242 = scmp.eq.s32.totalorder %s34, 0
      %p243 = por %p241, %p242
      %p244 = scmp.ne.s32.totalorder %s236, %s238
      %p245 = scmp.eq.s32.totalorder %s39, 1
      %p246 = por %p244, %p245
      %p247 = scmp.ne.s32.totalorder %s238, %s239
      %p248 = scmp.eq.s32.totalorder %s39, 0
      %p249 = por %p247, %p248
      %p250 = scmp.ne.s32.totalorder %s238, %s239
      %p251 = scmp.eq.s32.totalorder %s40, 1
      %p252 = por %p250, %p251
      %p254 = scmp.ne.s32.totalorder %s239, %s253
      %p255 = scmp.eq.s32.totalorder %s40, 0
      %p256 = por %p254, %p255
      %s258 = sadd.s32 %s257, 1
      %p261 = scmp.eq.s32.totalorder %s34, 1
      %p262 = scmp.ne.s32.totalorder %s257, %s259
      %p263 = scmp.eq.s32.totalorder %s34, 0
      %p264 = por %p262, %p263
      %p265 = scmp.ne.s32.totalorder %s257, %s259
      %p266 = scmp.eq.s32.totalorder %s39, 1
      %p267 = por %p265, %p266
      %p268 = scmp.ne.s32.totalorder %s259, %s260
      %p269 = scmp.eq.s32.totalorder %s39, 0
      %p270 = por %p268, %p269
      %p271 = scmp.ne.s32.totalorder %s259, %s260
      %p272 = scmp.eq.s32.totalorder %s40, 1
      %p273 = por %p271, %p272
      %p275 = scmp.ne.s32.totalorder %s260, %s274
      %p276 = scmp.eq.s32.totalorder %s40, 0
      %p277 = por %p275, %p276
      %s279 = sadd.s32 %s278, 1
      %p282 = scmp.eq.s32.totalorder %s34, 1
      %p283 = scmp.ne.s32.totalorder %s278, %s280
      %p284 = scmp.eq.s32.totalorder %s34, 0
      %p285 = por %p283, %p284
      %p286 = scmp.ne.s32.totalorder %s278, %s280
      %p287 = scmp.eq.s32.totalorder %s39, 1
      %p288 = por %p286, %p287
      %p289 = scmp.ne.s32.totalorder %s280, %s281
      %p290 = scmp.eq.s32.totalorder %s39, 0
      %p291 = por %p289, %p290
      %p292 = scmp.ne.s32.totalorder %s280, %s281
      %p293 = scmp.eq.s32.totalorder %s40, 1
      %p294 = por %p292, %p293
      %p296 = scmp.ne.s32.totalorder %s281, %s295
      %p297 = scmp.eq.s32.totalorder %s40, 0
      %p298 = por %p296, %p297
      %s300 = sadd.s32 %s299, 1
      %p303 = scmp.eq.s32.totalorder %s34, 1
      %p304 = scmp.ne.s32.totalorder %s299, %s301
      %p305 = scmp.eq.s32.totalorder %s34, 0
      %p306 = por %p304, %p305
      %p307 = scmp.ne.s32.totalorder %s299, %s301
      %p308 = scmp.eq.s32.totalorder %s39, 1
      %p309 = por %p307, %p308
      %p310 = scmp.ne.s32.totalorder %s301, %s302
      %p311 = scmp.eq.s32.totalorder %s39, 0
      %p312 = por %p310, %p311
      %p313 = scmp.ne.s32.totalorder %s301, %s302
      %p314 = scmp.eq.s32.totalorder %s40, 1
      %p315 = por %p313, %p314
      %p317 = scmp.ne.s32.totalorder %s302, %s316
      %p318 = scmp.eq.s32.totalorder %s40, 0
      %p319 = por %p317, %p318
      %s321 = sadd.s32 %s320, 1
      %p324 = scmp.eq.s32.totalorder %s34, 1
      %p325 = scmp.ne.s32.totalorder %s320, %s322
      %p326 = scmp.eq.s32.totalorder %s34, 0
      %p327 = por %p325, %p326
      %p328 = scmp.ne.s32.totalorder %s320, %s322
      %p329 = scmp.eq.s32.totalorder %s39, 1
      %p330 = por %p328, %p329
      %p331 = scmp.ne.s32.totalorder %s322, %s323
      %p332 = scmp.eq.s32.totalorder %s39, 0
      %p333 = por %p331, %p332
      %p334 = scmp.ne.s32.totalorder %s322, %s323
      %p335 = scmp.eq.s32.totalorder %s40, 1
      %p336 = por %p334, %p335
      %p338 = scmp.ne.s32.totalorder %s323, %s337
      %p339 = scmp.eq.s32.totalorder %s40, 0
      %p340 = por %p338, %p339
      %s342 = sadd.s32 %s341, 1
      %p345 = scmp.eq.s32.totalorder %s34, 1
      %p346 = scmp.ne.s32.totalorder %s341, %s343
      %p347 = scmp.eq.s32.totalorder %s34, 0
      %p348 = por %p346, %p347
      %p349 = scmp.ne.s32.totalorder %s341, %s343
      %p350 = scmp.eq.s32.totalorder %s39, 1
      %p351 = por %p349, %p350
      %p352 = scmp.ne.s32.totalorder %s343, %s344
      %p353 = scmp.eq.s32.totalorder %s39, 0
      %p354 = por %p352, %p353
      %p355 = scmp.ne.s32.totalorder %s343, %s344
      %p356 = scmp.eq.s32.totalorder %s40, 1
      %p357 = por %p355, %p356
      %p359 = scmp.ne.s32.totalorder %s344, %s358
      %p360 = scmp.eq.s32.totalorder %s40, 0
      %p361 = por %p359, %p360
      %s363 = sadd.s32 %s362, 1
      %p366 = scmp.eq.s32.totalorder %s34, 1
      %p367 = scmp.ne.s32.totalorder %s362, %s364
      %p368 = scmp.eq.s32.totalorder %s34, 0
      %p369 = por %p367, %p368
      %p370 = scmp.ne.s32.totalorder %s362, %s364
      %p371 = scmp.eq.s32.totalorder %s39, 1
      %p372 = por %p370, %p371
      %p373 = scmp.ne.s32.totalorder %s364, %s365
      %p374 = scmp.eq.s32.totalorder %s39, 0
      %p375 = por %p373, %p374
      %p376 = scmp.ne.s32.totalorder %s364, %s365
      %p377 = scmp.eq.s32.totalorder %s40, 1
      %p378 = por %p376, %p377
      %p380 = scmp.ne.s32.totalorder %s365, %s379
      %p381 = scmp.eq.s32.totalorder %s40, 0
      %p382 = por %p380, %p381
      %s384 = sadd.s32 %s383, 1
      %p387 = scmp.eq.s32.totalorder %s34, 1
      %p388 = scmp.ne.s32.totalorder %s383, %s385
      %p389 = scmp.eq.s32.totalorder %s34, 0
      %p390 = por %p388, %p389
      %p391 = scmp.ne.s32.totalorder %s383, %s385
      %p392 = scmp.eq.s32.totalorder %s39, 1
      %p393 = por %p391, %p392
      %p394 = scmp.ne.s32.totalorder %s385, %s386
      %p395 = scmp.eq.s32.totalorder %s39, 0
      %p396 = por %p394, %p395
      %p397 = scmp.ne.s32.totalorder %s385, %s386
      %p398 = scmp.eq.s32.totalorder %s40, 1
      %p399 = por %p397, %p398
      %p401 = scmp.ne.s32.totalorder %s386, %s400
      %p402 = scmp.eq.s32.totalorder %s40, 0
      %p403 = por %p401, %p402
      %s405 = sadd.s32 %s404, 1
      %p408 = scmp.eq.s32.totalorder %s34, 1
      %p409 = scmp.ne.s32.totalorder %s404, %s406
      %p410 = scmp.eq.s32.totalorder %s34, 0
      %p411 = por %p409, %p410
      %p412 = scmp.ne.s32.totalorder %s404, %s406
      %p413 = scmp.eq.s32.totalorder %s39, 1
      %p414 = por %p412, %p413
      %p415 = scmp.ne.s32.totalorder %s406, %s407
      %p416 = scmp.eq.s32.totalorder %s39, 0
      %p417 = por %p415, %p416
      %p418 = scmp.ne.s32.totalorder %s406, %s407
      %p419 = scmp.eq.s32.totalorder %s40, 1
      %p420 = por %p418, %p419
      %p422 = scmp.ne.s32.totalorder %s407, %s421
      %p423 = scmp.eq.s32.totalorder %s40, 0
      %p424 = por %p422, %p423
      %s425 = ssub.s32 %s34, %s41
      %p426 = scmp.eq.s32.totalorder %s425, 0
      %s428 = sadd.s32 %s427, 1
      %s429 = scalar_select %p426, %s427, %s428
      %p432 = pneg %p426
      %p433 = scmp.eq.s32.totalorder %s34, 1
      %p434 = por %p432, %p433
      %p435 = scmp.ne.s32.totalorder %s427, %s430
      %p436 = scmp.eq.s32.totalorder %s34, 0
      %p437 = por %p435, %p436
      %p438 = scmp.ne.s32.totalorder %s427, %s430
      %p439 = scmp.eq.s32.totalorder %s39, 1
      %p440 = por %p438, %p439
      %p441 = scmp.ne.s32.totalorder %s430, %s431
      %p442 = scmp.eq.s32.totalorder %s39, 0
      %p443 = por %p441, %p442
      %p444 = scmp.ne.s32.totalorder %s430, %s431
      %p445 = scmp.eq.s32.totalorder %s40, 1
      %p446 = por %p444, %p445
      %p448 = scmp.ne.s32.totalorder %s431, %s447
      %p449 = scmp.eq.s32.totalorder %s40, 0
      %p450 = por %p448, %p449
      %p451 = scmp.le.s32.totalorder 1, %s34
      %p452 = scmp.lt.s32.totalorder %s34, 3
      %p453 = pnand %p451, %p452
      %p454 = pneg %p453
      // Predicated region
      $region9: #{forward.1} parent=5 // pred_check
        _
      $region10: #{forward.1} parent=5 // pred_check_branch
        %456 = sbr.rel (%p453) target = $region12
      $region11: #{forward.1} parent=5 // pred_region
        %s457 = ssub.s32 %s34, 1
        // Predicated region
        $region13: #{forward.1} parent=11 // pred_check
          %p458 = pneg %p81
        $region14: #{forward.1} parent=11 // pred_check_branch
          %460 = sbr.rel (%p458) target = $region16
        $region15: #{forward.1} parent=11 // pred_region
          _
        $region16: #{forward.1} parent=11 // pred_fallthru
          _
        // Predicated region
        $region17: #{forward.1} parent=11 // pred_check
          %p461 = pneg %p102
        $region18: #{forward.1} parent=11 // pred_check_branch
          %463 = sbr.rel (%p461) target = $region20
        $region19: #{forward.1} parent=11 // pred_region
          _
        $region20: #{forward.1} parent=11 // pred_fallthru
          _
        // Predicated region
        $region21: #{forward.1} parent=11 // pred_check
          %p464 = pneg %p123
        $region22: #{forward.1} parent=11 // pred_check_branch
          %466 = sbr.rel (%p464) target = $region24
        $region23: #{forward.1} parent=11 // pred_region
          _
        $region24: #{forward.1} parent=11 // pred_fallthru
          _
        // Predicated region
        $region25: #{forward.1} parent=11 // pred_check
          %p467 = pneg %p144
        $region26: #{forward.1} parent=11 // pred_check_branch
          %469 = sbr.rel (%p467) target = $region28
        $region27: #{forward.1} parent=11 // pred_region
          _
        $region28: #{forward.1} parent=11 // pred_fallthru
          _
        // Predicated region
        $region29: #{forward.1} parent=11 // pred_check
          %p470 = pneg %p165
        $region30: #{forward.1} parent=11 // pred_check_branch
          %472 = sbr.rel (%p470) target = $region32
        $region31: #{forward.1} parent=11 // pred_region
          _
        $region32: #{forward.1} parent=11 // pred_fallthru
          _
        // Predicated region
        $region33: #{forward.1} parent=11 // pred_check
          %p473 = pneg %p186
        $region34: #{forward.1} parent=11 // pred_check_branch
          %475 = sbr.rel (%p473) target = $region36
        $region35: #{forward.1} parent=11 // pred_region
          _
        $region36: #{forward.1} parent=11 // pred_fallthru
          _
        // Predicated region
        $region37: #{forward.1} parent=11 // pred_check
          %p476 = pneg %p207
        $region38: #{forward.1} parent=11 // pred_check_branch
          %478 = sbr.rel (%p476) target = $region40
        $region39: #{forward.1} parent=11 // pred_region
          _
        $region40: #{forward.1} parent=11 // pred_fallthru
          _
        // Predicated region
        $region41: #{forward.1} parent=11 // pred_check
          %p479 = pneg %p228
        $region42: #{forward.1} parent=11 // pred_check_branch
          %481 = sbr.rel (%p479) target = $region44
        $region43: #{forward.1} parent=11 // pred_region
          _
        $region44: #{forward.1} parent=11 // pred_fallthru
          _
        // Predicated region
        $region45: #{forward.1} parent=11 // pred_check
          %p482 = pneg %p249
        $region46: #{forward.1} parent=11 // pred_check_branch
          %484 = sbr.rel (%p482) target = $region48
        $region47: #{forward.1} parent=11 // pred_region
          _
        $region48: #{forward.1} parent=11 // pred_fallthru
          _
        // Predicated region
        $region49: #{forward.1} parent=11 // pred_check
          %p485 = pneg %p270
        $region50: #{forward.1} parent=11 // pred_check_branch
          %487 = sbr.rel (%p485) target = $region52
        $region51: #{forward.1} parent=11 // pred_region
          _
        $region52: #{forward.1} parent=11 // pred_fallthru
          _
        // Predicated region
        $region53: #{forward.1} parent=11 // pred_check
          %p488 = pneg %p291
        $region54: #{forward.1} parent=11 // pred_check_branch
          %490 = sbr.rel (%p488) target = $region56
        $region55: #{forward.1} parent=11 // pred_region
          _
        $region56: #{forward.1} parent=11 // pred_fallthru
          _
        // Predicated region
        $region57: #{forward.1} parent=11 // pred_check
          %p491 = pneg %p312
        $region58: #{forward.1} parent=11 // pred_check_branch
          %493 = sbr.rel (%p491) target = $region60
        $region59: #{forward.1} parent=11 // pred_region
          _
        $region60: #{forward.1} parent=11 // pred_fallthru
          _
        // Predicated region
        $region61: #{forward.1} parent=11 // pred_check
          %p494 = pneg %p333
        $region62: #{forward.1} parent=11 // pred_check_branch
          %496 = sbr.rel (%p494) target = $region64
        $region63: #{forward.1} parent=11 // pred_region
          _
        $region64: #{forward.1} parent=11 // pred_fallthru
          _
        // Predicated region
        $region65: #{forward.1} parent=11 // pred_check
          %p497 = pneg %p354
        $region66: #{forward.1} parent=11 // pred_check_branch
          %499 = sbr.rel (%p497) target = $region68
        $region67: #{forward.1} parent=11 // pred_region
          _
        $region68: #{forward.1} parent=11 // pred_fallthru
          _
        // Predicated region
        $region69: #{forward.1} parent=11 // pred_check
          %p500 = pneg %p375
        $region70: #{forward.1} parent=11 // pred_check_branch
          %502 = sbr.rel (%p500) target = $region72
        $region71: #{forward.1} parent=11 // pred_region
          _
        $region72: #{forward.1} parent=11 // pred_fallthru
          _
        // Predicated region
        $region73: #{forward.1} parent=11 // pred_check
          %p503 = pneg %p396
        $region74: #{forward.1} parent=11 // pred_check_branch
          %505 = sbr.rel (%p503) target = $region76
        $region75: #{forward.1} parent=11 // pred_region
          _
        $region76: #{forward.1} parent=11 // pred_fallthru
          _
        // Predicated region
        $region77: #{forward.1} parent=11 // pred_check
          %p506 = pneg %p417
        $region78: #{forward.1} parent=11 // pred_check_branch
          %508 = sbr.rel (%p506) target = $region80
        $region79: #{forward.1} parent=11 // pred_region
          _
        $region80: #{forward.1} parent=11 // pred_fallthru
          _
      $region12: #{forward.1} parent=5 // pred_fallthru
        _
      %p509 = scmp.lt.s32.totalorder %s34, 2
      // Predicated region
      $region81: #{forward.1} parent=5 // pred_check
        %p510 = pneg %p509
      $region82: #{forward.1} parent=5 // pred_check_branch
        %512 = sbr.rel (%p510) target = $region84
      $region83: #{forward.1} parent=5 // pred_region
        // Predicated region
        $region85: #{forward.1} parent=83 // pred_check
          %p513 = pneg %p54
        $region86: #{forward.1} parent=83 // pred_check_branch
          %515 = sbr.rel (%p513) target = $region88
        $region87: #{forward.1} parent=83 // pred_region
          %p516 = scmp.lt.s32.totalorder %s34, 1
          %s517 = scalar_select %p516, %s34, 1
          %s518 = smul.addr %s517, 8
          %s519 = scalar_lea.vmem %s1, %s518
        $region88: #{forward.1} parent=83 // pred_fallthru
          _
      $region84: #{forward.1} parent=5 // pred_fallthru
        _
      %p520 = scmp.le.s32.totalorder 1, %s34
      %p521 = scmp.lt.s32.totalorder %s34, 3
      %p522 = pnand %p520, %p521
      %p523 = pneg %p522
      // Predicated region
      $region89: #{forward.1} parent=5 // pred_check
        _
      $region90: #{forward.1} parent=5 // pred_check_branch
        %525 = sbr.rel (%p522) target = $region92
      $region91: #{forward.1} parent=5 // pred_region
        %s526 = ssub.s32 %s34, 1
        %p527 = scmp.lt.s32.totalorder %s39, 1
        %s528 = scalar_select %p527, %s39, 1
        %s529 = smul.addr %s528, 8
        %s530 = scalar_lea.vmem %s1, %s529
        %p531 = pneg %p60
        %p532 = pneg %p57
        %p533 = pneg %p81
        %p534 = pneg %p78
        %p535 = pneg %p102
        %p536 = pneg %p99
        %p537 = pneg %p123
        %p538 = pneg %p120
        %p539 = pneg %p144
        %p540 = pneg %p141
        %p541 = pneg %p165
        %p542 = pneg %p162
        %p543 = pneg %p186
        %p544 = pneg %p183
        %p545 = pneg %p207
        %p546 = pneg %p204
        %p547 = pneg %p228
        %p548 = pneg %p225
        %p549 = pneg %p249
        %p550 = pneg %p246
        %p551 = pneg %p270
        %p552 = pneg %p267
        %p553 = pneg %p291
        %p554 = pneg %p288
        %p555 = pneg %p312
        %p556 = pneg %p309
        %p557 = pneg %p333
        %p558 = pneg %p330
        %p559 = pneg %p354
        %p560 = pneg %p351
        %p561 = pneg %p375
        %p562 = pneg %p372
        %p563 = pneg %p396
        %p564 = pneg %p393
        %p565 = pneg %p417
        %p566 = pneg %p414
        %p567 = pneg %p443
        %p568 = pneg %p440
        %s569 = sand.u32 %s430, 1
        %s570 = scalar_lea.sflag [#allocation9], %s569
        %s571 = sand.u32 %s430, 1
        %s572 = scalar_lea.vmem [#allocation8], %s571
        %p573 = scmp.lt.s32.totalorder %s39, 1
        %s574 = scalar_select %p573, %s39, 1
        %s575 = smul.addr %s574, 8
        %s576 = scalar_lea.vmem %s1, %s575
        %s577 = sld [smem:[#allocation7 + %s39]]
        %v578 = vld [vmem:[%s576] sm:$0xff]
        %v579 = vld [vmem:[%s3] sm:$0xff]
        %v580 = vld [vmem:[%s3 + $0x8] sm:$0xff]
        %v581 = vld [vmem:[%s3 + $0x10] sm:$0xff]
        %v582 = vld [vmem:[%s3 + $0x18] sm:$0xff]
        %v583 = vld [vmem:[%s5] sm:$0x1]
        %v585 = vlaneseq
        %v586 = vshrl.u32 %v585, 7
        %v587 = vsub.s32 0, %v586
        %v588 = vrot.slane %v583, %v587
        %vm590 = vcmask 261120
        %v592 = vsel %vm590, %v578, 0
        %594 = vmatprep.subr.mxu0 0.0
        %595 = vmatpush1.msra.mxu0 %v579
        %596 = vmatprep.subr.mxu0 0.0
        %597 = vmatpush1.msra.mxu0 %v580
        %598 = vmatprep.subr.mxu0 0.0
        %599 = vmatpush1.msra.mxu0 %v581
        %600 = vmatprep.subr.mxu0 0.0
        %601 = vmatpush1.msra.mxu0 %v582
        %602 = vmatprep.subr.mxu0 0.0
        %603 = vmatpush1.msra.mxu0 0.0
        %604 = vmatprep.subr.mxu0 0.0
        %605 = vmatpush1.msra.mxu0 0.0
        %606 = vmatprep.subr.mxu0 0.0
        %607 = vmatpush1.msra.mxu0 0.0
        %608 = vmatprep.subr.mxu0 0.0
        %609 = vmatpush1.msra.mxu0 0.0
        %610 = vmatprep.subr.mxu0 0.0
        %611 = vmatpush1.msra.mxu0 0.0
        %612 = vmatprep.subr.mxu0 0.0
        %613 = vmatpush1.msra.mxu0 0.0
        %614 = vmatprep.subr.mxu0 0.0
        %615 = vmatpush1.msra.mxu0 0.0
        %616 = vmatprep.subr.mxu0 0.0
        %617 = vmatpush1.msra.mxu0 0.0
        %618 = vmatprep.subr.mxu0 0.0
        %619 = vmatpush1.msra.mxu0 0.0
        %620 = vmatprep.subr.mxu0 0.0
        %621 = vmatpush1.msra.mxu0 0.0
        %622 = vmatprep.subr.mxu0 0.0
        %623 = vmatpush1.msra.mxu0 0.0
        %624 = vmatprep.subr.mxu0 0.0
        %625 = vmatpush1.msra.mxu0 0.0
        %626 = vmatprep.subr.mxu0 0.0
        %627 = vmatpush1.msra.mxu0 0.0
        %628 = vmatprep.subr.mxu0 0.0
        %629 = vmatpush1.msra.mxu0 0.0
        %630 = vmatprep.subr.mxu0 0.0
        %631 = vmatpush1.msra.mxu0 0.0
        %632 = vmatprep.subr.mxu0 0.0
        %633 = vmatpush1.msra.mxu0 0.0
        %634 = vmatprep.subr.mxu0 0.0
        %635 = vmatpush1.msra.mxu0 0.0
        %636 = vmatprep.subr.mxu0 0.0
        %637 = vmatpush1.msra.mxu0 0.0
        %638 = vmatprep.subr.mxu0 0.0
        %639 = vmatpush1.msra.mxu0 0.0
        %640 = vmatprep.subr.mxu0 0.0
        %641 = vmatpush1.msra.mxu0 0.0
        %642 = vmatprep.subr.mxu0 0.0
        %643 = vmatpush1.msra.mxu0 0.0
        %644 = vmatprep.subr.mxu0 0.0
        %645 = vmatpush1.msra.mxu0 0.0
        %646 = vmatprep.subr.mxu0 0.0
        %647 = vmatpush1.msra.mxu0 0.0
        %648 = vmatprep.subr.mxu0 0.0
        %649 = vmatpush1.msra.mxu0 0.0
        %650 = vmatprep.subr.mxu0 0.0
        %651 = vmatpush1.msra.mxu0 0.0
        %652 = vmatprep.subr.mxu0 0.0
        %653 = vmatpush1.msra.mxu0 0.0
        %654 = vmatprep.subr.mxu0 0.0
        %655 = vmatpush1.msra.mxu0 0.0
        %656 = vmatprep.subr.mxu0 0.0
        %657 = vmatpush1.msra.mxu0 0.0
        %658 = vmatprep.mubr.f32.mxu0 0.0
        %659 = vmatmul.mubr.f32.gmra.mrb[0].mxu0 %v592
        %v660 = vpop.f32.mrb[0].mxu0
        %v661 = vadd.f32 %v588, %v660
        %v662 = vpop.f32.mrb[0].mxu0
        %663 = vdwg.mxu0
        %664 = vst [vmem:[#allocation2] sm:$0xff] %v661
        %v665 = vld [vmem:[%s6] sm:$0xff]
        %v666 = vld [vmem:[%s6 + $0x8] sm:$0xff]
        %v667 = vld [vmem:[%s6 + $0x10] sm:$0xff]
        %v668 = vld [vmem:[%s6 + $0x18] sm:$0xff]
        %v669 = vld [vmem:[%s8] sm:$0x1]
        %v671 = vlaneseq
        %v672 = vshrl.u32 %v671, 7
        %v673 = vsub.s32 0, %v672
        %v674 = vrot.slane %v669, %v673
        %676 = vmatprep.subr.mxu0 0.0
        %677 = vmatpush1.msra.mxu0 %v665
        %678 = vmatprep.subr.mxu0 0.0
        %679 = vmatpush1.msra.mxu0 %v666
        %680 = vmatprep.subr.mxu0 0.0
        %681 = vmatpush1.msra.mxu0 %v667
        %682 = vmatprep.subr.mxu0 0.0
        %683 = vmatpush1.msra.mxu0 %v668
        %684 = vmatprep.subr.mxu0 0.0
        %685 = vmatpush1.msra.mxu0 0.0
        %686 = vmatprep.subr.mxu0 0.0
        %687 = vmatpush1.msra.mxu0 0.0
        %688 = vmatprep.subr.mxu0 0.0
        %689 = vmatpush1.msra.mxu0 0.0
        %690 = vmatprep.subr.mxu0 0.0
        %691 = vmatpush1.msra.mxu0 0.0
        %692 = vmatprep.subr.mxu0 0.0
        %693 = vmatpush1.msra.mxu0 0.0
        %694 = vmatprep.subr.mxu0 0.0
        %695 = vmatpush1.msra.mxu0 0.0
        %696 = vmatprep.subr.mxu0 0.0
        %697 = vmatpush1.msra.mxu0 0.0
        %698 = vmatprep.subr.mxu0 0.0
        %699 = vmatpush1.msra.mxu0 0.0
        %700 = vmatprep.subr.mxu0 0.0
        %701 = vmatpush1.msra.mxu0 0.0
        %702 = vmatprep.subr.mxu0 0.0
        %703 = vmatpush1.msra.mxu0 0.0
        %704 = vmatprep.subr.mxu0 0.0
        %705 = vmatpush1.msra.mxu0 0.0
        %706 = vmatprep.subr.mxu0 0.0
        %707 = vmatpush1.msra.mxu0 0.0
        %708 = vmatprep.subr.mxu0 0.0
        %709 = vmatpush1.msra.mxu0 0.0
        %710 = vmatprep.subr.mxu0 0.0
        %711 = vmatpush1.msra.mxu0 0.0
        %712 = vmatprep.subr.mxu0 0.0
        %713 = vmatpush1.msra.mxu0 0.0
        %714 = vmatprep.subr.mxu0 0.0
        %715 = vmatpush1.msra.mxu0 0.0
        %716 = vmatprep.subr.mxu0 0.0
        %717 = vmatpush1.msra.mxu0 0.0
        %718 = vmatprep.subr.mxu0 0.0
        %719 = vmatpush1.msra.mxu0 0.0
        %720 = vmatprep.subr.mxu0 0.0
        %721 = vmatpush1.msra.mxu0 0.0
        %722 = vmatprep.subr.mxu0 0.0
        %723 = vmatpush1.msra.mxu0 0.0
        %724 = vmatprep.subr.mxu0 0.0
        %725 = vmatpush1.msra.mxu0 0.0
        %726 = vmatprep.subr.mxu0 0.0
        %727 = vmatpush1.msra.mxu0 0.0
        %728 = vmatprep.subr.mxu0 0.0
        %729 = vmatpush1.msra.mxu0 0.0
        %730 = vmatprep.subr.mxu0 0.0
        %731 = vmatpush1.msra.mxu0 0.0
        %732 = vmatprep.subr.mxu0 0.0
        %733 = vmatpush1.msra.mxu0 0.0
        %734 = vmatprep.subr.mxu0 0.0
        %735 = vmatpush1.msra.mxu0 0.0
        %736 = vmatprep.subr.mxu0 0.0
        %737 = vmatpush1.msra.mxu0 0.0
        %738 = vmatprep.subr.mxu0 0.0
        %739 = vmatpush1.msra.mxu0 0.0
        %740 = vmatprep.mubr.f32.mxu0 0.0
        %741 = vmatmul.mubr.f32.gmra.mrb[0].mxu0 %v592
        %v742 = vpop.f32.mrb[0].mxu0
        %v743 = vadd.f32 %v674, %v742
        %v744 = vpop.f32.mrb[0].mxu0
        %745 = vdwg.mxu0
        %746 = vst [vmem:[#allocation3] sm:$0xff] %v743
        %v747 = vld [vmem:[%s4] sm:$0xff]
        %v748 = vld [vmem:[%s4 + $0x8] sm:$0xff]
        %v749 = vld [vmem:[%s4 + $0x10] sm:$0xff]
        %v750 = vld [vmem:[%s4 + $0x18] sm:$0xff]
        %v751 = vld [vmem:[%s7] sm:$0xff]
        %v752 = vld [vmem:[%s7 + $0x8] sm:$0xff]
        %v753 = vld [vmem:[%s7 + $0x10] sm:$0xff]
        %v754 = vld [vmem:[%s7 + $0x18] sm:$0xff]
        %v755 = vld [vmem:[#allocation2] sm:$0x1]
        %v757 = vsel %vm590, 0.0, 0
        %759 = vmatprep.subr.mxu0 0.0
        %760 = vmatpush1.msra.mxu0 %v747
        %761 = vmatprep.subr.mxu0 0.0
        %762 = vmatpush1.msra.mxu0 %v748
        %763 = vmatprep.subr.mxu0 0.0
        %764 = vmatpush1.msra.mxu0 %v749
        %765 = vmatprep.subr.mxu0 0.0
        %766 = vmatpush1.msra.mxu0 %v750
        %767 = vmatprep.subr.mxu0 0.0
        %768 = vmatpush1.msra.mxu0 0.0
        %769 = vmatprep.subr.mxu0 0.0
        %770 = vmatpush1.msra.mxu0 0.0
        %771 = vmatprep.subr.mxu0 0.0
        %772 = vmatpush1.msra.mxu0 0.0
        %773 = vmatprep.subr.mxu0 0.0
        %774 = vmatpush1.msra.mxu0 0.0
        %775 = vmatprep.subr.mxu0 0.0
        %776 = vmatpush1.msra.mxu0 0.0
        %777 = vmatprep.subr.mxu0 0.0
        %778 = vmatpush1.msra.mxu0 0.0
        %779 = vmatprep.subr.mxu0 0.0
        %780 = vmatpush1.msra.mxu0 0.0
        %781 = vmatprep.subr.mxu0 0.0
        %782 = vmatpush1.msra.mxu0 0.0
        %783 = vmatprep.subr.mxu0 0.0
        %784 = vmatpush1.msra.mxu0 0.0
        %785 = vmatprep.subr.mxu0 0.0
        %786 = vmatpush1.msra.mxu0 0.0
        %787 = vmatprep.subr.mxu0 0.0
        %788 = vmatpush1.msra.mxu0 0.0
        %789 = vmatprep.subr.mxu0 0.0
        %790 = vmatpush1.msra.mxu0 0.0
        %791 = vmatprep.subr.mxu0 0.0
        %792 = vmatpush1.msra.mxu0 0.0
        %793 = vmatprep.subr.mxu0 0.0
        %794 = vmatpush1.msra.mxu0 0.0
        %795 = vmatprep.subr.mxu0 0.0
        %796 = vmatpush1.msra.mxu0 0.0
        %797 = vmatprep.subr.mxu0 0.0
        %798 = vmatpush1.msra.mxu0 0.0
        %799 = vmatprep.subr.mxu0 0.0
        %800 = vmatpush1.msra.mxu0 0.0
        %801 = vmatprep.subr.mxu0 0.0
        %802 = vmatpush1.msra.mxu0 0.0
        %803 = vmatprep.subr.mxu0 0.0
        %804 = vmatpush1.msra.mxu0 0.0
        %805 = vmatprep.subr.mxu0 0.0
        %806 = vmatpush1.msra.mxu0 0.0
        %807 = vmatprep.subr.mxu0 0.0
        %808 = vmatpush1.msra.mxu0 0.0
        %809 = vmatprep.subr.mxu0 0.0
        %810 = vmatpush1.msra.mxu0 0.0
        %811 = vmatprep.subr.mxu0 0.0
        %812 = vmatpush1.msra.mxu0 0.0
        %813 = vmatprep.subr.mxu0 0.0
        %814 = vmatpush1.msra.mxu0 0.0
        %815 = vmatprep.subr.mxu0 0.0
        %816 = vmatpush1.msra.mxu0 0.0
        %817 = vmatprep.subr.mxu0 0.0
        %818 = vmatpush1.msra.mxu0 0.0
        %819 = vmatprep.subr.mxu0 0.0
        %820 = vmatpush1.msra.mxu0 0.0
        %821 = vmatprep.subr.mxu0 0.0
        %822 = vmatpush1.msra.mxu0 0.0
        %823 = vmatprep.mubr.f32.mxu0 0.0
        %824 = vmatmul.mubr.f32.gmra.mrb[0].mxu0 %v757
        %v825 = vpop.f32.mrb[0].mxu0
        %v826 = vadd.f32 0.0, %v825
        %v827 = vpop.f32.mrb[0].mxu0
        %828 = vdwg.mxu0
        %v829 = vadd.f32 %v755, %v826
        %v830 = vmul.f32 %v829, 0.5
        %v831 = vtanh.pop %v830
        %v832 = vadd.f32 %v831, 1.0
        %v833 = vmul.f32 %v832, 0.5
        %v834 = vtanh.pop %v829
        %v835 = vmul.f32 %v833, 0.0
        %837 = vrot.lane.b32.xlu0 %v834, 32
        %v838 = vpop.permute.xlu0 %837
        %v840 = vmul.f32 %v833, %v838
        %842 = vrot.lane.b32.xlu0 %v840, 32
        %v843 = vpop.permute.xlu0 %842
        %v845 = vadd.f32 %v835, %v843
        %v846 = vtanh.pop %v845
        %848 = vrot.lane.b32.xlu0 %v846, 32
        %v849 = vpop.permute.xlu0 %848
        %v851 = vmul.f32 %v833, %v849
        %p852 = scmp.gt.s32.totalorder %s577, 0
        %s853 = scalar_select %p852, 1, 0
        %v854 = vstv %s853
        %vm855 = vcmp.eq.s32.totalorder %v854, 1
        %v856 = vsel %vm855, %v851, 0.0
        %858 = vrot.lane.b32.xlu0 %v856, 64
        %v859 = vpop.permute.xlu0 %858
        %vm861 = vcmask 253952
        %862 = vst.msk [vmem:[#allocation4] sm:$0x1] %vm861, %v859
        %v863 = vsel %vm855, %v845, 0.0
        %v864 = vld [vmem:[#allocation3 + $0x7] sm:$0x1]
        %865 = vmatprep.subr.mxu0 0.0
        %866 = vmatpush1.msra.mxu0 %v751
        %867 = vmatprep.subr.mxu0 0.0
        %868 = vmatpush1.msra.mxu0 %v752
        %869 = vmatprep.subr.mxu0 0.0
        %870 = vmatpush1.msra.mxu0 %v753
        %871 = vmatprep.subr.mxu0 0.0
        %872 = vmatpush1.msra.mxu0 %v754
        %873 = vmatprep.subr.mxu0 0.0
        %874 = vmatpush1.msra.mxu0 0.0
        %875 = vmatprep.subr.mxu0 0.0
        %876 = vmatpush1.msra.mxu0 0.0
        %877 = vmatprep.subr.mxu0 0.0
        %878 = vmatpush1.msra.mxu0 0.0
        %879 = vmatprep.subr.mxu0 0.0
        %880 = vmatpush1.msra.mxu0 0.0
        %881 = vmatprep.subr.mxu0 0.0
        %882 = vmatpush1.msra.mxu0 0.0
        %883 = vmatprep.subr.mxu0 0.0
        %884 = vmatpush1.msra.mxu0 0.0
        %885 = vmatprep.subr.mxu0 0.0
        %886 = vmatpush1.msra.mxu0 0.0
        %887 = vmatprep.subr.mxu0 0.0
        %888 = vmatpush1.msra.mxu0 0.0
        %889 = vmatprep.subr.mxu0 0.0
        %890 = vmatpush1.msra.mxu0 0.0
        %891 = vmatprep.subr.mxu0 0.0
        %892 = vmatpush1.msra.mxu0 0.0
        %893 = vmatprep.subr.mxu0 0.0
        %894 = vmatpush1.msra.mxu0 0.0
        %895 = vmatprep.subr.mxu0 0.0
        %896 = vmatpush1.msra.mxu0 0.0
        %897 = vmatprep.subr.mxu0 0.0
        %898 = vmatpush1.msra.mxu0 0.0
        %899 = vmatprep.subr.mxu0 0.0
        %900 = vmatpush1.msra.mxu0 0.0
        %901 = vmatprep.subr.mxu0 0.0
        %902 = vmatpush1.msra.mxu0 0.0
        %903 = vmatprep.subr.mxu0 0.0
        %904 = vmatpush1.msra.mxu0 0.0
        %905 = vmatprep.subr.mxu0 0.0
        %906 = vmatpush1.msra.mxu0 0.0
        %907 = vmatprep.subr.mxu0 0.0
        %908 = vmatpush1.msra.mxu0 0.0
        %909 = vmatprep.subr.mxu0 0.0
        %910 = vmatpush1.msra.mxu0 0.0
        %911 = vmatprep.subr.mxu0 0.0
        %912 = vmatpush1.msra.mxu0 0.0
        %913 = vmatprep.subr.mxu0 0.0
        %914 = vmatpush1.msra.mxu0 0.0
        %915 = vmatprep.subr.mxu0 0.0
        %916 = vmatpush1.msra.mxu0 0.0
        %917 = vmatprep.subr.mxu0 0.0
        %918 = vmatpush1.msra.mxu0 0.0
        %919 = vmatprep.subr.mxu0 0.0
        %920 = vmatpush1.msra.mxu0 0.0
        %921 = vmatprep.subr.mxu0 0.0
        %922 = vmatpush1.msra.mxu0 0.0
        %923 = vmatprep.subr.mxu0 0.0
        %924 = vmatpush1.msra.mxu0 0.0
        %925 = vmatprep.subr.mxu0 0.0
        %926 = vmatpush1.msra.mxu0 0.0
        %927 = vmatprep.subr.mxu0 0.0
        %928 = vmatpush1.msra.mxu0 0.0
        %929 = vmatprep.mubr.f32.mxu0 0.0
        %930 = vmatmul.mubr.f32.gmra.mrb[0].mxu0 %v757
        %v931 = vpop.f32.mrb[0].mxu0
        %v932 = vadd.f32 0.0, %v931
        %v933 = vpop.f32.mrb[0].mxu0
        %934 = vdwg.mxu0
        %v935 = vadd.f32 %v864, %v932
        %v936 = vmul.f32 %v935, 0.5
        %v937 = vtanh.pop %v936
        %v938 = vadd.f32 %v937, 1.0
        %v939 = vmul.f32 %v938, 0.5
        %v940 = vtanh.pop %v935
        %v941 = vmul.f32 %v939, 0.0
        %943 = vrot.lane.b32.xlu0 %v940, 32
        %v944 = vpop.permute.xlu0 %943
        %v946 = vmul.f32 %v939, %v944
        %948 = vrot.lane.b32.xlu0 %v946, 32
        %v949 = vpop.permute.xlu0 %948
        %v951 = vadd.f32 %v941, %v949
        %v952 = vtanh.pop %v951
        %954 = vrot.lane.b32.xlu0 %v952, 32
        %v955 = vpop.permute.xlu0 %954
        %v957 = vmul.f32 %v939, %v955
        %p958 = scmp.gt.s32.totalorder %s577, 7
        %s959 = scalar_select %p958, 1, 0
        %v960 = vstv %s959
        %vm961 = vcmp.eq.s32.totalorder %v960, 1
        %v962 = vsel %vm961, %v957, 0.0
        %964 = vrot.lane.b32.xlu0 %v962, 64
        %v965 = vpop.permute.xlu0 %964
        %967 = vst.msk [vmem:[#allocation5 + $0x7] sm:$0x1] %vm861, %v965
        %v968 = vsel %vm961, %v951, 0.0
        %v969 = vld [vmem:[#allocation2 + $0x1] sm:$0x1]
        %v970 = vsel %vm590, %v859, 0
        %972 = vmatprep.subr.mxu0 0.0
        %973 = vmatpush1.msra.mxu0 %v747
        %974 = vmatprep.subr.mxu0 0.0
        %975 = vmatpush1.msra.mxu0 %v748
        %976 = vmatprep.subr.mxu0 0.0
        %977 = vmatpush1.msra.mxu0 %v749
        %978 = vmatprep.subr.mxu0 0.0
        %979 = vmatpush1.msra.mxu0 %v750
        %980 = vmatprep.subr.mxu0 0.0
        %981 = vmatpush1.msra.mxu0 0.0
        %982 = vmatprep.subr.mxu0 0.0
        %983 = vmatpush1.msra.mxu0 0.0
        %984 = vmatprep.subr.mxu0 0.0
        %985 = vmatpush1.msra.mxu0 0.0
        %986 = vmatprep.subr.mxu0 0.0
        %987 = vmatpush1.msra.mxu0 0.0
        %988 = vmatprep.subr.mxu0 0.0
        %989 = vmatpush1.msra.mxu0 0.0
        %990 = vmatprep.subr.mxu0 0.0
        %991 = vmatpush1.msra.mxu0 0.0
        %992 = vmatprep.subr.mxu0 0.0
        %993 = vmatpush1.msra.mxu0 0.0
        %994 = vmatprep.subr.mxu0 0.0
        %995 = vmatpush1.msra.mxu0 0.0
        %996 = vmatprep.subr.mxu0 0.0
        %997 = vmatpush1.msra.mxu0 0.0
        %998 = vmatprep.subr.mxu0 0.0
        %999 = vmatpush1.msra.mxu0 0.0
        %1000 = vmatprep.subr.mxu0 0.0
        %1001 = vmatpush1.msra.mxu0 0.0
        %1002 = vmatprep.subr.mxu0 0.0
        %1003 = vmatpush1.msra.mxu0 0.0
        %1004 = vmatprep.subr.mxu0 0.0
        %1005 = vmatpush1.msra.mxu0 0.0
        %1006 = vmatprep.subr.mxu0 0.0
        %1007 = vmatpush1.msra.mxu0 0.0
        %1008 = vmatprep.subr.mxu0 0.0
        %1009 = vmatpush1.msra.mxu0 0.0
        %1010 = vmatprep.subr.mxu0 0.0
        %1011 = vmatpush1.msra.mxu0 0.0
        %1012 = vmatprep.subr.mxu0 0.0
        %1013 = vmatpush1.msra.mxu0 0.0
        %1014 = vmatprep.subr.mxu0 0.0
        %1015 = vmatpush1.msra.mxu0 0.0
        %1016 = vmatprep.subr.mxu0 0.0
        %1017 = vmatpush1.msra.mxu0 0.0
        %1018 = vmatprep.subr.mxu0 0.0
        %1019 = vmatpush1.msra.mxu0 0.0
        %1020 = vmatprep.subr.mxu0 0.0
        %1021 = vmatpush1.msra.mxu0 0.0
        %1022 = vmatprep.subr.mxu0 0.0
        %1023 = vmatpush1.msra.mxu0 0.0
        %1024 = vmatprep.subr.mxu0 0.0
        %1025 = vmatpush1.msra.mxu0 0.0
        %1026 = vmatprep.subr.mxu0 0.0
        %1027 = vmatpush1.msra.mxu0 0.0
        %1028 = vmatprep.subr.mxu0 0.0
        %1029 = vmatpush1.msra.mxu0 0.0
        %1030 = vmatprep.subr.mxu0 0.0
        %1031 = vmatpush1.msra.mxu0 0.0
        %1032 = vmatprep.subr.mxu0 0.0
        %1033 = vmatpush1.msra.mxu0 0.0
        %1034 = vmatprep.subr.mxu0 0.0
        %1035 = vmatpush1.msra.mxu0 0.0
        %1036 = vmatprep.mubr.f32.mxu0 0.0
        %1037 = vmatmul.mubr.f32.gmra.mrb[0].mxu0 %v970
        %v1038 = vpop.f32.mrb[0].mxu0
        %v1039 = vadd.f32 0.0, %v1038
        %v1040 = vpop.f32.mrb[0].mxu0
        %1041 = vdwg.mxu0
        %v1042 = vadd.f32 %v969, %v1039
        %v1043 = vmul.f32 %v1042, 0.5
        %v1044 = vtanh.pop %v1043
        %v1045 = vadd.f32 %v1044, 1.0
        %v1046 = vmul.f32 %v1045, 0.5
        %v1047 = vtanh.pop %v1042
        %v1048 = vmul.f32 %v1046, %v863
        %1050 = vrot.lane.b32.xlu0 %v1047, 32
        %v1051 = vpop.permute.xlu0 %1050
        %v1053 = vmul.f32 %v1046, %v1051
        %1055 = vrot.lane.b32.xlu0 %v1053, 32
        %v1056 = vpop.permute.xlu0 %1055
        %v1058 = vadd.f32 %v1048, %v1056
        %v1059 = vtanh.pop %v1058
        %1061 = vrot.lane.b32.xlu0 %v1059, 32
        %v1062 = vpop.permute.xlu0 %1061
        %v1064 = vmul.f32 %v1046, %v1062
        %p1065 = scmp.gt.s32.totalorder %s577, 1
        %s1066 = scalar_select %p1065, 1, 0
        %v1067 = vstv %s1066
        %vm1068 = vcmp.eq.s32.totalorder %v1067, 1
        %v1069 = vsel %vm1068, %v1064, 0.0
        %1071 = vrot.lane.b32.xlu0 %v1069, 64
        %v1072 = vpop.permute.xlu0 %1071
        %1074 = vst.msk [vmem:[#allocation4 + $0x1] sm:$0x1] %vm861, %v1072
        %v1075 = vsel %vm1068, %v1064, %v856
        %v1076 = vsel %vm1068, %v1058, %v863
        %v1077 = vld [vmem:[#allocation3 + $0x6] sm:$0x1]
        %v1078 = vsel %vm590, %v965, 0
        %1080 = vmatprep.subr.mxu0 0.0
        %1081 = vmatpush1.msra.mxu0 %v751
        %1082 = vmatprep.subr.mxu0 0.0
        %1083 = vmatpush1.msra.mxu0 %v752
        %1084 = vmatprep.subr.mxu0 0.0
        %1085 = vmatpush1.msra.mxu0 %v753
        %1086 = vmatprep.subr.mxu0 0.0
        %1087 = vmatpush1.msra.mxu0 %v754
        %1088 = vmatprep.subr.mxu0 0.0
        %1089 = vmatpush1.msra.mxu0 0.0
        %1090 = vmatprep.subr.mxu0 0.0
        %1091 = vmatpush1.msra.mxu0 0.0
        %1092 = vmatprep.subr.mxu0 0.0
        %1093 = vmatpush1.msra.mxu0 0.0
        %1094 = vmatprep.subr.mxu0 0.0
        %1095 = vmatpush1.msra.mxu0 0.0
        %1096 = vmatprep.subr.mxu0 0.0
        %1097 = vmatpush1.msra.mxu0 0.0
        %1098 = vmatprep.subr.mxu0 0.0
        %1099 = vmatpush1.msra.mxu0 0.0
        %1100 = vmatprep.subr.mxu0 0.0
        %1101 = vmatpush1.msra.mxu0 0.0
        %1102 = vmatprep.subr.mxu0 0.0
        %1103 = vmatpush1.msra.mxu0 0.0
        %1104 = vmatprep.subr.mxu0 0.0
        %1105 = vmatpush1.msra.mxu0 0.0
        %1106 = vmatprep.subr.mxu0 0.0
        %1107 = vmatpush1.msra.mxu0 0.0
        %1108 = vmatprep.subr.mxu0 0.0
        %1109 = vmatpush1.msra.mxu0 0.0
        %1110 = vmatprep.subr.mxu0 0.0
        %1111 = vmatpush1.msra.mxu0 0.0
        %1112 = vmatprep.subr.mxu0 0.0
        %1113 = vmatpush1.msra.mxu0 0.0
        %1114 = vmatprep.subr.mxu0 0.0
        %1115 = vmatpush1.msra.mxu0 0.0
        %1116 = vmatprep.subr.mxu0 0.0
        %1117 = vmatpush1.msra.mxu0 0.0
        %1118 = vmatprep.subr.mxu0 0.0
        %1119 = vmatpush1.msra.mxu0 0.0
        %1120 = vmatprep.subr.mxu0 0.0
        %1121 = vmatpush1.msra.mxu0 0.0
        %1122 = vmatprep.subr.mxu0 0.0
        %1123 = vmatpush1.msra.mxu0 0.0
        %1124 = vmatprep.subr.mxu0 0.0
        %1125 = vmatpush1.msra.mxu0 0.0
        %1126 = vmatprep.subr.mxu0 0.0
        %1127 = vmatpush1.msra.mxu0 0.0
        %1128 = vmatprep.subr.mxu0 0.0
        %1129 = vmatpush1.msra.mxu0 0.0
        %1130 = vmatprep.subr.mxu0 0.0
        %1131 = vmatpush1.msra.mxu0 0.0
        %1132 = vmatprep.subr.mxu0 0.0
        %1133 = vmatpush1.msra.mxu0 0.0
        %1134 = vmatprep.subr.mxu0 0.0
        %1135 = vmatpush1.msra.mxu0 0.0
        %1136 = vmatprep.subr.mxu0 0.0
        %1137 = vmatpush1.msra.mxu0 0.0
        %1138 = vmatprep.subr.mxu0 0.0
        %1139 = vmatpush1.msra.mxu0 0.0
        %1140 = vmatprep.subr.mxu0 0.0
        %1141 = vmatpush1.msra.mxu0 0.0
        %1142 = vmatprep.subr.mxu0 0.0
        %1143 = vmatpush1.msra.mxu0 0.0
        %1144 = vmatprep.mubr.f32.mxu0 0.0
        %1145 = vmatmul.mubr.f32.gmra.mrb[0].mxu0 %v1078
        %v1146 = vpop.f32.mrb[0].mxu0
        %v1147 = vadd.f32 0.0, %v1146
        %v1148 = vpop.f32.mrb[0].mxu0
        %1149 = vdwg.mxu0
        %v1150 = vadd.f32 %v1077, %v1147
        %v1151 = vmul.f32 %v1150, 0.5
        %v1152 = vtanh.pop %v1151
        %v1153 = vadd.f32 %v1152, 1.0
        %v1154 = vmul.f32 %v1153, 0.5
        %v1155 = vtanh.pop %v1150
        %v1156 = vmul.f32 %v1154, %v968
        %1158 = vrot.lane.b32.xlu0 %v1155, 32
        %v1159 = vpop.permute.xlu0 %1158
        %v1161 = vmul.f32 %v1154, %v1159
        %1163 = vrot.lane.b32.xlu0 %v1161, 32
        %v1164 = vpop.permute.xlu0 %1163
        %v1166 = vadd.f32 %v1156, %v1164
        %v1167 = vtanh.pop %v1166
        %1169 = vrot.lane.b32.xlu0 %v1167, 32
        %v1170 = vpop.permute.xlu0 %1169
        %v1172 = vmul.f32 %v1154, %v1170
        %p1173 = scmp.gt.s32.totalorder %s577, 6
        %s1174 = scalar_select %p1173, 1, 0
        %v1175 = vstv %s1174
        %vm1176 = vcmp.eq.s32.totalorder %v1175, 1
        %v1177 = vsel %vm1176, %v1172, 0.0
        %1179 = vrot.lane.b32.xlu0 %v1177, 64
        %v1180 = vpop.permute.xlu0 %1179
        %1182 = vst.msk [vmem:[#allocation5 + $0x6] sm:$0x1] %vm861, %v1180
        %v1183 = vsel %vm1176, %v1172, %v962
        %v1184 = vsel %vm1176, %v1166, %v968
        %v1185 = vld [vmem:[#allocation2 + $0x2] sm:$0x1]
        %1187 = vrot.lane.b32.xlu0 %v1075, 64
        %v1188 = vpop.permute.xlu0 %1187
        %v1189 = vsel %vm590, %v1188, 0
        %1191 = vmatprep.subr.mxu0 0.0
        %1192 = vmatpush1.msra.mxu0 %v747
        %1193 = vmatprep.subr.mxu0 0.0
        %1194 = vmatpush1.msra.mxu0 %v748
        %1195 = vmatprep.subr.mxu0 0.0
        %1196 = vmatpush1.msra.mxu0 %v749
        %1197 = vmatprep.subr.mxu0 0.0
        %1198 = vmatpush1.msra.mxu0 %v750
        %1199 = vmatprep.subr.mxu0 0.0
        %1200 = vmatpush1.msra.mxu0 0.0
        %1201 = vmatprep.subr.mxu0 0.0
        %1202 = vmatpush1.msra.mxu0 0.0
        %1203 = vmatprep.subr.mxu0 0.0
        %1204 = vmatpush1.msra.mxu0 0.0
        %1205 = vmatprep.subr.mxu0 0.0
        %1206 = vmatpush1.msra.mxu0 0.0
        %1207 = vmatprep.subr.mxu0 0.0
        %1208 = vmatpush1.msra.mxu0 0.0
        %1209 = vmatprep.subr.mxu0 0.0
        %1210 = vmatpush1.msra.mxu0 0.0
        %1211 = vmatprep.subr.mxu0 0.0
        %1212 = vmatpush1.msra.mxu0 0.0
        %1213 = vmatprep.subr.mxu0 0.0
        %1214 = vmatpush1.msra.mxu0 0.0
        %1215 = vmatprep.subr.mxu0 0.0
        %1216 = vmatpush1.msra.mxu0 0.0
        %1217 = vmatprep.subr.mxu0 0.0
        %1218 = vmatpush1.msra.mxu0 0.0
        %1219 = vmatprep.subr.mxu0 0.0
        %1220 = vmatpush1.msra.mxu0 0.0
        %1221 = vmatprep.subr.mxu0 0.0
        %1222 = vmatpush1.msra.mxu0 0.0
        %1223 = vmatprep.subr.mxu0 0.0
        %1224 = vmatpush1.msra.mxu0 0.0
        %1225 = vmatprep.subr.mxu0 0.0
        %1226 = vmatpush1.msra.mxu0 0.0
        %1227 = vmatprep.subr.mxu0 0.0
        %1228 = vmatpush1.msra.mxu0 0.0
        %1229 = vmatprep.subr.mxu0 0.0
        %1230 = vmatpush1.msra.mxu0 0.0
        %1231 = vmatprep.subr.mxu0 0.0
        %1232 = vmatpush1.msra.mxu0 0.0
        %1233 = vmatprep.subr.mxu0 0.0
        %1234 = vmatpush1.msra.mxu0 0.0
        %1235 = vmatprep.subr.mxu0 0.0
        %1236 = vmatpush1.msra.mxu0 0.0
        %1237 = vmatprep.subr.mxu0 0.0
        %1238 = vmatpush1.msra.mxu0 0.0
        %1239 = vmatprep.subr.mxu0 0.0
        %1240 = vmatpush1.msra.mxu0 0.0
        %1241 = vmatprep.subr.mxu0 0.0
        %1242 = vmatpush1.msra.mxu0 0.0
        %1243 = vmatprep.subr.mxu0 0.0
        %1244 = vmatpush1.msra.mxu0 0.0
        %1245 = vmatprep.subr.mxu0 0.0
        %1246 = vmatpush1.msra.mxu0 0.0
        %1247 = vmatprep.subr.mxu0 0.0
        %1248 = vmatpush1.msra.mxu0 0.0
        %1249 = vmatprep.subr.mxu0 0.0
        %1250 = vmatpush1.msra.mxu0 0.0
        %1251 = vmatprep.subr.mxu0 0.0
        %1252 = vmatpush1.msra.mxu0 0.0
        %1253 = vmatprep.subr.mxu0 0.0
        %1254 = vmatpush1.msra.mxu0 0.0
        %1255 = vmatprep.mubr.f32.mxu0 0.0
        %1256 = vmatmul.mubr.f32.gmra.mrb[0].mxu0 %v1189
        %v1257 = vpop.f32.mrb[0].mxu0
        %v1258 = vadd.f32 0.0, %v1257
        %v1259 = vpop.f32.mrb[0].mxu0
        %1260 = vdwg.mxu0
        %v1261 = vadd.f32 %v1185, %v1258
        %v1262 = vmul.f32 %v1261, 0.5
        %v1263 = vtanh.pop %v1262
        %v1264 = vadd.f32 %v1263, 1.0
        %v1265 = vmul.f32 %v1264, 0.5
        %v1266 = vtanh.pop %v1261
        %v1267 = vmul.f32 %v1265, %v1076
        %1269 = vrot.lane.b32.xlu0 %v1266, 32
        %v1270 = vpop.permute.xlu0 %1269
        %v1272 = vmul.f32 %v1265, %v1270
        %1274 = vrot.lane.b32.xlu0 %v1272, 32
        %v1275 = vpop.permute.xlu0 %1274
        %v1277 = vadd.f32 %v1267, %v1275
        %v1278 = vtanh.pop %v1277
        %1280 = vrot.lane.b32.xlu0 %v1278, 32
        %v1281 = vpop.permute.xlu0 %1280
        %v1283 = vmul.f32 %v1265, %v1281
        %p1284 = scmp.gt.s32.totalorder %s577, 2
        %s1285 = scalar_select %p1284, 1, 0
        %v1286 = vstv %s1285
        %vm1287 = vcmp.eq.s32.totalorder %v1286, 1
        %v1288 = vsel %vm1287, %v1283, 0.0
        %1290 = vrot.lane.b32.xlu0 %v1288, 64
        %v1291 = vpop.permute.xlu0 %1290
        %1293 = vst.msk [vmem:[#allocation4 + $0x2] sm:$0x1] %vm861, %v1291
        %v1294 = vsel %vm1287, %v1283, %v1075
        %v1295 = vsel %vm1287, %v1277, %v1076
        %v1296 = vld [vmem:[#allocation3 + $0x5] sm:$0x1]
        %1298 = vrot.lane.b32.xlu0 %v1183, 64
        %v1299 = vpop.permute.xlu0 %1298
        %v1300 = vsel %vm590, %v1299, 0
        %1302 = vmatprep.subr.mxu0 0.0
        %1303 = vmatpush1.msra.mxu0 %v751
        %1304 = vmatprep.subr.mxu0 0.0
        %1305 = vmatpush1.msra.mxu0 %v752
        %1306 = vmatprep.subr.mxu0 0.0
        %1307 = vmatpush1.msra.mxu0 %v753
        %1308 = vmatprep.subr.mxu0 0.0
        %1309 = vmatpush1.msra.mxu0 %v754
        %1310 = vmatprep.subr.mxu0 0.0
        %1311 = vmatpush1.msra.mxu0 0.0
        %1312 = vmatprep.subr.mxu0 0.0
        %1313 = vmatpush1.msra.mxu0 0.0
        %1314 = vmatprep.subr.mxu0 0.0
        %1315 = vmatpush1.msra.mxu0 0.0
        %1316 = vmatprep.subr.mxu0 0.0
        %1317 = vmatpush1.msra.mxu0 0.0
        %1318 = vmatprep.subr.mxu0 0.0
        %1319 = vmatpush1.msra.mxu0 0.0
        %1320 = vmatprep.subr.mxu0 0.0
        %1321 = vmatpush1.msra.mxu0 0.0
        %1322 = vmatprep.subr.mxu0 0.0
        %1323 = vmatpush1.msra.mxu0 0.0
        %1324 = vmatprep.subr.mxu0 0.0
        %1325 = vmatpush1.msra.mxu0 0.0
        %1326 = vmatprep.subr.mxu0 0.0
        %1327 = vmatpush1.msra.mxu0 0.0
        %1328 = vmatprep.subr.mxu0 0.0
        %1329 = vmatpush1.msra.mxu0 0.0
        %1330 = vmatprep.subr.mxu0 0.0
        %1331 = vmatpush1.msra.mxu0 0.0
        %1332 = vmatprep.subr.mxu0 0.0
        %1333 = vmatpush1.msra.mxu0 0.0
        %1334 = vmatprep.subr.mxu0 0.0
        %1335 = vmatpush1.msra.mxu0 0.0
        %1336 = vmatprep.subr.mxu0 0.0
        %1337 = vmatpush1.msra.mxu0 0.0
        %1338 = vmatprep.subr.mxu0 0.0
        %1339 = vmatpush1.msra.mxu0 0.0
        %1340 = vmatprep.subr.mxu0 0.0
        %1341 = vmatpush1.msra.mxu0 0.0
        %1342 = vmatprep.subr.mxu0 0.0
        %1343 = vmatpush1.msra.mxu0 0.0
        %1344 = vmatprep.subr.mxu0 0.0
        %1345 = vmatpush1.msra.mxu0 0.0
        %1346 = vmatprep.subr.mxu0 0.0
        %1347 = vmatpush1.msra.mxu0 0.0
        %1348 = vmatprep.subr.mxu0 0.0
        %1349 = vmatpush1.msra.mxu0 0.0
        %1350 = vmatprep.subr.mxu0 0.0
        %1351 = vmatpush1.msra.mxu0 0.0
        %1352 = vmatprep.subr.mxu0 0.0
        %1353 = vmatpush1.msra.mxu0 0.0
        %1354 = vmatprep.subr.mxu0 0.0
        %1355 = vmatpush1.msra.mxu0 0.0
        %1356 = vmatprep.subr.mxu0 0.0
        %1357 = vmatpush1.msra.mxu0 0.0
        %1358 = vmatprep.subr.mxu0 0.0
        %1359 = vmatpush1.msra.mxu0 0.0
        %1360 = vmatprep.subr.mxu0 0.0
        %1361 = vmatpush1.msra.mxu0 0.0
        %1362 = vmatprep.subr.mxu0 0.0
        %1363 = vmatpush1.msra.mxu0 0.0
        %1364 = vmatprep.subr.mxu0 0.0
        %1365 = vmatpush1.msra.mxu0 0.0
        %1366 = vmatprep.mubr.f32.mxu0 0.0
        %1367 = vmatmul.mubr.f32.gmra.mrb[0].mxu0 %v1300
        %v1368 = vpop.f32.mrb[0].mxu0
        %v1369 = vadd.f32 0.0, %v1368
        %v1370 = vpop.f32.mrb[0].mxu0
        %1371 = vdwg.mxu0
        %v1372 = vadd.f32 %v1296, %v1369
        %v1373 = vmul.f32 %v1372, 0.5
        %v1374 = vtanh.pop %v1373
        %v1375 = vadd.f32 %v1374, 1.0
        %v1376 = vmul.f32 %v1375, 0.5
        %v1377 = vtanh.pop %v1372
        %v1378 = vmul.f32 %v1376, %v1184
        %1380 = vrot.lane.b32.xlu0 %v1377, 32
        %v1381 = vpop.permute.xlu0 %1380
        %v1383 = vmul.f32 %v1376, %v1381
        %1385 = vrot.lane.b32.xlu0 %v1383, 32
        %v1386 = vpop.permute.xlu0 %1385
        %v1388 = vadd.f32 %v1378, %v1386
        %v1389 = vtanh.pop %v1388
        %1391 = vrot.lane.b32.xlu0 %v1389, 32
        %v1392 = vpop.permute.xlu0 %1391
        %v1394 = vmul.f32 %v1376, %v1392
        %p1395 = scmp.gt.s32.totalorder %s577, 5
        %s1396 = scalar_select %p1395, 1, 0
        %v1397 = vstv %s1396
        %vm1398 = vcmp.eq.s32.totalorder %v1397, 1
        %v1399 = vsel %vm1398, %v1394, 0.0
        %1401 = vrot.lane.b32.xlu0 %v1399, 64
        %v1402 = vpop.permute.xlu0 %1401
        %1404 = vst.msk [vmem:[#allocation5 + $0x5] sm:$0x1] %vm861, %v1402
        %v1405 = vsel %vm1398, %v1394, %v1183
        %v1406 = vsel %vm1398, %v1388, %v1184
        %v1407 = vld [vmem:[#allocation2 + $0x3] sm:$0x1]
        %1409 = vrot.lane.b32.xlu0 %v1294, 64
        %v1410 = vpop.permute.xlu0 %1409
        %v1411 = vsel %vm590, %v1410, 0
        %1413 = vmatprep.subr.mxu0 0.0
        %1414 = vmatpush1.msra.mxu0 %v747
        %1415 = vmatprep.subr.mxu0 0.0
        %1416 = vmatpush1.msra.mxu0 %v748
        %1417 = vmatprep.subr.mxu0 0.0
        %1418 = vmatpush1.msra.mxu0 %v749
        %1419 = vmatprep.subr.mxu0 0.0
        %1420 = vmatpush1.msra.mxu0 %v750
        %1421 = vmatprep.subr.mxu0 0.0
        %1422 = vmatpush1.msra.mxu0 0.0
        %1423 = vmatprep.subr.mxu0 0.0
        %1424 = vmatpush1.msra.mxu0 0.0
        %1425 = vmatprep.subr.mxu0 0.0
        %1426 = vmatpush1.msra.mxu0 0.0
        %1427 = vmatprep.subr.mxu0 0.0
        %1428 = vmatpush1.msra.mxu0 0.0
        %1429 = vmatprep.subr.mxu0 0.0
        %1430 = vmatpush1.msra.mxu0 0.0
        %1431 = vmatprep.subr.mxu0 0.0
        %1432 = vmatpush1.msra.mxu0 0.0
        %1433 = vmatprep.subr.mxu0 0.0
        %1434 = vmatpush1.msra.mxu0 0.0
        %1435 = vmatprep.subr.mxu0 0.0
        %1436 = vmatpush1.msra.mxu0 0.0
        %1437 = vmatprep.subr.mxu0 0.0
        %1438 = vmatpush1.msra.mxu0 0.0
        %1439 = vmatprep.subr.mxu0 0.0
        %1440 = vmatpush1.msra.mxu0 0.0
        %1441 = vmatprep.subr.mxu0 0.0
        %1442 = vmatpush1.msra.mxu0 0.0
        %1443 = vmatprep.subr.mxu0 0.0
        %1444 = vmatpush1.msra.mxu0 0.0
        %1445 = vmatprep.subr.mxu0 0.0
        %1446 = vmatpush1.msra.mxu0 0.0
        %1447 = vmatprep.subr.mxu0 0.0
        %1448 = vmatpush1.msra.mxu0 0.0
        %1449 = vmatprep.subr.mxu0 0.0
        %1450 = vmatpush1.msra.mxu0 0.0
        %1451 = vmatprep.subr.mxu0 0.0
        %1452 = vmatpush1.msra.mxu0 0.0
        %1453 = vmatprep.subr.mxu0 0.0
        %1454 = vmatpush1.msra.mxu0 0.0
        %1455 = vmatprep.subr.mxu0 0.0
        %1456 = vmatpush1.msra.mxu0 0.0
        %1457 = vmatprep.subr.mxu0 0.0
        %1458 = vmatpush1.msra.mxu0 0.0
        %1459 = vmatprep.subr.mxu0 0.0
        %1460 = vmatpush1.msra.mxu0 0.0
        %1461 = vmatprep.subr.mxu0 0.0
        %1462 = vmatpush1.msra.mxu0 0.0
        %1463 = vmatprep.subr.mxu0 0.0
        %1464 = vmatpush1.msra.mxu0 0.0
        %1465 = vmatprep.subr.mxu0 0.0
        %1466 = vmatpush1.msra.mxu0 0.0
        %1467 = vmatprep.subr.mxu0 0.0
        %1468 = vmatpush1.msra.mxu0 0.0
        %1469 = vmatprep.subr.mxu0 0.0
        %1470 = vmatpush1.msra.mxu0 0.0
        %1471 = vmatprep.subr.mxu0 0.0
        %1472 = vmatpush1.msra.mxu0 0.0
        %1473 = vmatprep.subr.mxu0 0.0
        %1474 = vmatpush1.msra.mxu0 0.0
        %1475 = vmatprep.subr.mxu0 0.0
        %1476 = vmatpush1.msra.mxu0 0.0
        %1477 = vmatprep.mubr.f32.mxu0 0.0
        %1478 = vmatmul.mubr.f32.gmra.mrb[0].mxu0 %v1411
        %v1479 = vpop.f32.mrb[0].mxu0
        %v1480 = vadd.f32 0.0, %v1479
        %v1481 = vpop.f32.mrb[0].mxu0
        %1482 = vdwg.mxu0
        %v1483 = vadd.f32 %v1407, %v1480
        %v1484 = vmul.f32 %v1483, 0.5
        %v1485 = vtanh.pop %v1484
        %v1486 = vadd.f32 %v1485, 1.0
        %v1487 = vmul.f32 %v1486, 0.5
        %v1488 = vtanh.pop %v1483
        %v1489 = vmul.f32 %v1487, %v1295
        %1491 = vrot.lane.b32.xlu0 %v1488, 32
        %v1492 = vpop.permute.xlu0 %1491
        %v1494 = vmul.f32 %v1487, %v1492
        %1496 = vrot.lane.b32.xlu0 %v1494, 32
        %v1497 = vpop.permute.xlu0 %1496
        %v1499 = vadd.f32 %v1489, %v1497
        %v1500 = vtanh.pop %v1499
        %1502 = vrot.lane.b32.xlu0 %v1500, 32
        %v1503 = vpop.permute.xlu0 %1502
        %v1505 = vmul.f32 %v1487, %v1503
        %p1506 = scmp.gt.s32.totalorder %s577, 3
        %s1507 = scalar_select %p1506, 1, 0
        %v1508 = vstv %s1507
        %vm1509 = vcmp.eq.s32.totalorder %v1508, 1
        %v1510 = vsel %vm1509, %v1505, 0.0
        %1512 = vrot.lane.b32.xlu0 %v1510, 64
        %v1513 = vpop.permute.xlu0 %1512
        %1515 = vst.msk [vmem:[#allocation4 + $0x3] sm:$0x1] %vm861, %v1513
        %v1516 = vsel %vm1509, %v1505, %v1294
        %v1517 = vsel %vm1509, %v1499, %v1295
        %v1518 = vld [vmem:[#allocation3 + $0x4] sm:$0x1]
        %1520 = vrot.lane.b32.xlu0 %v1405, 64
        %v1521 = vpop.permute.xlu0 %1520
        %v1522 = vsel %vm590, %v1521, 0
        %1524 = vmatprep.subr.mxu0 0.0
        %1525 = vmatpush1.msra.mxu0 %v751
        %1526 = vmatprep.subr.mxu0 0.0
        %1527 = vmatpush1.msra.mxu0 %v752
        %1528 = vmatprep.subr.mxu0 0.0
        %1529 = vmatpush1.msra.mxu0 %v753
        %1530 = vmatprep.subr.mxu0 0.0
        %1531 = vmatpush1.msra.mxu0 %v754
        %1532 = vmatprep.subr.mxu0 0.0
        %1533 = vmatpush1.msra.mxu0 0.0
        %1534 = vmatprep.subr.mxu0 0.0
        %1535 = vmatpush1.msra.mxu0 0.0
        %1536 = vmatprep.subr.mxu0 0.0
        %1537 = vmatpush1.msra.mxu0 0.0
        %1538 = vmatprep.subr.mxu0 0.0
        %1539 = vmatpush1.msra.mxu0 0.0
        %1540 = vmatprep.subr.mxu0 0.0
        %1541 = vmatpush1.msra.mxu0 0.0
        %1542 = vmatprep.subr.mxu0 0.0
        %1543 = vmatpush1.msra.mxu0 0.0
        %1544 = vmatprep.subr.mxu0 0.0
        %1545 = vmatpush1.msra.mxu0 0.0
        %1546 = vmatprep.subr.mxu0 0.0
        %1547 = vmatpush1.msra.mxu0 0.0
        %1548 = vmatprep.subr.mxu0 0.0
        %1549 = vmatpush1.msra.mxu0 0.0
        %1550 = vmatprep.subr.mxu0 0.0
        %1551 = vmatpush1.msra.mxu0 0.0
        %1552 = vmatprep.subr.mxu0 0.0
        %1553 = vmatpush1.msra.mxu0 0.0
        %1554 = vmatprep.subr.mxu0 0.0
        %1555 = vmatpush1.msra.mxu0 0.0
        %1556 = vmatprep.subr.mxu0 0.0
        %1557 = vmatpush1.msra.mxu0 0.0
        %1558 = vmatprep.subr.mxu0 0.0
        %1559 = vmatpush1.msra.mxu0 0.0
        %1560 = vmatprep.subr.mxu0 0.0
        %1561 = vmatpush1.msra.mxu0 0.0
        %1562 = vmatprep.subr.mxu0 0.0
        %1563 = vmatpush1.msra.mxu0 0.0
        %1564 = vmatprep.subr.mxu0 0.0
        %1565 = vmatpush1.msra.mxu0 0.0
        %1566 = vmatprep.subr.mxu0 0.0
        %1567 = vmatpush1.msra.mxu0 0.0
        %1568 = vmatprep.subr.mxu0 0.0
        %1569 = vmatpush1.msra.mxu0 0.0
        %1570 = vmatprep.subr.mxu0 0.0
        %1571 = vmatpush1.msra.mxu0 0.0
        %1572 = vmatprep.subr.mxu0 0.0
        %1573 = vmatpush1.msra.mxu0 0.0
        %1574 = vmatprep.subr.mxu0 0.0
        %1575 = vmatpush1.msra.mxu0 0.0
        %1576 = vmatprep.subr.mxu0 0.0
        %1577 = vmatpush1.msra.mxu0 0.0
        %1578 = vmatprep.subr.mxu0 0.0
        %1579 = vmatpush1.msra.mxu0 0.0
        %1580 = vmatprep.subr.mxu0 0.0
        %1581 = vmatpush1.msra.mxu0 0.0
        %1582 = vmatprep.subr.mxu0 0.0
        %1583 = vmatpush1.msra.mxu0 0.0
        %1584 = vmatprep.subr.mxu0 0.0
        %1585 = vmatpush1.msra.mxu0 0.0
        %1586 = vmatprep.subr.mxu0 0.0
        %1587 = vmatpush1.msra.mxu0 0.0
        %1588 = vmatprep.mubr.f32.mxu0 0.0
        %1589 = vmatmul.mubr.f32.gmra.mrb[0].mxu0 %v1522
        %v1590 = vpop.f32.mrb[0].mxu0
        %v1591 = vadd.f32 0.0, %v1590
        %v1592 = vpop.f32.mrb[0].mxu0
        %1593 = vdwg.mxu0
        %v1594 = vadd.f32 %v1518, %v1591
        %v1595 = vmul.f32 %v1594, 0.5
        %v1596 = vtanh.pop %v1595
        %v1597 = vadd.f32 %v1596, 1.0
        %v1598 = vmul.f32 %v1597, 0.5
        %v1599 = vtanh.pop %v1594
        %v1600 = vmul.f32 %v1598, %v1406
        %1602 = vrot.lane.b32.xlu0 %v1599, 32
        %v1603 = vpop.permute.xlu0 %1602
        %v1605 = vmul.f32 %v1598, %v1603
        %1607 = vrot.lane.b32.xlu0 %v1605, 32
        %v1608 = vpop.permute.xlu0 %1607
        %v1610 = vadd.f32 %v1600, %v1608
        %v1611 = vtanh.pop %v1610
        %1613 = vrot.lane.b32.xlu0 %v1611, 32
        %v1614 = vpop.permute.xlu0 %1613
        %v1616 = vmul.f32 %v1598, %v1614
        %p1617 = scmp.gt.s32.totalorder %s577, 4
        %s1618 = scalar_select %p1617, 1, 0
        %v1619 = vstv %s1618
        %vm1620 = vcmp.eq.s32.totalorder %v1619, 1
        %v1621 = vsel %vm1620, %v1616, 0.0
        %1623 = vrot.lane.b32.xlu0 %v1621, 64
        %v1624 = vpop.permute.xlu0 %1623
        %1626 = vst.msk [vmem:[#allocation5 + $0x4] sm:$0x1] %vm861, %v1624
        %v1627 = vsel %vm1620, %v1616, %v1405
        %v1628 = vsel %vm1620, %v1610, %v1406
        %v1629 = vld [vmem:[#allocation2 + $0x4] sm:$0x1]
        %1631 = vrot.lane.b32.xlu0 %v1516, 64
        %v1632 = vpop.permute.xlu0 %1631
        %v1633 = vsel %vm590, %v1632, 0
        %1635 = vmatprep.subr.mxu0 0.0
        %1636 = vmatpush1.msra.mxu0 %v747
        %1637 = vmatprep.subr.mxu0 0.0
        %1638 = vmatpush1.msra.mxu0 %v748
        %1639 = vmatprep.subr.mxu0 0.0
        %1640 = vmatpush1.msra.mxu0 %v749
        %1641 = vmatprep.subr.mxu0 0.0
        %1642 = vmatpush1.msra.mxu0 %v750
        %1643 = vmatprep.subr.mxu0 0.0
        %1644 = vmatpush1.msra.mxu0 0.0
        %1645 = vmatprep.subr.mxu0 0.0
        %1646 = vmatpush1.msra.mxu0 0.0
        %1647 = vmatprep.subr.mxu0 0.0
        %1648 = vmatpush1.msra.mxu0 0.0
        %1649 = vmatprep.subr.mxu0 0.0
        %1650 = vmatpush1.msra.mxu0 0.0
        %1651 = vmatprep.subr.mxu0 0.0
        %1652 = vmatpush1.msra.mxu0 0.0
        %1653 = vmatprep.subr.mxu0 0.0
        %1654 = vmatpush1.msra.mxu0 0.0
        %1655 = vmatprep.subr.mxu0 0.0
        %1656 = vmatpush1.msra.mxu0 0.0
        %1657 = vmatprep.subr.mxu0 0.0
        %1658 = vmatpush1.msra.mxu0 0.0
        %1659 = vmatprep.subr.mxu0 0.0
        %1660 = vmatpush1.msra.mxu0 0.0
        %1661 = vmatprep.subr.mxu0 0.0
        %1662 = vmatpush1.msra.mxu0 0.0
        %1663 = vmatprep.subr.mxu0 0.0
        %1664 = vmatpush1.msra.mxu0 0.0
        %1665 = vmatprep.subr.mxu0 0.0
        %1666 = vmatpush1.msra.mxu0 0.0
        %1667 = vmatprep.subr.mxu0 0.0
        %1668 = vmatpush1.msra.mxu0 0.0
        %1669 = vmatprep.subr.mxu0 0.0
        %1670 = vmatpush1.msra.mxu0 0.0
        %1671 = vmatprep.subr.mxu0 0.0
        %1672 = vmatpush1.msra.mxu0 0.0
        %1673 = vmatprep.subr.mxu0 0.0
        %1674 = vmatpush1.msra.mxu0 0.0
        %1675 = vmatprep.subr.mxu0 0.0
        %1676 = vmatpush1.msra.mxu0 0.0
        %1677 = vmatprep.subr.mxu0 0.0
        %1678 = vmatpush1.msra.mxu0 0.0
        %1679 = vmatprep.subr.mxu0 0.0
        %1680 = vmatpush1.msra.mxu0 0.0
        %1681 = vmatprep.subr.mxu0 0.0
        %1682 = vmatpush1.msra.mxu0 0.0
        %1683 = vmatprep.subr.mxu0 0.0
        %1684 = vmatpush1.msra.mxu0 0.0
        %1685 = vmatprep.subr.mxu0 0.0
        %1686 = vmatpush1.msra.mxu0 0.0
        %1687 = vmatprep.subr.mxu0 0.0
        %1688 = vmatpush1.msra.mxu0 0.0
        %1689 = vmatprep.subr.mxu0 0.0
        %1690 = vmatpush1.msra.mxu0 0.0
        %1691 = vmatprep.subr.mxu0 0.0
        %1692 = vmatpush1.msra.mxu0 0.0
        %1693 = vmatprep.subr.mxu0 0.0
        %1694 = vmatpush1.msra.mxu0 0.0
        %1695 = vmatprep.subr.mxu0 0.0
        %1696 = vmatpush1.msra.mxu0 0.0
        %1697 = vmatprep.subr.mxu0 0.0
        %1698 = vmatpush1.msra.mxu0 0.0
        %1699 = vmatprep.mubr.f32.mxu0 0.0
        %1700 = vmatmul.mubr.f32.gmra.mrb[0].mxu0 %v1633
        %v1701 = vpop.f32.mrb[0].mxu0
        %v1702 = vadd.f32 0.0, %v1701
        %v1703 = vpop.f32.mrb[0].mxu0
        %1704 = vdwg.mxu0
        %v1705 = vadd.f32 %v1629, %v1702
        %v1706 = vmul.f32 %v1705, 0.5
        %v1707 = vtanh.pop %v1706
        %v1708 = vadd.f32 %v1707, 1.0
        %v1709 = vmul.f32 %v1708, 0.5
        %v1710 = vtanh.pop %v1705
        %v1711 = vmul.f32 %v1709, %v1517
        %1713 = vrot.lane.b32.xlu0 %v1710, 32
        %v1714 = vpop.permute.xlu0 %1713
        %v1716 = vmul.f32 %v1709, %v1714
        %1718 = vrot.lane.b32.xlu0 %v1716, 32
        %v1719 = vpop.permute.xlu0 %1718
        %v1721 = vadd.f32 %v1711, %v1719
        %v1722 = vtanh.pop %v1721
        %1724 = vrot.lane.b32.xlu0 %v1722, 32
        %v1725 = vpop.permute.xlu0 %1724
        %v1727 = vmul.f32 %v1709, %v1725
        %v1728 = vsel %vm1620, %v1727, 0.0
        %1730 = vrot.lane.b32.xlu0 %v1728, 64
        %v1731 = vpop.permute.xlu0 %1730
        %1733 = vst.msk [vmem:[#allocation4 + $0x4] sm:$0x1] %vm861, %v1731
        %v1734 = vsel %vm1620, %v1727, %v1516
        %v1735 = vsel %vm1620, %v1721, %v1517
        %v1736 = vld [vmem:[#allocation3 + $0x3] sm:$0x1]
        %1738 = vrot.lane.b32.xlu0 %v1627, 64
        %v1739 = vpop.permute.xlu0 %1738
        %v1740 = vsel %vm590, %v1739, 0
        %1742 = vmatprep.subr.mxu0 0.0
        %1743 = vmatpush1.msra.mxu0 %v751
        %1744 = vmatprep.subr.mxu0 0.0
        %1745 = vmatpush1.msra.mxu0 %v752
        %1746 = vmatprep.subr.mxu0 0.0
        %1747 = vmatpush1.msra.mxu0 %v753
        %1748 = vmatprep.subr.mxu0 0.0
        %1749 = vmatpush1.msra.mxu0 %v754
        %1750 = vmatprep.subr.mxu0 0.0
        %1751 = vmatpush1.msra.mxu0 0.0
        %1752 = vmatprep.subr.mxu0 0.0
        %1753 = vmatpush1.msra.mxu0 0.0
        %1754 = vmatprep.subr.mxu0 0.0
        %1755 = vmatpush1.msra.mxu0 0.0
        %1756 = vmatprep.subr.mxu0 0.0
        %1757 = vmatpush1.msra.mxu0 0.0
        %1758 = vmatprep.subr.mxu0 0.0
        %1759 = vmatpush1.msra.mxu0 0.0
        %1760 = vmatprep.subr.mxu0 0.0
        %1761 = vmatpush1.msra.mxu0 0.0
        %1762 = vmatprep.subr.mxu0 0.0
        %1763 = vmatpush1.msra.mxu0 0.0
        %1764 = vmatprep.subr.mxu0 0.0
        %1765 = vmatpush1.msra.mxu0 0.0
        %1766 = vmatprep.subr.mxu0 0.0
        %1767 = vmatpush1.msra.mxu0 0.0
        %1768 = vmatprep.subr.mxu0 0.0
        %1769 = vmatpush1.msra.mxu0 0.0
        %1770 = vmatprep.subr.mxu0 0.0
        %1771 = vmatpush1.msra.mxu0 0.0
        %1772 = vmatprep.subr.mxu0 0.0
        %1773 = vmatpush1.msra.mxu0 0.0
        %1774 = vmatprep.subr.mxu0 0.0
        %1775 = vmatpush1.msra.mxu0 0.0
        %1776 = vmatprep.subr.mxu0 0.0
        %1777 = vmatpush1.msra.mxu0 0.0
        %1778 = vmatprep.subr.mxu0 0.0
        %1779 = vmatpush1.msra.mxu0 0.0
        %1780 = vmatprep.subr.mxu0 0.0
        %1781 = vmatpush1.msra.mxu0 0.0
        %1782 = vmatprep.subr.mxu0 0.0
        %1783 = vmatpush1.msra.mxu0 0.0
        %1784 = vmatprep.subr.mxu0 0.0
        %1785 = vmatpush1.msra.mxu0 0.0
        %1786 = vmatprep.subr.mxu0 0.0
        %1787 = vmatpush1.msra.mxu0 0.0
        %1788 = vmatprep.subr.mxu0 0.0
        %1789 = vmatpush1.msra.mxu0 0.0
        %1790 = vmatprep.subr.mxu0 0.0
        %1791 = vmatpush1.msra.mxu0 0.0
        %1792 = vmatprep.subr.mxu0 0.0
        %1793 = vmatpush1.msra.mxu0 0.0
        %1794 = vmatprep.subr.mxu0 0.0
        %1795 = vmatpush1.msra.mxu0 0.0
        %1796 = vmatprep.subr.mxu0 0.0
        %1797 = vmatpush1.msra.mxu0 0.0
        %1798 = vmatprep.subr.mxu0 0.0
        %1799 = vmatpush1.msra.mxu0 0.0
        %1800 = vmatprep.subr.mxu0 0.0
        %1801 = vmatpush1.msra.mxu0 0.0
        %1802 = vmatprep.subr.mxu0 0.0
        %1803 = vmatpush1.msra.mxu0 0.0
        %1804 = vmatprep.subr.mxu0 0.0
        %1805 = vmatpush1.msra.mxu0 0.0
        %1806 = vmatprep.mubr.f32.mxu0 0.0
        %1807 = vmatmul.mubr.f32.gmra.mrb[0].mxu0 %v1740
        %v1808 = vpop.f32.mrb[0].mxu0
        %v1809 = vadd.f32 0.0, %v1808
        %v1810 = vpop.f32.mrb[0].mxu0
        %1811 = vdwg.mxu0
        %v1812 = vadd.f32 %v1736, %v1809
        %v1813 = vmul.f32 %v1812, 0.5
        %v1814 = vtanh.pop %v1813
        %v1815 = vadd.f32 %v1814, 1.0
        %v1816 = vmul.f32 %v1815, 0.5
        %v1817 = vtanh.pop %v1812
        %v1818 = vmul.f32 %v1816, %v1628
        %1820 = vrot.lane.b32.xlu0 %v1817, 32
        %v1821 = vpop.permute.xlu0 %1820
        %v1823 = vmul.f32 %v1816, %v1821
        %1825 = vrot.lane.b32.xlu0 %v1823, 32
        %v1826 = vpop.permute.xlu0 %1825
        %v1828 = vadd.f32 %v1818, %v1826
        %v1829 = vtanh.pop %v1828
        %1831 = vrot.lane.b32.xlu0 %v1829, 32
        %v1832 = vpop.permute.xlu0 %1831
        %v1834 = vmul.f32 %v1816, %v1832
        %v1835 = vsel %vm1509, %v1834, 0.0
        %1837 = vrot.lane.b32.xlu0 %v1835, 64
        %v1838 = vpop.permute.xlu0 %1837
        %1840 = vst.msk [vmem:[#allocation5 + $0x3] sm:$0x1] %vm861, %v1838
        %v1841 = vsel %vm1509, %v1834, %v1627
        %v1842 = vsel %vm1509, %v1828, %v1628
        %v1843 = vld [vmem:[#allocation2 + $0x5] sm:$0x1]
        %1845 = vrot.lane.b32.xlu0 %v1734, 64
        %v1846 = vpop.permute.xlu0 %1845
        %v1847 = vsel %vm590, %v1846, 0
        %1849 = vmatprep.subr.mxu0 0.0
        %1850 = vmatpush1.msra.mxu0 %v747
        %1851 = vmatprep.subr.mxu0 0.0
        %1852 = vmatpush1.msra.mxu0 %v748
        %1853 = vmatprep.subr.mxu0 0.0
        %1854 = vmatpush1.msra.mxu0 %v749
        %1855 = vmatprep.subr.mxu0 0.0
        %1856 = vmatpush1.msra.mxu0 %v750
        %1857 = vmatprep.subr.mxu0 0.0
        %1858 = vmatpush1.msra.mxu0 0.0
        %1859 = vmatprep.subr.mxu0 0.0
        %1860 = vmatpush1.msra.mxu0 0.0
        %1861 = vmatprep.subr.mxu0 0.0
        %1862 = vmatpush1.msra.mxu0 0.0
        %1863 = vmatprep.subr.mxu0 0.0
        %1864 = vmatpush1.msra.mxu0 0.0
        %1865 = vmatprep.subr.mxu0 0.0
        %1866 = vmatpush1.msra.mxu0 0.0
        %1867 = vmatprep.subr.mxu0 0.0
        %1868 = vmatpush1.msra.mxu0 0.0
        %1869 = vmatprep.subr.mxu0 0.0
        %1870 = vmatpush1.msra.mxu0 0.0
        %1871 = vmatprep.subr.mxu0 0.0
        %1872 = vmatpush1.msra.mxu0 0.0
        %1873 = vmatprep.subr.mxu0 0.0
        %1874 = vmatpush1.msra.mxu0 0.0
        %1875 = vmatprep.subr.mxu0 0.0
        %1876 = vmatpush1.msra.mxu0 0.0
        %1877 = vmatprep.subr.mxu0 0.0
        %1878 = vmatpush1.msra.mxu0 0.0
        %1879 = vmatprep.subr.mxu0 0.0
        %1880 = vmatpush1.msra.mxu0 0.0
        %1881 = vmatprep.subr.mxu0 0.0
        %1882 = vmatpush1.msra.mxu0 0.0
        %1883 = vmatprep.subr.mxu0 0.0
        %1884 = vmatpush1.msra.mxu0 0.0
        %1885 = vmatprep.subr.mxu0 0.0
        %1886 = vmatpush1.msra.mxu0 0.0
        %1887 = vmatprep.subr.mxu0 0.0
        %1888 = vmatpush1.msra.mxu0 0.0
        %1889 = vmatprep.subr.mxu0 0.0
        %1890 = vmatpush1.msra.mxu0 0.0
        %1891 = vmatprep.subr.mxu0 0.0
        %1892 = vmatpush1.msra.mxu0 0.0
        %1893 = vmatprep.subr.mxu0 0.0
        %1894 = vmatpush1.msra.mxu0 0.0
        %1895 = vmatprep.subr.mxu0 0.0
        %1896 = vmatpush1.msra.mxu0 0.0
        %1897 = vmatprep.subr.mxu0 0.0
        %1898 = vmatpush1.msra.mxu0 0.0
        %1899 = vmatprep.subr.mxu0 0.0
        %1900 = vmatpush1.msra.mxu0 0.0
        %1901 = vmatprep.subr.mxu0 0.0
        %1902 = vmatpush1.msra.mxu0 0.0
        %1903 = vmatprep.subr.mxu0 0.0
        %1904 = vmatpush1.msra.mxu0 0.0
        %1905 = vmatprep.subr.mxu0 0.0
        %1906 = vmatpush1.msra.mxu0 0.0
        %1907 = vmatprep.subr.mxu0 0.0
        %1908 = vmatpush1.msra.mxu0 0.0
        %1909 = vmatprep.subr.mxu0 0.0
        %1910 = vmatpush1.msra.mxu0 0.0
        %1911 = vmatprep.subr.mxu0 0.0
        %1912 = vmatpush1.msra.mxu0 0.0
        %1913 = vmatprep.mubr.f32.mxu0 0.0
        %1914 = vmatmul.mubr.f32.gmra.mrb[0].mxu0 %v1847
        %v1915 = vpop.f32.mrb[0].mxu0
        %v1916 = vadd.f32 0.0, %v1915
        %v1917 = vpop.f32.mrb[0].mxu0
        %1918 = vdwg.mxu0
        %v1919 = vadd.f32 %v1843, %v1916
        %v1920 = vmul.f32 %v1919, 0.5
        %v1921 = vtanh.pop %v1920
        %v1922 = vadd.f32 %v1921, 1.0
        %v1923 = vmul.f32 %v1922, 0.5
        %v1924 = vtanh.pop %v1919
        %v1925 = vmul.f32 %v1923, %v1735
        %1927 = vrot.lane.b32.xlu0 %v1924, 32
        %v1928 = vpop.permute.xlu0 %1927
        %v1930 = vmul.f32 %v1923, %v1928
        %1932 = vrot.lane.b32.xlu0 %v1930, 32
        %v1933 = vpop.permute.xlu0 %1932
        %v1935 = vadd.f32 %v1925, %v1933
        %v1936 = vtanh.pop %v1935
        %1938 = vrot.lane.b32.xlu0 %v1936, 32
        %v1939 = vpop.permute.xlu0 %1938
        %v1941 = vmul.f32 %v1923, %v1939
        %v1942 = vsel %vm1398, %v1941, 0.0
        %1944 = vrot.lane.b32.xlu0 %v1942, 64
        %v1945 = vpop.permute.xlu0 %1944
        %1947 = vst.msk [vmem:[#allocation4 + $0x5] sm:$0x1] %vm861, %v1945
        %v1948 = vsel %vm1398, %v1941, %v1734
        %v1949 = vsel %vm1398, %v1935, %v1735
        %v1950 = vld [vmem:[#allocation3 + $0x2] sm:$0x1]
        %1952 = vrot.lane.b32.xlu0 %v1841, 64
        %v1953 = vpop.permute.xlu0 %1952
        %v1954 = vsel %vm590, %v1953, 0
        %1956 = vmatprep.subr.mxu0 0.0
        %1957 = vmatpush1.msra.mxu0 %v751
        %1958 = vmatprep.subr.mxu0 0.0
        %1959 = vmatpush1.msra.mxu0 %v752
        %1960 = vmatprep.subr.mxu0 0.0
        %1961 = vmatpush1.msra.mxu0 %v753
        %1962 = vmatprep.subr.mxu0 0.0
        %1963 = vmatpush1.msra.mxu0 %v754
        %1964 = vmatprep.subr.mxu0 0.0
        %1965 = vmatpush1.msra.mxu0 0.0
        %1966 = vmatprep.subr.mxu0 0.0
        %1967 = vmatpush1.msra.mxu0 0.0
        %1968 = vmatprep.subr.mxu0 0.0
        %1969 = vmatpush1.msra.mxu0 0.0
        %1970 = vmatprep.subr.mxu0 0.0
        %1971 = vmatpush1.msra.mxu0 0.0
        %1972 = vmatprep.subr.mxu0 0.0
        %1973 = vmatpush1.msra.mxu0 0.0
        %1974 = vmatprep.subr.mxu0 0.0
        %1975 = vmatpush1.msra.mxu0 0.0
        %1976 = vmatprep.subr.mxu0 0.0
        %1977 = vmatpush1.msra.mxu0 0.0
        %1978 = vmatprep.subr.mxu0 0.0
        %1979 = vmatpush1.msra.mxu0 0.0
        %1980 = vmatprep.subr.mxu0 0.0
        %1981 = vmatpush1.msra.mxu0 0.0
        %1982 = vmatprep.subr.mxu0 0.0
        %1983 = vmatpush1.msra.mxu0 0.0
        %1984 = vmatprep.subr.mxu0 0.0
        %1985 = vmatpush1.msra.mxu0 0.0
        %1986 = vmatprep.subr.mxu0 0.0
        %1987 = vmatpush1.msra.mxu0 0.0
        %1988 = vmatprep.subr.mxu0 0.0
        %1989 = vmatpush1.msra.mxu0 0.0
        %1990 = vmatprep.subr.mxu0 0.0
        %1991 = vmatpush1.msra.mxu0 0.0
        %1992 = vmatprep.subr.mxu0 0.0
        %1993 = vmatpush1.msra.mxu0 0.0
        %1994 = vmatprep.subr.mxu0 0.0
        %1995 = vmatpush1.msra.mxu0 0.0
        %1996 = vmatprep.subr.mxu0 0.0
        %1997 = vmatpush1.msra.mxu0 0.0
        %1998 = vmatprep.subr.mxu0 0.0
        %1999 = vmatpush1.msra.mxu0 0.0
        %2000 = vmatprep.subr.mxu0 0.0
        %2001 = vmatpush1.msra.mxu0 0.0
        %2002 = vmatprep.subr.mxu0 0.0
        %2003 = vmatpush1.msra.mxu0 0.0
        %2004 = vmatprep.subr.mxu0 0.0
        %2005 = vmatpush1.msra.mxu0 0.0
        %2006 = vmatprep.subr.mxu0 0.0
        %2007 = vmatpush1.msra.mxu0 0.0
        %2008 = vmatprep.subr.mxu0 0.0
        %2009 = vmatpush1.msra.mxu0 0.0
        %2010 = vmatprep.subr.mxu0 0.0
        %2011 = vmatpush1.msra.mxu0 0.0
        %2012 = vmatprep.subr.mxu0 0.0
        %2013 = vmatpush1.msra.mxu0 0.0
        %2014 = vmatprep.subr.mxu0 0.0
        %2015 = vmatpush1.msra.mxu0 0.0
        %2016 = vmatprep.subr.mxu0 0.0
        %2017 = vmatpush1.msra.mxu0 0.0
        %2018 = vmatprep.subr.mxu0 0.0
        %2019 = vmatpush1.msra.mxu0 0.0
        %2020 = vmatprep.mubr.f32.mxu0 0.0
        %2021 = vmatmul.mubr.f32.gmra.mrb[0].mxu0 %v1954
        %v2022 = vpop.f32.mrb[0].mxu0
        %v2023 = vadd.f32 0.0, %v2022
        %v2024 = vpop.f32.mrb[0].mxu0
        %2025 = vdwg.mxu0
        %v2026 = vadd.f32 %v1950, %v2023
        %v2027 = vmul.f32 %v2026, 0.5
        %v2028 = vtanh.pop %v2027
        %v2029 = vadd.f32 %v2028, 1.0
        %v2030 = vmul.f32 %v2029, 0.5
        %v2031 = vtanh.pop %v2026
        %v2032 = vmul.f32 %v2030, %v1842
        %2034 = vrot.lane.b32.xlu0 %v2031, 32
        %v2035 = vpop.permute.xlu0 %2034
        %v2037 = vmul.f32 %v2030, %v2035
        %2039 = vrot.lane.b32.xlu0 %v2037, 32
        %v2040 = vpop.permute.xlu0 %2039
        %v2042 = vadd.f32 %v2032, %v2040
        %v2043 = vtanh.pop %v2042
        %2045 = vrot.lane.b32.xlu0 %v2043, 32
        %v2046 = vpop.permute.xlu0 %2045
        %v2048 = vmul.f32 %v2030, %v2046
        %v2049 = vsel %vm1287, %v2048, 0.0
        %2051 = vrot.lane.b32.xlu0 %v2049, 64
        %v2052 = vpop.permute.xlu0 %2051
        %2054 = vst.msk [vmem:[#allocation5 + $0x2] sm:$0x1] %vm861, %v2052
        %v2055 = vsel %vm1287, %v2048, %v1841
        %v2056 = vsel %vm1287, %v2042, %v1842
        %v2057 = vld [vmem:[#allocation2 + $0x6] sm:$0x1]
        %2059 = vrot.lane.b32.xlu0 %v1948, 64
        %v2060 = vpop.permute.xlu0 %2059
        %v2061 = vsel %vm590, %v2060, 0
        %2063 = vmatprep.subr.mxu0 0.0
        %2064 = vmatpush1.msra.mxu0 %v747
        %2065 = vmatprep.subr.mxu0 0.0
        %2066 = vmatpush1.msra.mxu0 %v748
        %2067 = vmatprep.subr.mxu0 0.0
        %2068 = vmatpush1.msra.mxu0 %v749
        %2069 = vmatprep.subr.mxu0 0.0
        %2070 = vmatpush1.msra.mxu0 %v750
        %2071 = vmatprep.subr.mxu0 0.0
        %2072 = vmatpush1.msra.mxu0 0.0
        %2073 = vmatprep.subr.mxu0 0.0
        %2074 = vmatpush1.msra.mxu0 0.0
        %2075 = vmatprep.subr.mxu0 0.0
        %2076 = vmatpush1.msra.mxu0 0.0
        %2077 = vmatprep.subr.mxu0 0.0
        %2078 = vmatpush1.msra.mxu0 0.0
        %2079 = vmatprep.subr.mxu0 0.0
        %2080 = vmatpush1.msra.mxu0 0.0
        %2081 = vmatprep.subr.mxu0 0.0
        %2082 = vmatpush1.msra.mxu0 0.0
        %2083 = vmatprep.subr.mxu0 0.0
        %2084 = vmatpush1.msra.mxu0 0.0
        %2085 = vmatprep.subr.mxu0 0.0
        %2086 = vmatpush1.msra.mxu0 0.0
        %2087 = vmatprep.subr.mxu0 0.0
        %2088 = vmatpush1.msra.mxu0 0.0
        %2089 = vmatprep.subr.mxu0 0.0
        %2090 = vmatpush1.msra.mxu0 0.0
        %2091 = vmatprep.subr.mxu0 0.0
        %2092 = vmatpush1.msra.mxu0 0.0
        %2093 = vmatprep.subr.mxu0 0.0
        %2094 = vmatpush1.msra.mxu0 0.0
        %2095 = vmatprep.subr.mxu0 0.0
        %2096 = vmatpush1.msra.mxu0 0.0
        %2097 = vmatprep.subr.mxu0 0.0
        %2098 = vmatpush1.msra.mxu0 0.0
        %2099 = vmatprep.subr.mxu0 0.0
        %2100 = vmatpush1.msra.mxu0 0.0
        %2101 = vmatprep.subr.mxu0 0.0
        %2102 = vmatpush1.msra.mxu0 0.0
        %2103 = vmatprep.subr.mxu0 0.0
        %2104 = vmatpush1.msra.mxu0 0.0
        %2105 = vmatprep.subr.mxu0 0.0
        %2106 = vmatpush1.msra.mxu0 0.0
        %2107 = vmatprep.subr.mxu0 0.0
        %2108 = vmatpush1.msra.mxu0 0.0
        %2109 = vmatprep.subr.mxu0 0.0
        %2110 = vmatpush1.msra.mxu0 0.0
        %2111 = vmatprep.subr.mxu0 0.0
        %2112 = vmatpush1.msra.mxu0 0.0
        %2113 = vmatprep.subr.mxu0 0.0
        %2114 = vmatpush1.msra.mxu0 0.0
        %2115 = vmatprep.subr.mxu0 0.0
        %2116 = vmatpush1.msra.mxu0 0.0
        %2117 = vmatprep.subr.mxu0 0.0
        %2118 = vmatpush1.msra.mxu0 0.0
        %2119 = vmatprep.subr.mxu0 0.0
        %2120 = vmatpush1.msra.mxu0 0.0
        %2121 = vmatprep.subr.mxu0 0.0
        %2122 = vmatpush1.msra.mxu0 0.0
        %2123 = vmatprep.subr.mxu0 0.0
        %2124 = vmatpush1.msra.mxu0 0.0
        %2125 = vmatprep.subr.mxu0 0.0
        %2126 = vmatpush1.msra.mxu0 0.0
        %2127 = vmatprep.mubr.f32.mxu0 0.0
        %2128 = vmatmul.mubr.f32.gmra.mrb[0].mxu0 %v2061
        %v2129 = vpop.f32.mrb[0].mxu0
        %v2130 = vadd.f32 0.0, %v2129
        %v2131 = vpop.f32.mrb[0].mxu0
        %2132 = vdwg.mxu0
        %v2133 = vadd.f32 %v2057, %v2130
        %v2134 = vmul.f32 %v2133, 0.5
        %v2135 = vtanh.pop %v2134
        %v2136 = vadd.f32 %v2135, 1.0
        %v2137 = vmul.f32 %v2136, 0.5
        %v2138 = vtanh.pop %v2133
        %v2139 = vmul.f32 %v2137, %v1949
        %2141 = vrot.lane.b32.xlu0 %v2138, 32
        %v2142 = vpop.permute.xlu0 %2141
        %v2144 = vmul.f32 %v2137, %v2142
        %2146 = vrot.lane.b32.xlu0 %v2144, 32
        %v2147 = vpop.permute.xlu0 %2146
        %v2149 = vadd.f32 %v2139, %v2147
        %v2150 = vtanh.pop %v2149
        %2152 = vrot.lane.b32.xlu0 %v2150, 32
        %v2153 = vpop.permute.xlu0 %2152
        %v2155 = vmul.f32 %v2137, %v2153
        %v2156 = vsel %vm1176, %v2155, 0.0
        %2158 = vrot.lane.b32.xlu0 %v2156, 64
        %v2159 = vpop.permute.xlu0 %2158
        %2161 = vst.msk [vmem:[#allocation4 + $0x6] sm:$0x1] %vm861, %v2159
        %v2162 = vsel %vm1176, %v2155, %v1948
        %v2163 = vsel %vm1176, %v2149, %v1949
        %v2164 = vld [vmem:[#allocation3 + $0x1] sm:$0x1]
        %2166 = vrot.lane.b32.xlu0 %v2055, 64
        %v2167 = vpop.permute.xlu0 %2166
        %v2168 = vsel %vm590, %v2167, 0
        %2170 = vmatprep.subr.mxu0 0.0
        %2171 = vmatpush1.msra.mxu0 %v751
        %2172 = vmatprep.subr.mxu0 0.0
        %2173 = vmatpush1.msra.mxu0 %v752
        %2174 = vmatprep.subr.mxu0 0.0
        %2175 = vmatpush1.msra.mxu0 %v753
        %2176 = vmatprep.subr.mxu0 0.0
        %2177 = vmatpush1.msra.mxu0 %v754
        %2178 = vmatprep.subr.mxu0 0.0
        %2179 = vmatpush1.msra.mxu0 0.0
        %2180 = vmatprep.subr.mxu0 0.0
        %2181 = vmatpush1.msra.mxu0 0.0
        %2182 = vmatprep.subr.mxu0 0.0
        %2183 = vmatpush1.msra.mxu0 0.0
        %2184 = vmatprep.subr.mxu0 0.0
        %2185 = vmatpush1.msra.mxu0 0.0
        %2186 = vmatprep.subr.mxu0 0.0
        %2187 = vmatpush1.msra.mxu0 0.0
        %2188 = vmatprep.subr.mxu0 0.0
        %2189 = vmatpush1.msra.mxu0 0.0
        %2190 = vmatprep.subr.mxu0 0.0
        %2191 = vmatpush1.msra.mxu0 0.0
        %2192 = vmatprep.subr.mxu0 0.0
        %2193 = vmatpush1.msra.mxu0 0.0
        %2194 = vmatprep.subr.mxu0 0.0
        %2195 = vmatpush1.msra.mxu0 0.0
        %2196 = vmatprep.subr.mxu0 0.0
        %2197 = vmatpush1.msra.mxu0 0.0
        %2198 = vmatprep.subr.mxu0 0.0
        %2199 = vmatpush1.msra.mxu0 0.0
        %2200 = vmatprep.subr.mxu0 0.0
        %2201 = vmatpush1.msra.mxu0 0.0
        %2202 = vmatprep.subr.mxu0 0.0
        %2203 = vmatpush1.msra.mxu0 0.0
        %2204 = vmatprep.subr.mxu0 0.0
        %2205 = vmatpush1.msra.mxu0 0.0
        %2206 = vmatprep.subr.mxu0 0.0
        %2207 = vmatpush1.msra.mxu0 0.0
        %2208 = vmatprep.subr.mxu0 0.0
        %2209 = vmatpush1.msra.mxu0 0.0
        %2210 = vmatprep.subr.mxu0 0.0
        %2211 = vmatpush1.msra.mxu0 0.0
        %2212 = vmatprep.subr.mxu0 0.0
        %2213 = vmatpush1.msra.mxu0 0.0
        %2214 = vmatprep.subr.mxu0 0.0
        %2215 = vmatpush1.msra.mxu0 0.0
        %2216 = vmatprep.subr.mxu0 0.0
        %2217 = vmatpush1.msra.mxu0 0.0
        %2218 = vmatprep.subr.mxu0 0.0
        %2219 = vmatpush1.msra.mxu0 0.0
        %2220 = vmatprep.subr.mxu0 0.0
        %2221 = vmatpush1.msra.mxu0 0.0
        %2222 = vmatprep.subr.mxu0 0.0
        %2223 = vmatpush1.msra.mxu0 0.0
        %2224 = vmatprep.subr.mxu0 0.0
        %2225 = vmatpush1.msra.mxu0 0.0
        %2226 = vmatprep.subr.mxu0 0.0
        %2227 = vmatpush1.msra.mxu0 0.0
        %2228 = vmatprep.subr.mxu0 0.0
        %2229 = vmatpush1.msra.mxu0 0.0
        %2230 = vmatprep.subr.mxu0 0.0
        %2231 = vmatpush1.msra.mxu0 0.0
        %2232 = vmatprep.subr.mxu0 0.0
        %2233 = vmatpush1.msra.mxu0 0.0
        %2234 = vmatprep.mubr.f32.mxu0 0.0
        %2235 = vmatmul.mubr.f32.gmra.mrb[0].mxu0 %v2168
        %v2236 = vpop.f32.mrb[0].mxu0
        %v2237 = vadd.f32 0.0, %v2236
        %v2238 = vpop.f32.mrb[0].mxu0
        %2239 = vdwg.mxu0
        %v2240 = vadd.f32 %v2164, %v2237
        %v2241 = vmul.f32 %v2240, 0.5
        %v2242 = vtanh.pop %v2241
        %v2243 = vadd.f32 %v2242, 1.0
        %v2244 = vmul.f32 %v2243, 0.5
        %v2245 = vtanh.pop %v2240
        %v2246 = vmul.f32 %v2244, %v2056
        %2248 = vrot.lane.b32.xlu0 %v2245, 32
        %v2249 = vpop.permute.xlu0 %2248
        %v2251 = vmul.f32 %v2244, %v2249
        %2253 = vrot.lane.b32.xlu0 %v2251, 32
        %v2254 = vpop.permute.xlu0 %2253
        %v2256 = vadd.f32 %v2246, %v2254
        %v2257 = vtanh.pop %v2256
        %2259 = vrot.lane.b32.xlu0 %v2257, 32
        %v2260 = vpop.permute.xlu0 %2259
        %v2262 = vmul.f32 %v2244, %v2260
        %v2263 = vsel %vm1068, %v2262, 0.0
        %2265 = vrot.lane.b32.xlu0 %v2263, 64
        %v2266 = vpop.permute.xlu0 %2265
        %2268 = vst.msk [vmem:[#allocation5 + $0x1] sm:$0x1] %vm861, %v2266
        %v2269 = vsel %vm1068, %v2262, %v2055
        %v2270 = vsel %vm1068, %v2256, %v2056
        %v2271 = vld [vmem:[#allocation2 + $0x7] sm:$0x1]
        %2273 = vrot.lane.b32.xlu0 %v2162, 64
        %v2274 = vpop.permute.xlu0 %2273
        %v2275 = vsel %vm590, %v2274, 0
        %2277 = vmatprep.subr.mxu0 0.0
        %2278 = vmatpush1.msra.mxu0 %v747
        %2279 = vmatprep.subr.mxu0 0.0
        %2280 = vmatpush1.msra.mxu0 %v748
        %2281 = vmatprep.subr.mxu0 0.0
        %2282 = vmatpush1.msra.mxu0 %v749
        %2283 = vmatprep.subr.mxu0 0.0
        %2284 = vmatpush1.msra.mxu0 %v750
        %2285 = vmatprep.subr.mxu0 0.0
        %2286 = vmatpush1.msra.mxu0 0.0
        %2287 = vmatprep.subr.mxu0 0.0
        %2288 = vmatpush1.msra.mxu0 0.0
        %2289 = vmatprep.subr.mxu0 0.0
        %2290 = vmatpush1.msra.mxu0 0.0
        %2291 = vmatprep.subr.mxu0 0.0
        %2292 = vmatpush1.msra.mxu0 0.0
        %2293 = vmatprep.subr.mxu0 0.0
        %2294 = vmatpush1.msra.mxu0 0.0
        %2295 = vmatprep.subr.mxu0 0.0
        %2296 = vmatpush1.msra.mxu0 0.0
        %2297 = vmatprep.subr.mxu0 0.0
        %2298 = vmatpush1.msra.mxu0 0.0
        %2299 = vmatprep.subr.mxu0 0.0
        %2300 = vmatpush1.msra.mxu0 0.0
        %2301 = vmatprep.subr.mxu0 0.0
        %2302 = vmatpush1.msra.mxu0 0.0
        %2303 = vmatprep.subr.mxu0 0.0
        %2304 = vmatpush1.msra.mxu0 0.0
        %2305 = vmatprep.subr.mxu0 0.0
        %2306 = vmatpush1.msra.mxu0 0.0
        %2307 = vmatprep.subr.mxu0 0.0
        %2308 = vmatpush1.msra.mxu0 0.0
        %2309 = vmatprep.subr.mxu0 0.0
        %2310 = vmatpush1.msra.mxu0 0.0
        %2311 = vmatprep.subr.mxu0 0.0
        %2312 = vmatpush1.msra.mxu0 0.0
        %2313 = vmatprep.subr.mxu0 0.0
        %2314 = vmatpush1.msra.mxu0 0.0
        %2315 = vmatprep.subr.mxu0 0.0
        %2316 = vmatpush1.msra.mxu0 0.0
        %2317 = vmatprep.subr.mxu0 0.0
        %2318 = vmatpush1.msra.mxu0 0.0
        %2319 = vmatprep.subr.mxu0 0.0
        %2320 = vmatpush1.msra.mxu0 0.0
        %2321 = vmatprep.subr.mxu0 0.0
        %2322 = vmatpush1.msra.mxu0 0.0
        %2323 = vmatprep.subr.mxu0 0.0
        %2324 = vmatpush1.msra.mxu0 0.0
        %2325 = vmatprep.subr.mxu0 0.0
        %2326 = vmatpush1.msra.mxu0 0.0
        %2327 = vmatprep.subr.mxu0 0.0
        %2328 = vmatpush1.msra.mxu0 0.0
        %2329 = vmatprep.subr.mxu0 0.0
        %2330 = vmatpush1.msra.mxu0 0.0
        %2331 = vmatprep.subr.mxu0 0.0
        %2332 = vmatpush1.msra.mxu0 0.0
        %2333 = vmatprep.subr.mxu0 0.0
        %2334 = vmatpush1.msra.mxu0 0.0
        %2335 = vmatprep.subr.mxu0 0.0
        %2336 = vmatpush1.msra.mxu0 0.0
        %2337 = vmatprep.subr.mxu0 0.0
        %2338 = vmatpush1.msra.mxu0 0.0
        %2339 = vmatprep.subr.mxu0 0.0
        %2340 = vmatpush1.msra.mxu0 0.0
        %2341 = vmatprep.mubr.f32.mxu0 0.0
        %2342 = vmatmul.mubr.f32.gmra.mrb[0].mxu0 %v2275
        %v2343 = vpop.f32.mrb[0].mxu0
        %v2344 = vadd.f32 0.0, %v2343
        %v2345 = vpop.f32.mrb[0].mxu0
        %2346 = vdwg.mxu0
        %v2347 = vadd.f32 %v2271, %v2344
        %v2348 = vmul.f32 %v2347, 0.5
        %v2349 = vtanh.pop %v2348
        %v2350 = vadd.f32 %v2349, 1.0
        %v2351 = vmul.f32 %v2350, 0.5
        %v2352 = vtanh.pop %v2347
        %v2353 = vmul.f32 %v2351, %v2163
        %2355 = vrot.lane.b32.xlu0 %v2352, 32
        %v2356 = vpop.permute.xlu0 %2355
        %v2358 = vmul.f32 %v2351, %v2356
        %2360 = vrot.lane.b32.xlu0 %v2358, 32
        %v2361 = vpop.permute.xlu0 %2360
        %v2363 = vadd.f32 %v2353, %v2361
        %v2364 = vtanh.pop %v2363
        %2366 = vrot.lane.b32.xlu0 %v2364, 32
        %v2367 = vpop.permute.xlu0 %2366
        %v2369 = vmul.f32 %v2351, %v2367
        %v2370 = vsel %vm961, %v2369, 0.0
        %2372 = vrot.lane.b32.xlu0 %v2370, 64
        %v2373 = vpop.permute.xlu0 %2372
        %2375 = vst.msk [vmem:[#allocation4 + $0x7] sm:$0x1] %vm861, %v2373
        %v2376 = vsel %vm961, %v2369, %v2162
        %v2377 = vld [vmem:[#allocation3] sm:$0x1]
        %2379 = vrot.lane.b32.xlu0 %v2269, 64
        %v2380 = vpop.permute.xlu0 %2379
        %v2381 = vsel %vm590, %v2380, 0
        %2383 = vmatprep.subr.mxu0 0.0
        %2384 = vmatpush1.msra.mxu0 %v751
        %2385 = vmatprep.subr.mxu0 0.0
        %2386 = vmatpush1.msra.mxu0 %v752
        %2387 = vmatprep.subr.mxu0 0.0
        %2388 = vmatpush1.msra.mxu0 %v753
        %2389 = vmatprep.subr.mxu0 0.0
        %2390 = vmatpush1.msra.mxu0 %v754
        %2391 = vmatprep.subr.mxu0 0.0
        %2392 = vmatpush1.msra.mxu0 0.0
        %2393 = vmatprep.subr.mxu0 0.0
        %2394 = vmatpush1.msra.mxu0 0.0
        %2395 = vmatprep.subr.mxu0 0.0
        %2396 = vmatpush1.msra.mxu0 0.0
        %2397 = vmatprep.subr.mxu0 0.0
        %2398 = vmatpush1.msra.mxu0 0.0
        %2399 = vmatprep.subr.mxu0 0.0
        %2400 = vmatpush1.msra.mxu0 0.0
        %2401 = vmatprep.subr.mxu0 0.0
        %2402 = vmatpush1.msra.mxu0 0.0
        %2403 = vmatprep.subr.mxu0 0.0
        %2404 = vmatpush1.msra.mxu0 0.0
        %2405 = vmatprep.subr.mxu0 0.0
        %2406 = vmatpush1.msra.mxu0 0.0
        %2407 = vmatprep.subr.mxu0 0.0
        %2408 = vmatpush1.msra.mxu0 0.0
        %2409 = vmatprep.subr.mxu0 0.0
        %2410 = vmatpush1.msra.mxu0 0.0
        %2411 = vmatprep.subr.mxu0 0.0
        %2412 = vmatpush1.msra.mxu0 0.0
        %2413 = vmatprep.subr.mxu0 0.0
        %2414 = vmatpush1.msra.mxu0 0.0
        %2415 = vmatprep.subr.mxu0 0.0
        %2416 = vmatpush1.msra.mxu0 0.0
        %2417 = vmatprep.subr.mxu0 0.0
        %2418 = vmatpush1.msra.mxu0 0.0
        %2419 = vmatprep.subr.mxu0 0.0
        %2420 = vmatpush1.msra.mxu0 0.0
        %2421 = vmatprep.subr.mxu0 0.0
        %2422 = vmatpush1.msra.mxu0 0.0
        %2423 = vmatprep.subr.mxu0 0.0
        %2424 = vmatpush1.msra.mxu0 0.0
        %2425 = vmatprep.subr.mxu0 0.0
        %2426 = vmatpush1.msra.mxu0 0.0
        %2427 = vmatprep.subr.mxu0 0.0
        %2428 = vmatpush1.msra.mxu0 0.0
        %2429 = vmatprep.subr.mxu0 0.0
        %2430 = vmatpush1.msra.mxu0 0.0
        %2431 = vmatprep.subr.mxu0 0.0
        %2432 = vmatpush1.msra.mxu0 0.0
        %2433 = vmatprep.subr.mxu0 0.0
        %2434 = vmatpush1.msra.mxu0 0.0
        %2435 = vmatprep.subr.mxu0 0.0
        %2436 = vmatpush1.msra.mxu0 0.0
        %2437 = vmatprep.subr.mxu0 0.0
        %2438 = vmatpush1.msra.mxu0 0.0
        %2439 = vmatprep.subr.mxu0 0.0
        %2440 = vmatpush1.msra.mxu0 0.0
        %2441 = vmatprep.subr.mxu0 0.0
        %2442 = vmatpush1.msra.mxu0 0.0
        %2443 = vmatprep.subr.mxu0 0.0
        %2444 = vmatpush1.msra.mxu0 0.0
        %2445 = vmatprep.subr.mxu0 0.0
        %2446 = vmatpush1.msra.mxu0 0.0
        %2447 = vmatprep.mubr.f32.mxu0 0.0
        %2448 = vmatmul.mubr.f32.gmra.mrb[0].mxu0 %v2381
        %v2449 = vpop.f32.mrb[0].mxu0
        %v2450 = vadd.f32 0.0, %v2449
        %v2451 = vpop.f32.mrb[0].mxu0
        %2452 = vdwg.mxu0
        %v2453 = vadd.f32 %v2377, %v2450
        %v2454 = vmul.f32 %v2453, 0.5
        %v2455 = vtanh.pop %v2454
        %v2456 = vadd.f32 %v2455, 1.0
        %v2457 = vmul.f32 %v2456, 0.5
        %v2458 = vtanh.pop %v2453
        %v2459 = vmul.f32 %v2457, %v2270
        %2461 = vrot.lane.b32.xlu0 %v2458, 32
        %v2462 = vpop.permute.xlu0 %2461
        %v2464 = vmul.f32 %v2457, %v2462
        %2466 = vrot.lane.b32.xlu0 %v2464, 32
        %v2467 = vpop.permute.xlu0 %2466
        %v2469 = vadd.f32 %v2459, %v2467
        %v2470 = vtanh.pop %v2469
        %2472 = vrot.lane.b32.xlu0 %v2470, 32
        %v2473 = vpop.permute.xlu0 %2472
        %v2475 = vmul.f32 %v2457, %v2473
        %v2476 = vsel %vm855, %v2475, 0.0
        %2478 = vrot.lane.b32.xlu0 %v2476, 64
        %v2479 = vpop.permute.xlu0 %2478
        %2481 = vst.msk [vmem:[#allocation5] sm:$0x1] %vm861, %v2479
        %v2482 = vsel %vm855, %v2475, %v2269
        %v2483 = vld [vmem:[#allocation4] sm:$0xff]
        %v2484 = vld [vmem:[#allocation5] sm:$0xff]
        %v2485 = vld [vmem:[%s9] sm:$0xff]
        %v2486 = vld [vmem:[%s9 + $0x8] sm:$0xff]
        %v2487 = vld [vmem:[%s9 + $0x10] sm:$0xff]
        %v2488 = vld [vmem:[%s9 + $0x18] sm:$0xff]
        %v2489 = vld [vmem:[%s9 + $0x20] sm:$0xff]
        %v2490 = vld [vmem:[%s9 + $0x28] sm:$0xff]
        %v2491 = vld [vmem:[%s9 + $0x30] sm:$0xff]
        %v2492 = vld [vmem:[%s9 + $0x38] sm:$0xff]
        %v2494 = vsel %vm590, %v2484, 0
        %2496 = vmatprep.subr.mxu0 0.0
        %2497 = vmatpush1.msra.mxu0 %v2489
        %2498 = vmatprep.subr.mxu0 0.0
        %2499 = vmatpush1.msra.mxu0 %v2490
        %2500 = vmatprep.subr.mxu0 0.0
        %2501 = vmatpush1.msra.mxu0 %v2491
        %2502 = vmatprep.subr.mxu0 0.0
        %2503 = vmatpush1.msra.mxu0 %v2492
        %2504 = vmatprep.subr.mxu0 0.0
        %2505 = vmatpush1.msra.mxu0 0.0
        %2506 = vmatprep.subr.mxu0 0.0
        %2507 = vmatpush1.msra.mxu0 0.0
        %2508 = vmatprep.subr.mxu0 0.0
        %2509 = vmatpush1.msra.mxu0 0.0
        %2510 = vmatprep.subr.mxu0 0.0
        %2511 = vmatpush1.msra.mxu0 0.0
        %2512 = vmatprep.subr.mxu0 0.0
        %2513 = vmatpush1.msra.mxu0 0.0
        %2514 = vmatprep.subr.mxu0 0.0
        %2515 = vmatpush1.msra.mxu0 0.0
        %2516 = vmatprep.subr.mxu0 0.0
        %2517 = vmatpush1.msra.mxu0 0.0
        %2518 = vmatprep.subr.mxu0 0.0
        %2519 = vmatpush1.msra.mxu0 0.0
        %2520 = vmatprep.subr.mxu0 0.0
        %2521 = vmatpush1.msra.mxu0 0.0
        %2522 = vmatprep.subr.mxu0 0.0
        %2523 = vmatpush1.msra.mxu0 0.0
        %2524 = vmatprep.subr.mxu0 0.0
        %2525 = vmatpush1.msra.mxu0 0.0
        %2526 = vmatprep.subr.mxu0 0.0
        %2527 = vmatpush1.msra.mxu0 0.0
        %2528 = vmatprep.subr.mxu0 0.0
        %2529 = vmatpush1.msra.mxu0 0.0
        %2530 = vmatprep.subr.mxu0 0.0
        %2531 = vmatpush1.msra.mxu0 0.0
        %2532 = vmatprep.subr.mxu0 0.0
        %2533 = vmatpush1.msra.mxu0 0.0
        %2534 = vmatprep.subr.mxu0 0.0
        %2535 = vmatpush1.msra.mxu0 0.0
        %2536 = vmatprep.subr.mxu0 0.0
        %2537 = vmatpush1.msra.mxu0 0.0
        %2538 = vmatprep.subr.mxu0 0.0
        %2539 = vmatpush1.msra.mxu0 0.0
        %2540 = vmatprep.subr.mxu0 0.0
        %2541 = vmatpush1.msra.mxu0 0.0
        %2542 = vmatprep.subr.mxu0 0.0
        %2543 = vmatpush1.msra.mxu0 0.0
        %2544 = vmatprep.subr.mxu0 0.0
        %2545 = vmatpush1.msra.mxu0 0.0
        %2546 = vmatprep.subr.mxu0 0.0
        %2547 = vmatpush1.msra.mxu0 0.0
        %2548 = vmatprep.subr.mxu0 0.0
        %2549 = vmatpush1.msra.mxu0 0.0
        %2550 = vmatprep.subr.mxu0 0.0
        %2551 = vmatpush1.msra.mxu0 0.0
        %2552 = vmatprep.subr.mxu0 0.0
        %2553 = vmatpush1.msra.mxu0 0.0
        %2554 = vmatprep.subr.mxu0 0.0
        %2555 = vmatpush1.msra.mxu0 0.0
        %2556 = vmatprep.subr.mxu0 0.0
        %2557 = vmatpush1.msra.mxu0 0.0
        %2558 = vmatprep.subr.mxu0 0.0
        %2559 = vmatpush1.msra.mxu0 0.0
        %2560 = vmatprep.mubr.f32.mxu0 0.0
        %2561 = vmatmul.mubr.f32.gmra.mrb[0].mxu0 %v2494
        %v2562 = vpop.f32.mrb[0].mxu0
        %v2563 = vadd.f32 0.0, %v2562
        %v2564 = vpop.f32.mrb[0].mxu0
        %2565 = vdwg.mxu0
        %v2567 = vsel %vm590, %v2483, 0
        %2569 = vmatprep.subr.mxu0 0.0
        %2570 = vmatpush1.msra.mxu0 %v2485
        %2571 = vmatprep.subr.mxu0 0.0
        %2572 = vmatpush1.msra.mxu0 %v2486
        %2573 = vmatprep.subr.mxu0 0.0
        %2574 = vmatpush1.msra.mxu0 %v2487
        %2575 = vmatprep.subr.mxu0 0.0
        %2576 = vmatpush1.msra.mxu0 %v2488
        %2577 = vmatprep.subr.mxu0 0.0
        %2578 = vmatpush1.msra.mxu0 0.0
        %2579 = vmatprep.subr.mxu0 0.0
        %2580 = vmatpush1.msra.mxu0 0.0
        %2581 = vmatprep.subr.mxu0 0.0
        %2582 = vmatpush1.msra.mxu0 0.0
        %2583 = vmatprep.subr.mxu0 0.0
        %2584 = vmatpush1.msra.mxu0 0.0
        %2585 = vmatprep.subr.mxu0 0.0
        %2586 = vmatpush1.msra.mxu0 0.0
        %2587 = vmatprep.subr.mxu0 0.0
        %2588 = vmatpush1.msra.mxu0 0.0
        %2589 = vmatprep.subr.mxu0 0.0
        %2590 = vmatpush1.msra.mxu0 0.0
        %2591 = vmatprep.subr.mxu0 0.0
        %2592 = vmatpush1.msra.mxu0 0.0
        %2593 = vmatprep.subr.mxu0 0.0
        %2594 = vmatpush1.msra.mxu0 0.0
        %2595 = vmatprep.subr.mxu0 0.0
        %2596 = vmatpush1.msra.mxu0 0.0
        %2597 = vmatprep.subr.mxu0 0.0
        %2598 = vmatpush1.msra.mxu0 0.0
        %2599 = vmatprep.subr.mxu0 0.0
        %2600 = vmatpush1.msra.mxu0 0.0
        %2601 = vmatprep.subr.mxu0 0.0
        %2602 = vmatpush1.msra.mxu0 0.0
        %2603 = vmatprep.subr.mxu0 0.0
        %2604 = vmatpush1.msra.mxu0 0.0
        %2605 = vmatprep.subr.mxu0 0.0
        %2606 = vmatpush1.msra.mxu0 0.0
        %2607 = vmatprep.subr.mxu0 0.0
        %2608 = vmatpush1.msra.mxu0 0.0
        %2609 = vmatprep.subr.mxu0 0.0
        %2610 = vmatpush1.msra.mxu0 0.0
        %2611 = vmatprep.subr.mxu0 0.0
        %2612 = vmatpush1.msra.mxu0 0.0
        %2613 = vmatprep.subr.mxu0 0.0
        %2614 = vmatpush1.msra.mxu0 0.0
        %2615 = vmatprep.subr.mxu0 0.0
        %2616 = vmatpush1.msra.mxu0 0.0
        %2617 = vmatprep.subr.mxu0 0.0
        %2618 = vmatpush1.msra.mxu0 0.0
        %2619 = vmatprep.subr.mxu0 0.0
        %2620 = vmatpush1.msra.mxu0 0.0
        %2621 = vmatprep.subr.mxu0 0.0
        %2622 = vmatpush1.msra.mxu0 0.0
        %2623 = vmatprep.subr.mxu0 0.0
        %2624 = vmatpush1.msra.mxu0 0.0
        %2625 = vmatprep.subr.mxu0 0.0
        %2626 = vmatpush1.msra.mxu0 0.0
        %2627 = vmatprep.subr.mxu0 0.0
        %2628 = vmatpush1.msra.mxu0 0.0
        %2629 = vmatprep.subr.mxu0 0.0
        %2630 = vmatpush1.msra.mxu0 0.0
        %2631 = vmatprep.subr.mxu0 0.0
        %2632 = vmatpush1.msra.mxu0 0.0
        %2633 = vmatprep.mubr.f32.mxu0 0.0
        %2634 = vmatmul.mubr.f32.gmra.mrb[0].mxu0 %v2567
        %v2635 = vpop.f32.mrb[0].mxu0
        %v2636 = vadd.f32 %v2563, %v2635
        %v2637 = vpop.f32.mrb[0].mxu0
        %2638 = vdwg.mxu0
        %v2639 = vld [vmem:[%s11] sm:$0xff]
        %v2640 = vld [vmem:[%s11 + $0x8] sm:$0xff]
        %v2641 = vld [vmem:[%s11 + $0x10] sm:$0xff]
        %v2642 = vld [vmem:[%s11 + $0x18] sm:$0xff]
        %v2643 = vld [vmem:[%s11 + $0x20] sm:$0xff]
        %v2644 = vld [vmem:[%s11 + $0x28] sm:$0xff]
        %v2645 = vld [vmem:[%s11 + $0x30] sm:$0xff]
        %v2646 = vld [vmem:[%s11 + $0x38] sm:$0xff]
        %v2647 = vld [vmem:[%s2] sm:$0x1]
        %v2648 = vld [vmem:[%s10] sm:$0xff]
        %v2649 = vld [vmem:[%s10 + $0x8] sm:$0xff]
        %v2650 = vld [vmem:[%s10 + $0x10] sm:$0xff]
        %v2651 = vld [vmem:[%s10 + $0x18] sm:$0xff]
        %v2653 = vsel %vm590, %v2647, 0
        %2655 = vmatprep.subr.mxu0 0.0
        %2656 = vmatpush1.msra.mxu0 %v2648
        %2657 = vmatprep.subr.mxu0 0.0
        %2658 = vmatpush1.msra.mxu0 %v2649
        %2659 = vmatprep.subr.mxu0 0.0
        %2660 = vmatpush1.msra.mxu0 %v2650
        %2661 = vmatprep.subr.mxu0 0.0
        %2662 = vmatpush1.msra.mxu0 %v2651
        %2663 = vmatprep.subr.mxu0 0.0
        %2664 = vmatpush1.msra.mxu0 0.0
        %2665 = vmatprep.subr.mxu0 0.0
        %2666 = vmatpush1.msra.mxu0 0.0
        %2667 = vmatprep.subr.mxu0 0.0
        %2668 = vmatpush1.msra.mxu0 0.0
        %2669 = vmatprep.subr.mxu0 0.0
        %2670 = vmatpush1.msra.mxu0 0.0
        %2671 = vmatprep.subr.mxu0 0.0
        %2672 = vmatpush1.msra.mxu0 0.0
        %2673 = vmatprep.subr.mxu0 0.0
        %2674 = vmatpush1.msra.mxu0 0.0
        %2675 = vmatprep.subr.mxu0 0.0
        %2676 = vmatpush1.msra.mxu0 0.0
        %2677 = vmatprep.subr.mxu0 0.0
        %2678 = vmatpush1.msra.mxu0 0.0
        %2679 = vmatprep.subr.mxu0 0.0
        %2680 = vmatpush1.msra.mxu0 0.0
        %2681 = vmatprep.subr.mxu0 0.0
        %2682 = vmatpush1.msra.mxu0 0.0
        %2683 = vmatprep.subr.mxu0 0.0
        %2684 = vmatpush1.msra.mxu0 0.0
        %2685 = vmatprep.subr.mxu0 0.0
        %2686 = vmatpush1.msra.mxu0 0.0
        %2687 = vmatprep.subr.mxu0 0.0
        %2688 = vmatpush1.msra.mxu0 0.0
        %2689 = vmatprep.subr.mxu0 0.0
        %2690 = vmatpush1.msra.mxu0 0.0
        %2691 = vmatprep.subr.mxu0 0.0
        %2692 = vmatpush1.msra.mxu0 0.0
        %2693 = vmatprep.subr.mxu0 0.0
        %2694 = vmatpush1.msra.mxu0 0.0
        %2695 = vmatprep.subr.mxu0 0.0
        %2696 = vmatpush1.msra.mxu0 0.0
        %2697 = vmatprep.subr.mxu0 0.0
        %2698 = vmatpush1.msra.mxu0 0.0
        %2699 = vmatprep.subr.mxu0 0.0
        %2700 = vmatpush1.msra.mxu0 0.0
        %2701 = vmatprep.subr.mxu0 0.0
        %2702 = vmatpush1.msra.mxu0 0.0
        %2703 = vmatprep.subr.mxu0 0.0
        %2704 = vmatpush1.msra.mxu0 0.0
        %2705 = vmatprep.subr.mxu0 0.0
        %2706 = vmatpush1.msra.mxu0 0.0
        %2707 = vmatprep.subr.mxu0 0.0
        %2708 = vmatpush1.msra.mxu0 0.0
        %2709 = vmatprep.subr.mxu0 0.0
        %2710 = vmatpush1.msra.mxu0 0.0
        %2711 = vmatprep.subr.mxu0 0.0
        %2712 = vmatpush1.msra.mxu0 0.0
        %2713 = vmatprep.subr.mxu0 0.0
        %2714 = vmatpush1.msra.mxu0 0.0
        %2715 = vmatprep.subr.mxu0 0.0
        %2716 = vmatpush1.msra.mxu0 0.0
        %2717 = vmatprep.subr.mxu0 0.0
        %2718 = vmatpush1.msra.mxu0 0.0
        %2719 = vmatprep.mubr.f32.mxu0 0.0
        %2720 = vmatmul.mubr.f32.gmra.mrb[0].mxu0 %v2653
        %v2721 = vpop.f32.mrb[0].mxu0
        %v2722 = vadd.f32 0.0, %v2721
        %v2723 = vpop.f32.mrb[0].mxu0
        %2724 = vdwg.mxu0
        %v2725 = vld [vmem:[%s12] sm:$0xff]
        %v2726 = vld [vmem:[%s12 + $0x8] sm:$0xff]
        %v2727 = vld [vmem:[%s12 + $0x10] sm:$0xff]
        %v2728 = vld [vmem:[%s12 + $0x18] sm:$0xff]
        %v2730 = vsel %vm590, %v2722, 0
        %2732 = vmatprep.subr.mxu0 0.0
        %2733 = vmatpush1.msra.mxu0 %v2725
        %2734 = vmatprep.subr.mxu0 0.0
        %2735 = vmatpush1.msra.mxu0 %v2726
        %2736 = vmatprep.subr.mxu0 0.0
        %2737 = vmatpush1.msra.mxu0 %v2727
        %2738 = vmatprep.subr.mxu0 0.0
        %2739 = vmatpush1.msra.mxu0 %v2728
        %2740 = vmatprep.subr.mxu0 0.0
        %2741 = vmatpush1.msra.mxu0 0.0
        %2742 = vmatprep.subr.mxu0 0.0
        %2743 = vmatpush1.msra.mxu0 0.0
        %2744 = vmatprep.subr.mxu0 0.0
        %2745 = vmatpush1.msra.mxu0 0.0
        %2746 = vmatprep.subr.mxu0 0.0
        %2747 = vmatpush1.msra.mxu0 0.0
        %2748 = vmatprep.subr.mxu0 0.0
        %2749 = vmatpush1.msra.mxu0 0.0
        %2750 = vmatprep.subr.mxu0 0.0
        %2751 = vmatpush1.msra.mxu0 0.0
        %2752 = vmatprep.subr.mxu0 0.0
        %2753 = vmatpush1.msra.mxu0 0.0
        %2754 = vmatprep.subr.mxu0 0.0
        %2755 = vmatpush1.msra.mxu0 0.0
        %2756 = vmatprep.subr.mxu0 0.0
        %2757 = vmatpush1.msra.mxu0 0.0
        %2758 = vmatprep.subr.mxu0 0.0
        %2759 = vmatpush1.msra.mxu0 0.0
        %2760 = vmatprep.subr.mxu0 0.0
        %2761 = vmatpush1.msra.mxu0 0.0
        %2762 = vmatprep.subr.mxu0 0.0
        %2763 = vmatpush1.msra.mxu0 0.0
        %2764 = vmatprep.subr.mxu0 0.0
        %2765 = vmatpush1.msra.mxu0 0.0
        %2766 = vmatprep.subr.mxu0 0.0
        %2767 = vmatpush1.msra.mxu0 0.0
        %2768 = vmatprep.subr.mxu0 0.0
        %2769 = vmatpush1.msra.mxu0 0.0
        %2770 = vmatprep.subr.mxu0 0.0
        %2771 = vmatpush1.msra.mxu0 0.0
        %2772 = vmatprep.subr.mxu0 0.0
        %2773 = vmatpush1.msra.mxu0 0.0
        %2774 = vmatprep.subr.mxu0 0.0
        %2775 = vmatpush1.msra.mxu0 0.0
        %2776 = vmatprep.subr.mxu0 0.0
        %2777 = vmatpush1.msra.mxu0 0.0
        %2778 = vmatprep.subr.mxu0 0.0
        %2779 = vmatpush1.msra.mxu0 0.0
        %2780 = vmatprep.subr.mxu0 0.0
        %2781 = vmatpush1.msra.mxu0 0.0
        %2782 = vmatprep.subr.mxu0 0.0
        %2783 = vmatpush1.msra.mxu0 0.0
        %2784 = vmatprep.subr.mxu0 0.0
        %2785 = vmatpush1.msra.mxu0 0.0
        %2786 = vmatprep.subr.mxu0 0.0
        %2787 = vmatpush1.msra.mxu0 0.0
        %2788 = vmatprep.subr.mxu0 0.0
        %2789 = vmatpush1.msra.mxu0 0.0
        %2790 = vmatprep.subr.mxu0 0.0
        %2791 = vmatpush1.msra.mxu0 0.0
        %2792 = vmatprep.subr.mxu0 0.0
        %2793 = vmatpush1.msra.mxu0 0.0
        %2794 = vmatprep.subr.mxu0 0.0
        %2795 = vmatpush1.msra.mxu0 0.0
        %2796 = vmatprep.mubr.f32.mxu0 0.0
        %2797 = vmatmul.mubr.f32.gmra.mrb[0].mxu0 %v2730
        %v2798 = vpop.f32.mrb[0].mxu0
        %v2799 = vadd.f32 0.0, %v2798
        %v2800 = vpop.f32.mrb[0].mxu0
        %2801 = vdwg.mxu0
        %v2802 = vlaneseq
        %v2803 = vshrl.u32 %v2802, 7
        %v2804 = vstv %s577
        %vm2805 = vcmp.lt.s32.totalorder %v2803, %v2804
        %v2806 = vsel %vm2805, 1, 0
        %v2807 = vcvt.s32.f32 %v2806
        %v2808 = vlaneseq
        %v2809 = vshrl.u32 %v2808, 7
        %v2810 = vsub.s32 0, %v2809
        %v2811 = vrot.slane %v2799, %v2810
        %v2812 = vmul.f32 %v2811, %v2807
        %vm2813 = vcmask 523264
        %v2815 = vsel %vm2813, %v2636, 0
        %2817 = vmatprep.subr.mxu0 0.0
        %2818 = vmatpush1.msra.mxu0 %v2639
        %2819 = vmatprep.subr.mxu0 0.0
        %2820 = vmatpush1.msra.mxu0 %v2640
        %2821 = vmatprep.subr.mxu0 0.0
        %2822 = vmatpush1.msra.mxu0 %v2641
        %2823 = vmatprep.subr.mxu0 0.0
        %2824 = vmatpush1.msra.mxu0 %v2642
        %2825 = vmatprep.subr.mxu0 0.0
        %2826 = vmatpush1.msra.mxu0 %v2643
        %2827 = vmatprep.subr.mxu0 0.0
        %2828 = vmatpush1.msra.mxu0 %v2644
        %2829 = vmatprep.subr.mxu0 0.0
        %2830 = vmatpush1.msra.mxu0 %v2645
        %2831 = vmatprep.subr.mxu0 0.0
        %2832 = vmatpush1.msra.mxu0 %v2646
        %2833 = vmatprep.subr.mxu0 0.0
        %2834 = vmatpush1.msra.mxu0 0.0
        %2835 = vmatprep.subr.mxu0 0.0
        %2836 = vmatpush1.msra.mxu0 0.0
        %2837 = vmatprep.subr.mxu0 0.0
        %2838 = vmatpush1.msra.mxu0 0.0
        %2839 = vmatprep.subr.mxu0 0.0
        %2840 = vmatpush1.msra.mxu0 0.0
        %2841 = vmatprep.subr.mxu0 0.0
        %2842 = vmatpush1.msra.mxu0 0.0
        %2843 = vmatprep.subr.mxu0 0.0
        %2844 = vmatpush1.msra.mxu0 0.0
        %2845 = vmatprep.subr.mxu0 0.0
        %2846 = vmatpush1.msra.mxu0 0.0
        %2847 = vmatprep.subr.mxu0 0.0
        %2848 = vmatpush1.msra.mxu0 0.0
        %2849 = vmatprep.subr.mxu0 0.0
        %2850 = vmatpush1.msra.mxu0 0.0
        %2851 = vmatprep.subr.mxu0 0.0
        %2852 = vmatpush1.msra.mxu0 0.0
        %2853 = vmatprep.subr.mxu0 0.0
        %2854 = vmatpush1.msra.mxu0 0.0
        %2855 = vmatprep.subr.mxu0 0.0
        %2856 = vmatpush1.msra.mxu0 0.0
        %2857 = vmatprep.subr.mxu0 0.0
        %2858 = vmatpush1.msra.mxu0 0.0
        %2859 = vmatprep.subr.mxu0 0.0
        %2860 = vmatpush1.msra.mxu0 0.0
        %2861 = vmatprep.subr.mxu0 0.0
        %2862 = vmatpush1.msra.mxu0 0.0
        %2863 = vmatprep.subr.mxu0 0.0
        %2864 = vmatpush1.msra.mxu0 0.0
        %2865 = vmatprep.subr.mxu0 0.0
        %2866 = vmatpush1.msra.mxu0 0.0
        %2867 = vmatprep.subr.mxu0 0.0
        %2868 = vmatpush1.msra.mxu0 0.0
        %2869 = vmatprep.subr.mxu0 0.0
        %2870 = vmatpush1.msra.mxu0 0.0
        %2871 = vmatprep.subr.mxu0 0.0
        %2872 = vmatpush1.msra.mxu0 0.0
        %2873 = vmatprep.subr.mxu0 0.0
        %2874 = vmatpush1.msra.mxu0 0.0
        %2875 = vmatprep.subr.mxu0 0.0
        %2876 = vmatpush1.msra.mxu0 0.0
        %2877 = vmatprep.subr.mxu0 0.0
        %2878 = vmatpush1.msra.mxu0 0.0
        %2879 = vmatprep.subr.mxu0 0.0
        %2880 = vmatpush1.msra.mxu0 0.0
        %2881 = vmatprep.mubr.f32.mxu0 0.0
        %2882 = vmatmul.mubr.f32.gmra.mrb[0].mxu0 %v2815
        %v2883 = vpop.f32.mrb[0].mxu0
        %v2884 = vadd.f32 %v2812, %v2883
        %v2885 = vpop.f32.mrb[0].mxu0
        %2886 = vdwg.mxu0
        %vm2887 = vcmask 7168
        %v2888 = vsel %vm2887, %v2884, -inf
        %v2889 = vrot.slane %v2888, 4
        %v2890 = vmax.f32 %v2888, %v2889
        %v2891 = vrot.slane %v2890, 2
        %v2892 = vmax.f32 %v2890, %v2891
        %v2893 = vrot.slane %v2892, 1
        %v2894 = vmax.f32 %v2892, %v2893
        %v2895 = vsub.f32 %v2884, %v2894
        %v2896 = vmul.f32 %v2895, 1.442695
        %v2897 = vpow.pop %v2896
        %v2898 = vsel %vm2887, %v2897, 0.0
        %v2899 = vrot.slane %v2898, 4
        %v2900 = vadd.f32 %v2898, %v2899
        %v2901 = vrot.slane %v2900, 2
        %v2902 = vadd.f32 %v2900, %v2901
        %v2903 = vrot.slane %v2902, 1
        %v2904 = vadd.f32 %v2902, %v2903
        %v2905 = vrcp.pop %v2904
        %v2906 = vmul.f32 %v2897, %v2905
        %2908 = vset.pattern.permute.xlu0 0
        %2909 = vperm.xlu0 %2908, %v2906
        %v2910 = vpop.permute.xlu0 %2909
        %v2912 = vmul.f32 %v2910, %v2483
        %v2913 = vsel %vm590, %v2912, 0.0
        %v2914 = vrot.slane %v2913, 4
        %v2915 = vadd.f32 %v2913, %v2914
        %v2916 = vrot.slane %v2915, 2
        %v2917 = vadd.f32 %v2915, %v2916
        %v2918 = vrot.slane %v2917, 1
        %v2919 = vadd.f32 %v2917, %v2918
        %v2920 = vmul.f32 %v2910, %v2484
        %v2921 = vsel %vm590, %v2920, 0.0
        %v2922 = vrot.slane %v2921, 4
        %v2923 = vadd.f32 %v2921, %v2922
        %v2924 = vrot.slane %v2923, 2
        %v2925 = vadd.f32 %v2923, %v2924
        %v2926 = vrot.slane %v2925, 1
        %v2927 = vadd.f32 %v2925, %v2926
        %v2928 = vld [vmem:[%s13] sm:$0xff]
        %v2929 = vld [vmem:[%s13 + $0x8] sm:$0xff]
        %v2930 = vld [vmem:[%s13 + $0x10] sm:$0xff]
        %v2931 = vld [vmem:[%s13 + $0x18] sm:$0xff]
        %v2932 = vld [vmem:[%s13 + $0x20] sm:$0xff]
        %v2933 = vld [vmem:[%s13 + $0x28] sm:$0xff]
        %v2934 = vld [vmem:[%s13 + $0x30] sm:$0xff]
        %v2935 = vld [vmem:[%s13 + $0x38] sm:$0xff]
        %v2937 = vsel %vm590, %v2927, 0
        %2939 = vmatprep.subr.mxu0 0.0
        %2940 = vmatpush1.msra.mxu0 %v2932
        %2941 = vmatprep.subr.mxu0 0.0
        %2942 = vmatpush1.msra.mxu0 %v2933
        %2943 = vmatprep.subr.mxu0 0.0
        %2944 = vmatpush1.msra.mxu0 %v2934
        %2945 = vmatprep.subr.mxu0 0.0
        %2946 = vmatpush1.msra.mxu0 %v2935
        %2947 = vmatprep.subr.mxu0 0.0
        %2948 = vmatpush1.msra.mxu0 0.0
        %2949 = vmatprep.subr.mxu0 0.0
        %2950 = vmatpush1.msra.mxu0 0.0
        %2951 = vmatprep.subr.mxu0 0.0
        %2952 = vmatpush1.msra.mxu0 0.0
        %2953 = vmatprep.subr.mxu0 0.0
        %2954 = vmatpush1.msra.mxu0 0.0
        %2955 = vmatprep.subr.mxu0 0.0
        %2956 = vmatpush1.msra.mxu0 0.0
        %2957 = vmatprep.subr.mxu0 0.0
        %2958 = vmatpush1.msra.mxu0 0.0
        %2959 = vmatprep.subr.mxu0 0.0
        %2960 = vmatpush1.msra.mxu0 0.0
        %2961 = vmatprep.subr.mxu0 0.0
        %2962 = vmatpush1.msra.mxu0 0.0
        %2963 = vmatprep.subr.mxu0 0.0
        %2964 = vmatpush1.msra.mxu0 0.0
        %2965 = vmatprep.subr.mxu0 0.0
        %2966 = vmatpush1.msra.mxu0 0.0
        %2967 = vmatprep.subr.mxu0 0.0
        %2968 = vmatpush1.msra.mxu0 0.0
        %2969 = vmatprep.subr.mxu0 0.0
        %2970 = vmatpush1.msra.mxu0 0.0
        %2971 = vmatprep.subr.mxu0 0.0
        %2972 = vmatpush1.msra.mxu0 0.0
        %2973 = vmatprep.subr.mxu0 0.0
        %2974 = vmatpush1.msra.mxu0 0.0
        %2975 = vmatprep.subr.mxu0 0.0
        %2976 = vmatpush1.msra.mxu0 0.0
        %2977 = vmatprep.subr.mxu0 0.0
        %2978 = vmatpush1.msra.mxu0 0.0
        %2979 = vmatprep.subr.mxu0 0.0
        %2980 = vmatpush1.msra.mxu0 0.0
        %2981 = vmatprep.subr.mxu0 0.0
        %2982 = vmatpush1.msra.mxu0 0.0
        %2983 = vmatprep.subr.mxu0 0.0
        %2984 = vmatpush1.msra.mxu0 0.0
        %2985 = vmatprep.subr.mxu0 0.0
        %2986 = vmatpush1.msra.mxu0 0.0
        %2987 = vmatprep.subr.mxu0 0.0
        %2988 = vmatpush1.msra.mxu0 0.0
        %2989 = vmatprep.subr.mxu0 0.0
        %2990 = vmatpush1.msra.mxu0 0.0
        %2991 = vmatprep.subr.mxu0 0.0
        %2992 = vmatpush1.msra.mxu0 0.0
        %2993 = vmatprep.subr.mxu0 0.0
        %2994 = vmatpush1.msra.mxu0 0.0
        %2995 = vmatprep.subr.mxu0 0.0
        %2996 = vmatpush1.msra.mxu0 0.0
        %2997 = vmatprep.subr.mxu0 0.0
        %2998 = vmatpush1.msra.mxu0 0.0
        %2999 = vmatprep.subr.mxu0 0.0
        %3000 = vmatpush1.msra.mxu0 0.0
        %3001 = vmatprep.subr.mxu0 0.0
        %3002 = vmatpush1.msra.mxu0 0.0
        %3003 = vmatprep.mubr.f32.mxu0 0.0
        %3004 = vmatmul.mubr.f32.gmra.mrb[0].mxu0 %v2937
        %v3005 = vpop.f32.mrb[0].mxu0
        %v3006 = vadd.f32 0.0, %v3005
        %v3007 = vpop.f32.mrb[0].mxu0
        %3008 = vdwg.mxu0
        %v3010 = vsel %vm590, %v2919, 0
        %3012 = vmatprep.subr.mxu0 0.0
        %3013 = vmatpush1.msra.mxu0 %v2928
        %3014 = vmatprep.subr.mxu0 0.0
        %3015 = vmatpush1.msra.mxu0 %v2929
        %3016 = vmatprep.subr.mxu0 0.0
        %3017 = vmatpush1.msra.mxu0 %v2930
        %3018 = vmatprep.subr.mxu0 0.0
        %3019 = vmatpush1.msra.mxu0 %v2931
        %3020 = vmatprep.subr.mxu0 0.0
        %3021 = vmatpush1.msra.mxu0 0.0
        %3022 = vmatprep.subr.mxu0 0.0
        %3023 = vmatpush1.msra.mxu0 0.0
        %3024 = vmatprep.subr.mxu0 0.0
        %3025 = vmatpush1.msra.mxu0 0.0
        %3026 = vmatprep.subr.mxu0 0.0
        %3027 = vmatpush1.msra.mxu0 0.0
        %3028 = vmatprep.subr.mxu0 0.0
        %3029 = vmatpush1.msra.mxu0 0.0
        %3030 = vmatprep.subr.mxu0 0.0
        %3031 = vmatpush1.msra.mxu0 0.0
        %3032 = vmatprep.subr.mxu0 0.0
        %3033 = vmatpush1.msra.mxu0 0.0
        %3034 = vmatprep.subr.mxu0 0.0
        %3035 = vmatpush1.msra.mxu0 0.0
        %3036 = vmatprep.subr.mxu0 0.0
        %3037 = vmatpush1.msra.mxu0 0.0
        %3038 = vmatprep.subr.mxu0 0.0
        %3039 = vmatpush1.msra.mxu0 0.0
        %3040 = vmatprep.subr.mxu0 0.0
        %3041 = vmatpush1.msra.mxu0 0.0
        %3042 = vmatprep.subr.mxu0 0.0
        %3043 = vmatpush1.msra.mxu0 0.0
        %3044 = vmatprep.subr.mxu0 0.0
        %3045 = vmatpush1.msra.mxu0 0.0
        %3046 = vmatprep.subr.mxu0 0.0
        %3047 = vmatpush1.msra.mxu0 0.0
        %3048 = vmatprep.subr.mxu0 0.0
        %3049 = vmatpush1.msra.mxu0 0.0
        %3050 = vmatprep.subr.mxu0 0.0
        %3051 = vmatpush1.msra.mxu0 0.0
        %3052 = vmatprep.subr.mxu0 0.0
        %3053 = vmatpush1.msra.mxu0 0.0
        %3054 = vmatprep.subr.mxu0 0.0
        %3055 = vmatpush1.msra.mxu0 0.0
        %3056 = vmatprep.subr.mxu0 0.0
        %3057 = vmatpush1.msra.mxu0 0.0
        %3058 = vmatprep.subr.mxu0 0.0
        %3059 = vmatpush1.msra.mxu0 0.0
        %3060 = vmatprep.subr.mxu0 0.0
        %3061 = vmatpush1.msra.mxu0 0.0
        %3062 = vmatprep.subr.mxu0 0.0
        %3063 = vmatpush1.msra.mxu0 0.0
        %3064 = vmatprep.subr.mxu0 0.0
        %3065 = vmatpush1.msra.mxu0 0.0
        %3066 = vmatprep.subr.mxu0 0.0
        %3067 = vmatpush1.msra.mxu0 0.0
        %3068 = vmatprep.subr.mxu0 0.0
        %3069 = vmatpush1.msra.mxu0 0.0
        %3070 = vmatprep.subr.mxu0 0.0
        %3071 = vmatpush1.msra.mxu0 0.0
        %3072 = vmatprep.subr.mxu0 0.0
        %3073 = vmatpush1.msra.mxu0 0.0
        %3074 = vmatprep.subr.mxu0 0.0
        %3075 = vmatpush1.msra.mxu0 0.0
        %3076 = vmatprep.mubr.f32.mxu0 0.0
        %3077 = vmatmul.mubr.f32.gmra.mrb[0].mxu0 %v3010
        %v3078 = vpop.f32.mrb[0].mxu0
        %v3079 = vadd.f32 %v3006, %v3078
        %v3080 = vpop.f32.mrb[0].mxu0
        %3081 = vdwg.mxu0
        %v3082 = vld [vmem:[%s14] sm:$0x1]
        %v3083 = vadd.f32 %v3079, %v3082
        %v3084 = vld [vmem:[%s15] sm:$0xff]
        %v3085 = vld [vmem:[%s15 + $0x8] sm:$0xff]
        %v3086 = vld [vmem:[%s15 + $0x10] sm:$0xff]
        %v3087 = vld [vmem:[%s15 + $0x18] sm:$0xff]
        %3089 = vrot.lane.b32.xlu0 %v2376, 64
        %v3090 = vpop.permute.xlu0 %3089
        %v3091 = vsel %vm590, %v3090, 0
        %3093 = vmatprep.subr.mxu0 0.0
        %3094 = vmatpush1.msra.mxu0 %v3084
        %3095 = vmatprep.subr.mxu0 0.0
        %3096 = vmatpush1.msra.mxu0 %v3085
        %3097 = vmatprep.subr.mxu0 0.0
        %3098 = vmatpush1.msra.mxu0 %v3086
        %3099 = vmatprep.subr.mxu0 0.0
        %3100 = vmatpush1.msra.mxu0 %v3087
        %3101 = vmatprep.subr.mxu0 0.0
        %3102 = vmatpush1.msra.mxu0 0.0
        %3103 = vmatprep.subr.mxu0 0.0
        %3104 = vmatpush1.msra.mxu0 0.0
        %3105 = vmatprep.subr.mxu0 0.0
        %3106 = vmatpush1.msra.mxu0 0.0
        %3107 = vmatprep.subr.mxu0 0.0
        %3108 = vmatpush1.msra.mxu0 0.0
        %3109 = vmatprep.subr.mxu0 0.0
        %3110 = vmatpush1.msra.mxu0 0.0
        %3111 = vmatprep.subr.mxu0 0.0
        %3112 = vmatpush1.msra.mxu0 0.0
        %3113 = vmatprep.subr.mxu0 0.0
        %3114 = vmatpush1.msra.mxu0 0.0
        %3115 = vmatprep.subr.mxu0 0.0
        %3116 = vmatpush1.msra.mxu0 0.0
        %3117 = vmatprep.subr.mxu0 0.0
        %3118 = vmatpush1.msra.mxu0 0.0
        %3119 = vmatprep.subr.mxu0 0.0
        %3120 = vmatpush1.msra.mxu0 0.0
        %3121 = vmatprep.subr.mxu0 0.0
        %3122 = vmatpush1.msra.mxu0 0.0
        %3123 = vmatprep.subr.mxu0 0.0
        %3124 = vmatpush1.msra.mxu0 0.0
        %3125 = vmatprep.subr.mxu0 0.0
        %3126 = vmatpush1.msra.mxu0 0.0
        %3127 = vmatprep.subr.mxu0 0.0
        %3128 = vmatpush1.msra.mxu0 0.0
        %3129 = vmatprep.subr.mxu0 0.0
        %3130 = vmatpush1.msra.mxu0 0.0
        %3131 = vmatprep.subr.mxu0 0.0
        %3132 = vmatpush1.msra.mxu0 0.0
        %3133 = vmatprep.subr.mxu0 0.0
        %3134 = vmatpush1.msra.mxu0 0.0
        %3135 = vmatprep.subr.mxu0 0.0
        %3136 = vmatpush1.msra.mxu0 0.0
        %3137 = vmatprep.subr.mxu0 0.0
        %3138 = vmatpush1.msra.mxu0 0.0
        %3139 = vmatprep.subr.mxu0 0.0
        %3140 = vmatpush1.msra.mxu0 0.0
        %3141 = vmatprep.subr.mxu0 0.0
        %3142 = vmatpush1.msra.mxu0 0.0
        %3143 = vmatprep.subr.mxu0 0.0
        %3144 = vmatpush1.msra.mxu0 0.0
        %3145 = vmatprep.subr.mxu0 0.0
        %3146 = vmatpush1.msra.mxu0 0.0
        %3147 = vmatprep.subr.mxu0 0.0
        %3148 = vmatpush1.msra.mxu0 0.0
        %3149 = vmatprep.subr.mxu0 0.0
        %3150 = vmatpush1.msra.mxu0 0.0
        %3151 = vmatprep.subr.mxu0 0.0
        %3152 = vmatpush1.msra.mxu0 0.0
        %3153 = vmatprep.subr.mxu0 0.0
        %3154 = vmatpush1.msra.mxu0 0.0
        %3155 = vmatprep.subr.mxu0 0.0
        %3156 = vmatpush1.msra.mxu0 0.0
        %3157 = vmatprep.mubr.f32.mxu0 0.0
        %3158 = vmatmul.mubr.f32.gmra.mrb[0].mxu0 %v3091
        %v3159 = vpop.f32.mrb[0].mxu0
        %v3160 = vadd.f32 0.0, %v3159
        %v3161 = vpop.f32.mrb[0].mxu0
        %3162 = vdwg.mxu0
        %v3163 = vadd.f32 %v3083, %v3160
        %v3164 = vld [vmem:[%s15 + $0x20] sm:$0xff]
        %v3165 = vld [vmem:[%s15 + $0x28] sm:$0xff]
        %v3166 = vld [vmem:[%s15 + $0x30] sm:$0xff]
        %v3167 = vld [vmem:[%s15 + $0x38] sm:$0xff]
        %3169 = vrot.lane.b32.xlu0 %v2482, 64
        %v3170 = vpop.permute.xlu0 %3169
        %v3171 = vsel %vm590, %v3170, 0
        %3173 = vmatprep.subr.mxu0 0.0
        %3174 = vmatpush1.msra.mxu0 %v3164
        %3175 = vmatprep.subr.mxu0 0.0
        %3176 = vmatpush1.msra.mxu0 %v3165
        %3177 = vmatprep.subr.mxu0 0.0
        %3178 = vmatpush1.msra.mxu0 %v3166
        %3179 = vmatprep.subr.mxu0 0.0
        %3180 = vmatpush1.msra.mxu0 %v3167
        %3181 = vmatprep.subr.mxu0 0.0
        %3182 = vmatpush1.msra.mxu0 0.0
        %3183 = vmatprep.subr.mxu0 0.0
        %3184 = vmatpush1.msra.mxu0 0.0
        %3185 = vmatprep.subr.mxu0 0.0
        %3186 = vmatpush1.msra.mxu0 0.0
        %3187 = vmatprep.subr.mxu0 0.0
        %3188 = vmatpush1.msra.mxu0 0.0
        %3189 = vmatprep.subr.mxu0 0.0
        %3190 = vmatpush1.msra.mxu0 0.0
        %3191 = vmatprep.subr.mxu0 0.0
        %3192 = vmatpush1.msra.mxu0 0.0
        %3193 = vmatprep.subr.mxu0 0.0
        %3194 = vmatpush1.msra.mxu0 0.0
        %3195 = vmatprep.subr.mxu0 0.0
        %3196 = vmatpush1.msra.mxu0 0.0
        %3197 = vmatprep.subr.mxu0 0.0
        %3198 = vmatpush1.msra.mxu0 0.0
        %3199 = vmatprep.subr.mxu0 0.0
        %3200 = vmatpush1.msra.mxu0 0.0
        %3201 = vmatprep.subr.mxu0 0.0
        %3202 = vmatpush1.msra.mxu0 0.0
        %3203 = vmatprep.subr.mxu0 0.0
        %3204 = vmatpush1.msra.mxu0 0.0
        %3205 = vmatprep.subr.mxu0 0.0
        %3206 = vmatpush1.msra.mxu0 0.0
        %3207 = vmatprep.subr.mxu0 0.0
        %3208 = vmatpush1.msra.mxu0 0.0
        %3209 = vmatprep.subr.mxu0 0.0
        %3210 = vmatpush1.msra.mxu0 0.0
        %3211 = vmatprep.subr.mxu0 0.0
        %3212 = vmatpush1.msra.mxu0 0.0
        %3213 = vmatprep.subr.mxu0 0.0
        %3214 = vmatpush1.msra.mxu0 0.0
        %3215 = vmatprep.subr.mxu0 0.0
        %3216 = vmatpush1.msra.mxu0 0.0
        %3217 = vmatprep.subr.mxu0 0.0
        %3218 = vmatpush1.msra.mxu0 0.0
        %3219 = vmatprep.subr.mxu0 0.0
        %3220 = vmatpush1.msra.mxu0 0.0
        %3221 = vmatprep.subr.mxu0 0.0
        %3222 = vmatpush1.msra.mxu0 0.0
        %3223 = vmatprep.subr.mxu0 0.0
        %3224 = vmatpush1.msra.mxu0 0.0
        %3225 = vmatprep.subr.mxu0 0.0
        %3226 = vmatpush1.msra.mxu0 0.0
        %3227 = vmatprep.subr.mxu0 0.0
        %3228 = vmatpush1.msra.mxu0 0.0
        %3229 = vmatprep.subr.mxu0 0.0
        %3230 = vmatpush1.msra.mxu0 0.0
        %3231 = vmatprep.subr.mxu0 0.0
        %3232 = vmatpush1.msra.mxu0 0.0
        %3233 = vmatprep.subr.mxu0 0.0
        %3234 = vmatpush1.msra.mxu0 0.0
        %3235 = vmatprep.subr.mxu0 0.0
        %3236 = vmatpush1.msra.mxu0 0.0
        %3237 = vmatprep.mubr.f32.mxu0 0.0
        %3238 = vmatmul.mubr.f32.gmra.mrb[0].mxu0 %v3171
        %v3239 = vpop.f32.mrb[0].mxu0
        %v3240 = vadd.f32 0.0, %v3239
        %v3241 = vpop.f32.mrb[0].mxu0
        %3242 = vdwg.mxu0
        %v3243 = vadd.f32 %v3163, %v3240
        %v3244 = vld [vmem:[%s16] sm:$0x1]
        %v3245 = vadd.f32 %v3243, %v3244
        %v3246 = vmax.f32 %v3245, 0.0
        %v3247 = vld [vmem:[%s17] sm:$0xff]
        %v3248 = vld [vmem:[%s17 + $0x8] sm:$0xff]
        %v3249 = vld [vmem:[%s17 + $0x10] sm:$0xff]
        %v3250 = vld [vmem:[%s17 + $0x18] sm:$0xff]
        %v3251 = vld [vmem:[%s17 + $0x20] sm:$0xff]
        %v3252 = vld [vmem:[%s17 + $0x28] sm:$0xff]
        %v3253 = vld [vmem:[%s17 + $0x30] sm:$0xff]
        %v3254 = vld [vmem:[%s17 + $0x38] sm:$0xff]
        %v3255 = vld [vmem:[%s18] sm:$0x1]
        %v3257 = vsel %vm2813, %v3246, 0
        %3259 = vmatprep.subr.mxu0 0.0
        %3260 = vmatpush1.msra.mxu0 %v3247
        %3261 = vmatprep.subr.mxu0 0.0
        %3262 = vmatpush1.msra.mxu0 %v3248
        %3263 = vmatprep.subr.mxu0 0.0
        %3264 = vmatpush1.msra.mxu0 %v3249
        %3265 = vmatprep.subr.mxu0 0.0
        %3266 = vmatpush1.msra.mxu0 %v3250
        %3267 = vmatprep.subr.mxu0 0.0
        %3268 = vmatpush1.msra.mxu0 %v3251
        %3269 = vmatprep.subr.mxu0 0.0
        %3270 = vmatpush1.msra.mxu0 %v3252
        %3271 = vmatprep.subr.mxu0 0.0
        %3272 = vmatpush1.msra.mxu0 %v3253
        %3273 = vmatprep.subr.mxu0 0.0
        %3274 = vmatpush1.msra.mxu0 %v3254
        %3275 = vmatprep.subr.mxu0 0.0
        %3276 = vmatpush1.msra.mxu0 0.0
        %3277 = vmatprep.subr.mxu0 0.0
        %3278 = vmatpush1.msra.mxu0 0.0
        %3279 = vmatprep.subr.mxu0 0.0
        %3280 = vmatpush1.msra.mxu0 0.0
        %3281 = vmatprep.subr.mxu0 0.0
        %3282 = vmatpush1.msra.mxu0 0.0
        %3283 = vmatprep.subr.mxu0 0.0
        %3284 = vmatpush1.msra.mxu0 0.0
        %3285 = vmatprep.subr.mxu0 0.0
        %3286 = vmatpush1.msra.mxu0 0.0
        %3287 = vmatprep.subr.mxu0 0.0
        %3288 = vmatpush1.msra.mxu0 0.0
        %3289 = vmatprep.subr.mxu0 0.0
        %3290 = vmatpush1.msra.mxu0 0.0
        %3291 = vmatprep.subr.mxu0 0.0
        %3292 = vmatpush1.msra.mxu0 0.0
        %3293 = vmatprep.subr.mxu0 0.0
        %3294 = vmatpush1.msra.mxu0 0.0
        %3295 = vmatprep.subr.mxu0 0.0
        %3296 = vmatpush1.msra.mxu0 0.0
        %3297 = vmatprep.subr.mxu0 0.0
        %3298 = vmatpush1.msra.mxu0 0.0
        %3299 = vmatprep.subr.mxu0 0.0
        %3300 = vmatpush1.msra.mxu0 0.0
        %3301 = vmatprep.subr.mxu0 0.0
        %3302 = vmatpush1.msra.mxu0 0.0
        %3303 = vmatprep.subr.mxu0 0.0
        %3304 = vmatpush1.msra.mxu0 0.0
        %3305 = vmatprep.subr.mxu0 0.0
        %3306 = vmatpush1.msra.mxu0 0.0
        %3307 = vmatprep.subr.mxu0 0.0
        %3308 = vmatpush1.msra.mxu0 0.0
        %3309 = vmatprep.subr.mxu0 0.0
        %3310 = vmatpush1.msra.mxu0 0.0
        %3311 = vmatprep.subr.mxu0 0.0
        %3312 = vmatpush1.msra.mxu0 0.0
        %3313 = vmatprep.subr.mxu0 0.0
        %3314 = vmatpush1.msra.mxu0 0.0
        %3315 = vmatprep.subr.mxu0 0.0
        %3316 = vmatpush1.msra.mxu0 0.0
        %3317 = vmatprep.subr.mxu0 0.0
        %3318 = vmatpush1.msra.mxu0 0.0
        %3319 = vmatprep.subr.mxu0 0.0
        %3320 = vmatpush1.msra.mxu0 0.0
        %3321 = vmatprep.subr.mxu0 0.0
        %3322 = vmatpush1.msra.mxu0 0.0
        %3323 = vmatprep.mubr.f32.mxu0 0.0
        %3324 = vmatmul.mubr.f32.gmra.mrb[0].mxu0 %v3257
        %v3325 = vpop.f32.mrb[0].mxu0
        %v3326 = vadd.f32 %v3255, %v3325
        %v3327 = vpop.f32.mrb[0].mxu0
        %3328 = vdwg.mxu0
        %vm3329 = vcmask 16384
        %v3330 = vsel %vm3329, %v3326, -inf
        %3331 = vmax.xlane.f32.xlu0 %v3330
        %v3332 = vpop.xlane.xlu0 %3331
        %v3333 = vsub.f32 %v3326, %v3332
        %v3334 = vmul.f32 %v3333, 1.442695
        %v3335 = vpow.pop %v3334
        %v3336 = vsel %vm3329, %v3335, 0.0
        %3337 = vadd.xlane.f32.xlu0 %v3336
        %v3338 = vpop.xlane.xlu0 %3337
        %v3339 = vlog2.pop %v3338
        %v3340 = vmul.f32 %v3339, 0.6931472
        %v3341 = vadd.f32 %v3340, %v3332
        %v3342 = vsub.f32 %v3326, %v3341
        %3343 = vst.msk [vmem:[%s572] sm:$0x1] %vm3329, %v3342
        %s3344 = sand.u32 %s430, 1
        %s3345 = scalar_lea.sflag [#allocation9], %s3344
        %s3346 = sand.u32 %s430, 1
        %s3347 = scalar_lea.vmem [#allocation8], %s3346
        // Predicated region
        $region93: #{forward.1} parent=91 // pred_check
          %p3348 = pneg %p440
        $region94: #{forward.1} parent=91 // pred_check_branch
          %3350 = sbr.rel (%p3348) target = $region96
        $region95: #{forward.1} parent=91 // pred_region
          %s3352 = ssub.s32 16, 16
          %3353 = vsyncadd %s3345, %s3352
          %s3354 = smul.addr %s39, 16
          %s3355 = scalar_lea.hbm %s19, %s3354
          %s3357 = sshll.u32 %s3347, 4
          %s3358 = int_to_ptr.vmem [resolvable:$true] %s3357
          %3360 = dma.vmem_to_hbm [thread:$0]  %s3358, 16, %s3355, %s3345
        $region96: #{forward.1} parent=91 // pred_fallthru
          _
      $region92: #{forward.1} parent=5 // pred_fallthru
        _
      %p3361 = scmp.le.s32.totalorder 2, %s34
      // Predicated region
      $region97: #{forward.1} parent=5 // pred_check
        %p3362 = pneg %p3361
      $region98: #{forward.1} parent=5 // pred_check_branch
        %3364 = sbr.rel (%p3362) target = $region100
      $region99: #{forward.1} parent=5 // pred_region
        %s3365 = ssub.s32 %s34, 2
        // Predicated region
        $region101: #{forward.1} parent=99 // pred_check
          %p3366 = pneg %p446
        $region102: #{forward.1} parent=99 // pred_check_branch
          %3368 = sbr.rel (%p3366) target = $region104
        $region103: #{forward.1} parent=99 // pred_region
          %s3369 = sand.u32 %s431, 1
          %s3370 = scalar_lea.sflag [#allocation9], %s3369
          %s3371 = sand.u32 %s431, 1
          %s3372 = scalar_lea.vmem [#allocation8], %s3371
          %3373 = dma.done %s3370, 16
        $region104: #{forward.1} parent=99 // pred_fallthru
          _
      $region100: #{forward.1} parent=5 // pred_fallthru
        _
    $region6: #{forward.1} parent=1 // loop_footer
      %s38 = sadd.s32 1, %s34
    $region7: #{forward.1} parent=1 // loop_footer_branch
      %33 = sbr.rel target = $region3
    $region8: #{forward.1} parent=1 // loop_exit
      _
    %3374 = vsyncpa [#allocation9], 1
    %s3375 = scalar_lea.sflag [#allocation9], 1
    %3376 = vsyncpa %s3375, 1

</llo_original>
